<compile_context>
chip_gen: v6e
topology: v6e:2x2x1
jax: 0.10.0
libtpu: 0.0.40
codegen_flags: <defaults>
</compile_context>

<pallas_src>
import functools

import jax
import jax.numpy as jnp
from jax import lax
from jax.experimental import pallas as pl
from jax.experimental.pallas import tpu as pltpu


# ----------------------------------------------------------------------------
# Small helpers
# ----------------------------------------------------------------------------
def _make_tap_masks(W, H):
    """(9, W*H) 0/1 validity masks for the 9 conv taps; tap k = (dy+1)*3+(dx+1)."""
    wi = jnp.arange(W)[:, None]
    hi = jnp.arange(H)[None, :]
    rows = []
    for dy in (-1, 0, 1):
        for dx in (-1, 0, 1):
            ok = ((wi + dy >= 0) & (wi + dy < W) &
                  (hi + dx >= 0) & (hi + dx < H))
            rows.append(ok.astype(jnp.float32).reshape(W * H))
    return jnp.stack(rows, axis=0)


def _prep_w(w_hwio):
    """HWIO (3,3,Cin,Cout) -> (Cout, 9*Cin) bf16, columns ordered (tap, cin)."""
    kh, kw, cin, cout = w_hwio.shape
    return (jnp.transpose(w_hwio, (3, 0, 1, 2))
            .reshape(cout, kh * kw * cin).astype(jnp.bfloat16))


def _pick_images_per_block(n_img, s, c_mid, budget_bytes=8 * 1024 * 1024):
    """How many images to fold into the lane axis per grid step (VMEM budget)."""
    # Rough live bytes per image inside the kernel:
    #   f32 im2col stack + bf16 stack + two f32 activations + in/out + masks.
    per_img = s * (9 * c_mid * 6 + 8 * c_mid + 16 * 4 + 9 * 4)
    aligned = [nb for nb in range(1, n_img + 1)
               if n_img % nb == 0 and (nb == n_img or (nb * s) % 128 == 0)]
    fitting = [nb for nb in aligned if nb * per_img <= budget_bytes]
    if fitting:
        return max(fitting)
    # TODO(synk): even one image exceeds the budget for very large W*H; a
    # halo-tiled spatial chunking would be required there.
    return min(aligned) if aligned else n_img


def _pick_flat_shape(total, max_lanes=8192, max_block_bytes=1 << 20):
    """Lane-dense 2-D shape (R, Ld) + row tile rt for the DC-combine kernel."""
    ld = 0
    cand = min(max_lanes, (total // 128) * 128)
    while cand >= 128:
        if total % cand == 0:
            ld = cand
            break
        cand -= 128
    if ld == 0:                       # total not divisible by 128: one full block
        return 1, total, 1
    r = total // ld
    rt = r
    max_rows = max(1, max_block_bytes // (ld * 4))
    if r > max_rows:
        cand_r = (max_rows // 8) * 8
        while cand_r >= 8:
            if r % cand_r == 0:
                rt = cand_r
                break
            cand_r -= 8
    return r, ld, rt


# ----------------------------------------------------------------------------
# Pallas kernel: fused CNN block (conv3x3+ReLU, conv3x3+ReLU, conv3x3)
# Layout: (C, L) with L = nb * W * H (images folded into the lane axis).
# Each conv = one im2col stack (9*Cin, L) and one MXU matmul (bf16 x bf16 -> f32).
# ----------------------------------------------------------------------------
def _cnn_block_kernel(x_ref, m_ref, w1_ref, b1_ref, w2_ref, b2_ref,
                      w3_ref, b3_ref, o_ref, *, H):
    L = x_ref.shape[-1]
    masks = m_ref[...]                                     # (9, L) f32, tiled per image
    # Flat-lane offset of each tap; same ordering as masks / weight columns.
    offs = tuple(dy * H + dx for dy in (-1, 0, 1) for dx in (-1, 0, 1))

    def conv3x3(h, w_bf16, bias, relu):
        taps = []
        for k, off in enumerate(offs):
            if off == 0:                                   # center tap: always valid
                taps.append(h)
            else:
                # out[p] needs in[p + off]; roll follows jnp.roll semantics.
                # Cross-image / block-end wrap only hits masked (zeroed) lanes.
                sh = pltpu.roll(h, (-off) % L, axis=1)
                taps.append(sh * masks[k:k + 1, :])
        stack = jnp.concatenate(taps, axis=0).astype(jnp.bfloat16)   # (9*Cin, L)
        acc = jnp.dot(w_bf16, stack, preferred_element_type=jnp.float32) + bias
        return jnp.maximum(acc, 0.0) if relu else acc

    h = x_ref[...].astype(jnp.float32)
    h = conv3x3(h, w1_ref[...], b1_ref[...], True)
    h = conv3x3(h, w2_ref[...], b2_ref[...], True)
    h = conv3x3(h, w3_ref[...], b3_ref[...], False)
    o_ref[...] = h.astype(o_ref.dtype)


def cnn_block(x_nchw, p, tap_masks_blk, W, H, nb):
    """(N, 2, W, H) -> (N, 2, W, H); one fused Pallas call for all three convs."""
    N, cin = x_nchw.shape[0], x_nchw.shape[1]
    S = W * H
    Lb = nb * S
    c_mid = p["w1"].shape[-1]
    c_out = p["w3"].shape[-1]

    # Lane-dense / sublane-dense layout: channels on sublanes, pixels on lanes.
    x2 = jnp.transpose(x_nchw.reshape(N, cin, S), (1, 0, 2)).reshape(cin, N * S)
    # Zero-pad the 2 input channels to a full 8-sublane tile (zero weights for
    # the pad channels), so all in-kernel sublane concatenations are aligned.
    cin_pad = max(cin, 8)
    if cin_pad != cin:
        x2 = jnp.concatenate(
            [x2, jnp.zeros((cin_pad - cin, N * S), x2.dtype)], axis=0)
        w1_hwio = jnp.pad(p["w1"], ((0, 0), (0, 0), (0, cin_pad - cin), (0, 0)))
    else:
        w1_hwio = p["w1"]

    w1, b1 = _prep_w(w1_hwio), p["b1"].astype(jnp.float32).reshape(c_mid, 1)
    w2, b2 = _prep_w(p["w2"]), p["b2"].astype(jnp.float32).reshape(c_mid, 1)
    w3, b3 = _prep_w(p["w3"]), p["b3"].astype(jnp.float32).reshape(c_out, 1)

    kernel = functools.partial(_cnn_block_kernel, H=H)
    out2 = pl.pallas_call(
        kernel,
        out_shape=jax.ShapeDtypeStruct((c_out, N * S), jnp.float32),
        grid=(N // nb,),
        in_specs=[
            pl.BlockSpec((cin_pad, Lb), lambda g: (0, g)),
            pl.BlockSpec(tap_masks_blk.shape, lambda g: (0, 0)),
            pl.BlockSpec(w1.shape, lambda g: (0, 0)),
            pl.BlockSpec(b1.shape, lambda g: (0, 0)),
            pl.BlockSpec(w2.shape, lambda g: (0, 0)),
            pl.BlockSpec(b2.shape, lambda g: (0, 0)),
            pl.BlockSpec(w3.shape, lambda g: (0, 0)),
            pl.BlockSpec(b3.shape, lambda g: (0, 0)),
        ],
        out_specs=pl.BlockSpec((c_out, Lb), lambda g: (0, g)),
        compiler_params=pltpu.CompilerParams(
            dimension_semantics=("parallel",),
            vmem_limit_bytes=32 * 1024 * 1024),
    )(x2, tap_masks_blk, w1, b1, w2, b2, w3, b3)

    return jnp.transpose(out2.reshape(c_out, N, S), (1, 0, 2)).reshape(N, c_out, W, H)


# ----------------------------------------------------------------------------
# Pallas kernel: data-consistency combine in k-space (lane-dense, tiled)
#   out = kx + b * (y - kx),   b = mask / (1 + lam)   (precomputed)
# ----------------------------------------------------------------------------
def _dc_combine_kernel(kr_ref, ki_ref, yr_ref, yi_ref, b_ref, or_ref, oi_ref):
    b = b_ref[...]
    kr = kr_ref[...]
    ki = ki_ref[...]
    or_ref[...] = kr + b * (yr_ref[...] - kr)
    oi_ref[...] = ki + b * (yi_ref[...] - ki)


def dc_combine(kr, ki, yr, yi, bco, rt):
    R, Ld = kr.shape
    spec = pl.BlockSpec((rt, Ld), lambda i: (i, 0))
    return pl.pallas_call(
        _dc_combine_kernel,
        out_shape=(jax.ShapeDtypeStruct((R, Ld), jnp.float32),
                   jax.ShapeDtypeStruct((R, Ld), jnp.float32)),
        grid=(R // rt,),
        in_specs=[spec] * 5,
        out_specs=(spec, spec),
        compiler_params=pltpu.CompilerParams(
            dimension_semantics=("parallel",)),
    )(kr, ki, yr, yi, bco)


def dc_layer(x, yr, yi, bco, rt):
    # x: (B, W, H, T, 2) image space; returns same shape.
    B, W, H, T, _ = x.shape
    R, Ld = yr.shape
    xc = x[..., 0] + 1j * x[..., 1]                        # (B, W, H, T) complex64
    # TODO(synk): no Pallas FFT primitive; 2-D FFT/IFFT stay in plain JAX.
    kx = jnp.fft.fft2(xc, axes=(1, 2), norm="ortho")
    kr, ki = dc_combine(jnp.real(kx).reshape(R, Ld),
                        jnp.imag(kx).reshape(R, Ld), yr, yi, bco, rt)
    kd = (kr + 1j * ki).reshape(B, W, H, T)
    xd = jnp.fft.ifft2(kd, axes=(1, 2), norm="ortho")
    return jnp.stack([jnp.real(xd), jnp.imag(xd)], axis=-1).astype(x.dtype)


# ----------------------------------------------------------------------------
# Full DCCNN forward, mirroring the PyTorch permute/view dance exactly.
# ----------------------------------------------------------------------------
def dccnn_forward(x, y, mask, params, lam):
    # x, y: (B, W, H, T, C); mask: (B, W, H, C, T)
    x = jnp.transpose(x, (0, 4, 1, 2, 3))                  # (B, C, W, H, T)
    y = jnp.transpose(y, (0, 4, 1, 2, 3))
    B, C, W, H, T = x.shape
    x = x.reshape(B * T, C, W, H)                          # raw reshape == torch .view
    y_dc = jnp.transpose(y, (0, 2, 3, 4, 1))               # (B, W, H, T, C)

    # ----- cascade-invariant precomputation, hoisted out of the loop -----
    total = B * W * H * T
    R, Ld, rt = _pick_flat_shape(total)
    yr = y_dc[..., 0].astype(jnp.float32).reshape(R, Ld)
    yi = y_dc[..., 1].astype(jnp.float32).reshape(R, Ld)
    # TODO(synk): mask assumed identical over the channel dim (channel 0 used).
    bco = (mask[..., 0, :].astype(jnp.float32) * (1.0 / (1.0 + lam))).reshape(R, Ld)

    S = W * H
    N = B * T
    c_mid = params[0]["w1"].shape[-1]
    nb = _pick_images_per_block(N, S, c_mid)
    tap_masks_blk = jnp.tile(_make_tap_masks(W, H), (1, nb))    # (9, nb*S)

    for p in params:
        x = cnn_block(x, p, tap_masks_blk, W, H, nb)                       # (B*T, 2, W, H)
        xd = jnp.transpose(x.reshape(B, T, C, W, H), (0, 3, 4, 1, 2))      # (B, W, H, T, C)
        xd = dc_layer(xd, yr, yi, bco, rt)                                 # (B, W, H, T, C)
        x = jnp.transpose(xd, (0, 4, 3, 1, 2)).reshape(B * T, C, W, H)

    return jnp.transpose(x.reshape(B, C, T, W, H), (0, 3, 4, 2, 1))        # (B, W, H, T, C)


# ----------------------------------------------------------------------------
# Deterministic parameter init (HWIO conv weights)
# ----------------------------------------------------------------------------
def init_params(key, num_cascades, chans):
    def winit(k, shape):
        fan_in = shape[0] * shape[1] * shape[2]
        return jax.random.normal(k, shape, jnp.float32) / jnp.sqrt(float(fan_in))

    params = []
    for _ in range(num_cascades):
        key, k1, k2, k3, k4, k5, k6 = jax.random.split(key, 7)
        params.append({
            "w1": winit(k1, (3, 3, 2, chans)),
            "b1": 0.01 * jax.random.normal(k2, (chans,), jnp.float32),
            "w2": winit(k3, (3, 3, chans, chans)),
            "b2": 0.01 * jax.random.normal(k4, (chans,), jnp.float32),
            "w3": winit(k5, (3, 3, chans, 2)),
            "b3": 0.01 * jax.random.normal(k6, (2,), jnp.float32),
        })
    return params


# ----------------------------------------------------------------------------
# Pure-JAX reference (lax.conv + explicit DC math) for validation.
# `op_dtype=bf16` matches the Pallas kernel's MXU-operand precision exactly
# (bf16 products, f32 accumulation), isolating algorithmic errors from
# precision effects; `op_dtype=f32` is the exact reference.
# ----------------------------------------------------------------------------
def _reference_forward(x, y, mask, params, lam, op_dtype=jnp.float32):
    prec = lax.Precision.HIGHEST if op_dtype == jnp.float32 else lax.Precision.DEFAULT

    def conv(h, w, b, relu):
        out = lax.conv_general_dilated(
            h.astype(op_dtype), w.astype(op_dtype),
            window_strides=(1, 1), padding=((1, 1), (1, 1)),
            dimension_numbers=("NCHW", "HWIO", "NCHW"),
            preferred_element_type=jnp.float32,
            precision=prec)
        out = out + b.reshape(1, -1, 1, 1)
        return jnp.maximum(out, 0.0) if relu else out

    x = jnp.transpose(x, (0, 4, 1, 2, 3))
    y = jnp.transpose(y, (0, 4, 1, 2, 3))
    B, C, W, H, T = x.shape
    x = x.reshape(B * T, C, W, H)
    y_dc = jnp.transpose(y, (0, 2, 3, 4, 1))
    yc = y_dc[..., 0] + 1j * y_dc[..., 1]
    m = mask[..., 0, :].astype(jnp.float32)

    for p in params:
        h = conv(x, p["w1"], p["b1"], True)
        h = conv(h, p["w2"], p["b2"], True)
        h = conv(h, p["w3"], p["b3"], False)
        h = jnp.transpose(h.reshape(B, T, C, W, H), (0, 3, 4, 1, 2))
        xc = h[..., 0] + 1j * h[..., 1]
        kx = jnp.fft.fft2(xc, axes=(1, 2), norm="ortho")
        kd = (1.0 - m) * kx + m * (lam * kx + yc) / (1.0 + lam)
        xd = jnp.fft.ifft2(kd, axes=(1, 2), norm="ortho")
        h = jnp.stack([jnp.real(xd), jnp.imag(xd)], axis=-1)
        x = jnp.transpose(h, (0, 4, 3, 1, 2)).reshape(B * T, C, W, H)

    return jnp.transpose(x.reshape(B, C, T, W, H), (0, 3, 4, 2, 1))


if __name__ == "__main__":
    B, W, H, T, C = 2, 16, 16, 4, 2
    NUM_CASCADES = 2
    CHANS = 8
    LAM = 0.05  # TODO(synk): fixed deterministic DC-layer lambda (DCLayer not specified).

    key = jax.random.PRNGKey(0)
    kx_, ky_, km_, kp_ = jax.random.split(key, 4)

    x = jax.random.normal(kx_, (B, W, H, T, C), jnp.float32)
    y = jax.random.normal(ky_, (B, W, H, T, C), jnp.float32)
    mask0 = (jax.random.uniform(km_, (B, W, H, 1, T)) > 0.5).astype(jnp.float32)
    mask = jnp.tile(mask0, (1, 1, 1, C, 1))                # (B, W, H, C, T)

    params = init_params(kp_, NUM_CASCADES, CHANS)

    fwd = jax.jit(lambda xx, yy, mm, pp: dccnn_forward(xx, yy, mm, pp, LAM))
    out = jax.block_until_ready(fwd(x, y, mask, params))

    assert out.shape == (B, W, H, T, C)
    assert bool(jnp.all(jnp.isfinite(out)))

    # 1) Tight check vs an arithmetically matched reference (bf16 MXU operands,
    #    f32 accumulation): catches tap-ordering / roll / mask bugs.
    ref_bf16 = jax.block_until_ready(
        jax.jit(lambda xx, yy, mm, pp:
                _reference_forward(xx, yy, mm, pp, LAM, jnp.bfloat16))(x, y, mask, params))
    err_bf16 = float(jnp.max(jnp.abs(out - ref_bf16)))
    assert err_bf16 < 3e-3, f"mismatch vs bf16-matched reference: {err_bf16}"

    # 2) Loose sanity vs the exact f32 reference (bound covers bf16 operand rounding).
    ref_f32 = jax.block_until_ready(
        jax.jit(lambda xx, yy, mm, pp:
                _reference_forward(xx, yy, mm, pp, LAM, jnp.float32))(x, y, mask, params))
    err_f32 = float(jnp.max(jnp.abs(out - ref_f32)))
    assert err_f32 < 2e-1, f"mismatch vs f32 reference: {err_f32}"

    print("KERNEL_OK")
</pallas_src>

<mosaic_0001>
module attributes {stable_mosaic.version = 11 : i64} {
  func.func @_cnn_block_kernel(%arg0: i32, %arg1: memref<8x2048xf32, #tpu.memory_space<vmem>>, %arg2: memref<9x2048xf32, #tpu.memory_space<vmem>>, %arg3: memref<8x72xbf16, #tpu.memory_space<vmem>>, %arg4: memref<8x1xf32, #tpu.memory_space<vmem>>, %arg5: memref<8x72xbf16, #tpu.memory_space<vmem>>, %arg6: memref<8x1xf32, #tpu.memory_space<vmem>>, %arg7: memref<2x72xbf16, #tpu.memory_space<vmem>>, %arg8: memref<2x1xf32, #tpu.memory_space<vmem>>, %arg9: memref<2x2048xf32, #tpu.memory_space<vmem>>) attributes {dimension_semantics = [#tpu.dimension_semantics<parallel>], iteration_bounds = array<i64: 1>, scalar_prefetch = 0 : i64, scratch_operands = 0 : i64, tpu.core_type = #tpu.core_type<tc>, window_params = [{transform_indices = @transform_0, window_bounds = array<i64: 8, 2048>}, {pipeline_mode = #tpu.pipeline_mode<synchronous>, transform_indices = @transform_1, window_bounds = array<i64: 9, 2048>}, {pipeline_mode = #tpu.pipeline_mode<synchronous>, transform_indices = @transform_2, window_bounds = array<i64: 8, 72>}, {pipeline_mode = #tpu.pipeline_mode<synchronous>, transform_indices = @transform_3, window_bounds = array<i64: 8, 1>}, {pipeline_mode = #tpu.pipeline_mode<synchronous>, transform_indices = @transform_4, window_bounds = array<i64: 8, 72>}, {pipeline_mode = #tpu.pipeline_mode<synchronous>, transform_indices = @transform_5, window_bounds = array<i64: 8, 1>}, {pipeline_mode = #tpu.pipeline_mode<synchronous>, transform_indices = @transform_6, window_bounds = array<i64: 2, 72>}, {pipeline_mode = #tpu.pipeline_mode<synchronous>, transform_indices = @transform_7, window_bounds = array<i64: 2, 1>}, {transform_indices = @transform_8, window_bounds = array<i64: 2, 2048>}]} {
    %c0 = arith.constant 0 : index
    %c0_0 = arith.constant 0 : index
    %0 = vector.load %arg2[%c0, %c0_0] : memref<9x2048xf32, #tpu.memory_space<vmem>>, vector<9x2048xf32>
    %c0_1 = arith.constant 0 : index
    %c0_2 = arith.constant 0 : index
    %1 = vector.load %arg1[%c0_1, %c0_2] : memref<8x2048xf32, #tpu.memory_space<vmem>>, vector<8x2048xf32>
    %c0_3 = arith.constant 0 : index
    %c0_4 = arith.constant 0 : index
    %2 = vector.load %arg3[%c0_3, %c0_4] : memref<8x72xbf16, #tpu.memory_space<vmem>>, vector<8x72xbf16>
    %c0_5 = arith.constant 0 : index
    %c0_6 = arith.constant 0 : index
    %3 = vector.load %arg4[%c0_5, %c0_6] : memref<8x1xf32, #tpu.memory_space<vmem>>, vector<8x1xf32>
    %c17_i32 = arith.constant 17 : i32
    %4 = tpu.dynamic_rotate %1 by %c17_i32 dim 1 : vector<8x2048xf32>, i32 -> vector<8x2048xf32>
    %5 = vector.extract_strided_slice %0 {offsets = [0, 0], sizes = [1, 2048], strides = [1, 1]} : vector<9x2048xf32> to vector<1x2048xf32>
    %6 = vector.broadcast %5 : vector<1x2048xf32> to vector<8x2048xf32>
    %7 = arith.mulf %4, %6 : vector<8x2048xf32>
    %c16_i32 = arith.constant 16 : i32
    %8 = tpu.dynamic_rotate %1 by %c16_i32 dim 1 : vector<8x2048xf32>, i32 -> vector<8x2048xf32>
    %9 = vector.extract_strided_slice %0 {offsets = [1, 0], sizes = [1, 2048], strides = [1, 1]} : vector<9x2048xf32> to vector<1x2048xf32>
    %10 = vector.broadcast %9 : vector<1x2048xf32> to vector<8x2048xf32>
    %11 = arith.mulf %8, %10 : vector<8x2048xf32>
    %c15_i32 = arith.constant 15 : i32
    %12 = tpu.dynamic_rotate %1 by %c15_i32 dim 1 : vector<8x2048xf32>, i32 -> vector<8x2048xf32>
    %13 = vector.extract_strided_slice %0 {offsets = [2, 0], sizes = [1, 2048], strides = [1, 1]} : vector<9x2048xf32> to vector<1x2048xf32>
    %14 = vector.broadcast %13 : vector<1x2048xf32> to vector<8x2048xf32>
    %15 = arith.mulf %12, %14 : vector<8x2048xf32>
    %c1_i32 = arith.constant 1 : i32
    %16 = tpu.dynamic_rotate %1 by %c1_i32 dim 1 : vector<8x2048xf32>, i32 -> vector<8x2048xf32>
    %17 = vector.extract_strided_slice %0 {offsets = [3, 0], sizes = [1, 2048], strides = [1, 1]} : vector<9x2048xf32> to vector<1x2048xf32>
    %18 = vector.broadcast %17 : vector<1x2048xf32> to vector<8x2048xf32>
    %19 = arith.mulf %16, %18 : vector<8x2048xf32>
    %c2047_i32 = arith.constant 2047 : i32
    %20 = tpu.dynamic_rotate %1 by %c2047_i32 dim 1 : vector<8x2048xf32>, i32 -> vector<8x2048xf32>
    %21 = vector.extract_strided_slice %0 {offsets = [5, 0], sizes = [1, 2048], strides = [1, 1]} : vector<9x2048xf32> to vector<1x2048xf32>
    %22 = vector.broadcast %21 : vector<1x2048xf32> to vector<8x2048xf32>
    %23 = arith.mulf %20, %22 : vector<8x2048xf32>
    %c2033_i32 = arith.constant 2033 : i32
    %24 = tpu.dynamic_rotate %1 by %c2033_i32 dim 1 : vector<8x2048xf32>, i32 -> vector<8x2048xf32>
    %25 = vector.extract_strided_slice %0 {offsets = [6, 0], sizes = [1, 2048], strides = [1, 1]} : vector<9x2048xf32> to vector<1x2048xf32>
    %26 = vector.broadcast %25 : vector<1x2048xf32> to vector<8x2048xf32>
    %27 = arith.mulf %24, %26 : vector<8x2048xf32>
    %c2032_i32 = arith.constant 2032 : i32
    %28 = tpu.dynamic_rotate %1 by %c2032_i32 dim 1 : vector<8x2048xf32>, i32 -> vector<8x2048xf32>
    %29 = vector.extract_strided_slice %0 {offsets = [7, 0], sizes = [1, 2048], strides = [1, 1]} : vector<9x2048xf32> to vector<1x2048xf32>
    %30 = vector.broadcast %29 : vector<1x2048xf32> to vector<8x2048xf32>
    %31 = arith.mulf %28, %30 : vector<8x2048xf32>
    %c2031_i32 = arith.constant 2031 : i32
    %32 = tpu.dynamic_rotate %1 by %c2031_i32 dim 1 : vector<8x2048xf32>, i32 -> vector<8x2048xf32>
    %33 = vector.extract_strided_slice %0 {offsets = [8, 0], sizes = [1, 2048], strides = [1, 1]} : vector<9x2048xf32> to vector<1x2048xf32>
    %34 = vector.broadcast %33 : vector<1x2048xf32> to vector<8x2048xf32>
    %35 = arith.mulf %32, %34 : vector<8x2048xf32>
    %36 = tpu.concatenate %7, %11, %15, %19, %1, %23, %27, %31, %35 in 0 : vector<8x2048xf32>, vector<8x2048xf32>, vector<8x2048xf32>, vector<8x2048xf32>, vector<8x2048xf32>, vector<8x2048xf32>, vector<8x2048xf32>, vector<8x2048xf32>, vector<8x2048xf32> -> vector<72x2048xf32>
    %37 = arith.truncf %36 : vector<72x2048xf32> to vector<72x2048xbf16>
    %cst = arith.constant dense<0.000000e+00> : vector<8x2048xf32>
    %38 = tpu.matmul %2, %37, %cst {dimension_numbers = #tpu.dot_dimension_numbers<[1], [0], [0], [1], [0, 0, 1, 1], [], []>} : vector<8x72xbf16>, vector<72x2048xbf16>, vector<8x2048xf32> -> vector<8x2048xf32>
    %39 = vector.broadcast %3 : vector<8x1xf32> to vector<8x2048xf32>
    %40 = arith.addf %38, %39 : vector<8x2048xf32>
    %cst_7 = arith.constant 0.000000e+00 : f32
    %41 = vector.broadcast %cst_7 : f32 to vector<8x2048xf32>
    %42 = arith.maximumf %40, %41 : vector<8x2048xf32>
    %c0_8 = arith.constant 0 : index
    %c0_9 = arith.constant 0 : index
    %43 = vector.load %arg5[%c0_8, %c0_9] : memref<8x72xbf16, #tpu.memory_space<vmem>>, vector<8x72xbf16>
    %c0_10 = arith.constant 0 : index
    %c0_11 = arith.constant 0 : index
    %44 = vector.load %arg6[%c0_10, %c0_11] : memref<8x1xf32, #tpu.memory_space<vmem>>, vector<8x1xf32>
    %c17_i32_12 = arith.constant 17 : i32
    %45 = tpu.dynamic_rotate %42 by %c17_i32_12 dim 1 : vector<8x2048xf32>, i32 -> vector<8x2048xf32>
    %46 = vector.extract_strided_slice %0 {offsets = [0, 0], sizes = [1, 2048], strides = [1, 1]} : vector<9x2048xf32> to vector<1x2048xf32>
    %47 = vector.broadcast %46 : vector<1x2048xf32> to vector<8x2048xf32>
    %48 = arith.mulf %45, %47 : vector<8x2048xf32>
    %c16_i32_13 = arith.constant 16 : i32
    %49 = tpu.dynamic_rotate %42 by %c16_i32_13 dim 1 : vector<8x2048xf32>, i32 -> vector<8x2048xf32>
    %50 = vector.extract_strided_slice %0 {offsets = [1, 0], sizes = [1, 2048], strides = [1, 1]} : vector<9x2048xf32> to vector<1x2048xf32>
    %51 = vector.broadcast %50 : vector<1x2048xf32> to vector<8x2048xf32>
    %52 = arith.mulf %49, %51 : vector<8x2048xf32>
    %c15_i32_14 = arith.constant 15 : i32
    %53 = tpu.dynamic_rotate %42 by %c15_i32_14 dim 1 : vector<8x2048xf32>, i32 -> vector<8x2048xf32>
    %54 = vector.extract_strided_slice %0 {offsets = [2, 0], sizes = [1, 2048], strides = [1, 1]} : vector<9x2048xf32> to vector<1x2048xf32>
    %55 = vector.broadcast %54 : vector<1x2048xf32> to vector<8x2048xf32>
    %56 = arith.mulf %53, %55 : vector<8x2048xf32>
    %c1_i32_15 = arith.constant 1 : i32
    %57 = tpu.dynamic_rotate %42 by %c1_i32_15 dim 1 : vector<8x2048xf32>, i32 -> vector<8x2048xf32>
    %58 = vector.extract_strided_slice %0 {offsets = [3, 0], sizes = [1, 2048], strides = [1, 1]} : vector<9x2048xf32> to vector<1x2048xf32>
    %59 = vector.broadcast %58 : vector<1x2048xf32> to vector<8x2048xf32>
    %60 = arith.mulf %57, %59 : vector<8x2048xf32>
    %c2047_i32_16 = arith.constant 2047 : i32
    %61 = tpu.dynamic_rotate %42 by %c2047_i32_16 dim 1 : vector<8x2048xf32>, i32 -> vector<8x2048xf32>
    %62 = vector.extract_strided_slice %0 {offsets = [5, 0], sizes = [1, 2048], strides = [1, 1]} : vector<9x2048xf32> to vector<1x2048xf32>
    %63 = vector.broadcast %62 : vector<1x2048xf32> to vector<8x2048xf32>
    %64 = arith.mulf %61, %63 : vector<8x2048xf32>
    %c2033_i32_17 = arith.constant 2033 : i32
    %65 = tpu.dynamic_rotate %42 by %c2033_i32_17 dim 1 : vector<8x2048xf32>, i32 -> vector<8x2048xf32>
    %66 = vector.extract_strided_slice %0 {offsets = [6, 0], sizes = [1, 2048], strides = [1, 1]} : vector<9x2048xf32> to vector<1x2048xf32>
    %67 = vector.broadcast %66 : vector<1x2048xf32> to vector<8x2048xf32>
    %68 = arith.mulf %65, %67 : vector<8x2048xf32>
    %c2032_i32_18 = arith.constant 2032 : i32
    %69 = tpu.dynamic_rotate %42 by %c2032_i32_18 dim 1 : vector<8x2048xf32>, i32 -> vector<8x2048xf32>
    %70 = vector.extract_strided_slice %0 {offsets = [7, 0], sizes = [1, 2048], strides = [1, 1]} : vector<9x2048xf32> to vector<1x2048xf32>
    %71 = vector.broadcast %70 : vector<1x2048xf32> to vector<8x2048xf32>
    %72 = arith.mulf %69, %71 : vector<8x2048xf32>
    %c2031_i32_19 = arith.constant 2031 : i32
    %73 = tpu.dynamic_rotate %42 by %c2031_i32_19 dim 1 : vector<8x2048xf32>, i32 -> vector<8x2048xf32>
    %74 = vector.extract_strided_slice %0 {offsets = [8, 0], sizes = [1, 2048], strides = [1, 1]} : vector<9x2048xf32> to vector<1x2048xf32>
    %75 = vector.broadcast %74 : vector<1x2048xf32> to vector<8x2048xf32>
    %76 = arith.mulf %73, %75 : vector<8x2048xf32>
    %77 = tpu.concatenate %48, %52, %56, %60, %42, %64, %68, %72, %76 in 0 : vector<8x2048xf32>, vector<8x2048xf32>, vector<8x2048xf32>, vector<8x2048xf32>, vector<8x2048xf32>, vector<8x2048xf32>, vector<8x2048xf32>, vector<8x2048xf32>, vector<8x2048xf32> -> vector<72x2048xf32>
    %78 = arith.truncf %77 : vector<72x2048xf32> to vector<72x2048xbf16>
    %cst_20 = arith.constant dense<0.000000e+00> : vector<8x2048xf32>
    %79 = tpu.matmul %43, %78, %cst_20 {dimension_numbers = #tpu.dot_dimension_numbers<[1], [0], [0], [1], [0, 0, 1, 1], [], []>} : vector<8x72xbf16>, vector<72x2048xbf16>, vector<8x2048xf32> -> vector<8x2048xf32>
    %80 = vector.broadcast %44 : vector<8x1xf32> to vector<8x2048xf32>
    %81 = arith.addf %79, %80 : vector<8x2048xf32>
    %cst_21 = arith.constant 0.000000e+00 : f32
    %82 = vector.broadcast %cst_21 : f32 to vector<8x2048xf32>
    %83 = arith.maximumf %81, %82 : vector<8x2048xf32>
    %c0_22 = arith.constant 0 : index
    %c0_23 = arith.constant 0 : index
    %84 = vector.load %arg7[%c0_22, %c0_23] : memref<2x72xbf16, #tpu.memory_space<vmem>>, vector<2x72xbf16>
    %c0_24 = arith.constant 0 : index
    %c0_25 = arith.constant 0 : index
    %85 = vector.load %arg8[%c0_24, %c0_25] : memref<2x1xf32, #tpu.memory_space<vmem>>, vector<2x1xf32>
    %c17_i32_26 = arith.constant 17 : i32
    %86 = tpu.dynamic_rotate %83 by %c17_i32_26 dim 1 : vector<8x2048xf32>, i32 -> vector<8x2048xf32>
    %87 = vector.extract_strided_slice %0 {offsets = [0, 0], sizes = [1, 2048], strides = [1, 1]} : vector<9x2048xf32> to vector<1x2048xf32>
    %88 = vector.broadcast %87 : vector<1x2048xf32> to vector<8x2048xf32>
    %89 = arith.mulf %86, %88 : vector<8x2048xf32>
    %c16_i32_27 = arith.constant 16 : i32
    %90 = tpu.dynamic_rotate %83 by %c16_i32_27 dim 1 : vector<8x2048xf32>, i32 -> vector<8x2048xf32>
    %91 = vector.extract_strided_slice %0 {offsets = [1, 0], sizes = [1, 2048], strides = [1, 1]} : vector<9x2048xf32> to vector<1x2048xf32>
    %92 = vector.broadcast %91 : vector<1x2048xf32> to vector<8x2048xf32>
    %93 = arith.mulf %90, %92 : vector<8x2048xf32>
    %c15_i32_28 = arith.constant 15 : i32
    %94 = tpu.dynamic_rotate %83 by %c15_i32_28 dim 1 : vector<8x2048xf32>, i32 -> vector<8x2048xf32>
    %95 = vector.extract_strided_slice %0 {offsets = [2, 0], sizes = [1, 2048], strides = [1, 1]} : vector<9x2048xf32> to vector<1x2048xf32>
    %96 = vector.broadcast %95 : vector<1x2048xf32> to vector<8x2048xf32>
    %97 = arith.mulf %94, %96 : vector<8x2048xf32>
    %c1_i32_29 = arith.constant 1 : i32
    %98 = tpu.dynamic_rotate %83 by %c1_i32_29 dim 1 : vector<8x2048xf32>, i32 -> vector<8x2048xf32>
    %99 = vector.extract_strided_slice %0 {offsets = [3, 0], sizes = [1, 2048], strides = [1, 1]} : vector<9x2048xf32> to vector<1x2048xf32>
    %100 = vector.broadcast %99 : vector<1x2048xf32> to vector<8x2048xf32>
    %101 = arith.mulf %98, %100 : vector<8x2048xf32>
    %c2047_i32_30 = arith.constant 2047 : i32
    %102 = tpu.dynamic_rotate %83 by %c2047_i32_30 dim 1 : vector<8x2048xf32>, i32 -> vector<8x2048xf32>
    %103 = vector.extract_strided_slice %0 {offsets = [5, 0], sizes = [1, 2048], strides = [1, 1]} : vector<9x2048xf32> to vector<1x2048xf32>
    %104 = vector.broadcast %103 : vector<1x2048xf32> to vector<8x2048xf32>
    %105 = arith.mulf %102, %104 : vector<8x2048xf32>
    %c2033_i32_31 = arith.constant 2033 : i32
    %106 = tpu.dynamic_rotate %83 by %c2033_i32_31 dim 1 : vector<8x2048xf32>, i32 -> vector<8x2048xf32>
    %107 = vector.extract_strided_slice %0 {offsets = [6, 0], sizes = [1, 2048], strides = [1, 1]} : vector<9x2048xf32> to vector<1x2048xf32>
    %108 = vector.broadcast %107 : vector<1x2048xf32> to vector<8x2048xf32>
    %109 = arith.mulf %106, %108 : vector<8x2048xf32>
    %c2032_i32_32 = arith.constant 2032 : i32
    %110 = tpu.dynamic_rotate %83 by %c2032_i32_32 dim 1 : vector<8x2048xf32>, i32 -> vector<8x2048xf32>
    %111 = vector.extract_strided_slice %0 {offsets = [7, 0], sizes = [1, 2048], strides = [1, 1]} : vector<9x2048xf32> to vector<1x2048xf32>
    %112 = vector.broadcast %111 : vector<1x2048xf32> to vector<8x2048xf32>
    %113 = arith.mulf %110, %112 : vector<8x2048xf32>
    %c2031_i32_33 = arith.constant 2031 : i32
    %114 = tpu.dynamic_rotate %83 by %c2031_i32_33 dim 1 : vector<8x2048xf32>, i32 -> vector<8x2048xf32>
    %115 = vector.extract_strided_slice %0 {offsets = [8, 0], sizes = [1, 2048], strides = [1, 1]} : vector<9x2048xf32> to vector<1x2048xf32>
    %116 = vector.broadcast %115 : vector<1x2048xf32> to vector<8x2048xf32>
    %117 = arith.mulf %114, %116 : vector<8x2048xf32>
    %118 = tpu.concatenate %89, %93, %97, %101, %83, %105, %109, %113, %117 in 0 : vector<8x2048xf32>, vector<8x2048xf32>, vector<8x2048xf32>, vector<8x2048xf32>, vector<8x2048xf32>, vector<8x2048xf32>, vector<8x2048xf32>, vector<8x2048xf32>, vector<8x2048xf32> -> vector<72x2048xf32>
    %119 = arith.truncf %118 : vector<72x2048xf32> to vector<72x2048xbf16>
    %cst_34 = arith.constant dense<0.000000e+00> : vector<2x2048xf32>
    %120 = tpu.matmul %84, %119, %cst_34 {dimension_numbers = #tpu.dot_dimension_numbers<[1], [0], [0], [1], [0, 0, 1, 1], [], []>} : vector<2x72xbf16>, vector<72x2048xbf16>, vector<2x2048xf32> -> vector<2x2048xf32>
    %121 = vector.broadcast %85 : vector<2x1xf32> to vector<2x2048xf32>
    %122 = arith.addf %120, %121 : vector<2x2048xf32>
    %c0_35 = arith.constant 0 : index
    %c0_36 = arith.constant 0 : index
    %123 = vector.load %arg9[%c0_35, %c0_36] : memref<2x2048xf32, #tpu.memory_space<vmem>>, vector<2x2048xf32>
    tpu.vector_store %arg9[%c0_35, %c0_36], %122 {strides = array<i32>} : memref<2x2048xf32, #tpu.memory_space<vmem>>, vector<2x2048xf32>,
    return
  }
  func.func @transform_0(%arg0: i32) -> (i32, i32) {
    %c0_i32 = arith.constant 0 : i32
    %c0_i32_0 = arith.constant 0 : i32
    return %c0_i32, %arg0 : i32, i32
  }
  func.func @transform_1(%arg0: i32) -> (i32, i32) {
    %c0_i32 = arith.constant 0 : i32
    %c0_i32_0 = arith.constant 0 : i32
    %c0_i32_1 = arith.constant 0 : i32
    return %c0_i32, %c0_i32_0 : i32, i32
  }
  func.func @transform_2(%arg0: i32) -> (i32, i32) {
    %c0_i32 = arith.constant 0 : i32
    %c0_i32_0 = arith.constant 0 : i32
    %c0_i32_1 = arith.constant 0 : i32
    return %c0_i32, %c0_i32_0 : i32, i32
  }
  func.func @transform_3(%arg0: i32) -> (i32, i32) {
    %c0_i32 = arith.constant 0 : i32
    %c0_i32_0 = arith.constant 0 : i32
    %c0_i32_1 = arith.constant 0 : i32
    return %c0_i32, %c0_i32_0 : i32, i32
  }
  func.func @transform_4(%arg0: i32) -> (i32, i32) {
    %c0_i32 = arith.constant 0 : i32
    %c0_i32_0 = arith.constant 0 : i32
    %c0_i32_1 = arith.constant 0 : i32
    return %c0_i32, %c0_i32_0 : i32, i32
  }
  func.func @transform_5(%arg0: i32) -> (i32, i32) {
    %c0_i32 = arith.constant 0 : i32
    %c0_i32_0 = arith.constant 0 : i32
    %c0_i32_1 = arith.constant 0 : i32
    return %c0_i32, %c0_i32_0 : i32, i32
  }
  func.func @transform_6(%arg0: i32) -> (i32, i32) {
    %c0_i32 = arith.constant 0 : i32
    %c0_i32_0 = arith.constant 0 : i32
    %c0_i32_1 = arith.constant 0 : i32
    return %c0_i32, %c0_i32_0 : i32, i32
  }
  func.func @transform_7(%arg0: i32) -> (i32, i32) {
    %c0_i32 = arith.constant 0 : i32
    %c0_i32_0 = arith.constant 0 : i32
    %c0_i32_1 = arith.constant 0 : i32
    return %c0_i32, %c0_i32_0 : i32, i32
  }
  func.func @transform_8(%arg0: i32) -> (i32, i32) {
    %c0_i32 = arith.constant 0 : i32
    %c0_i32_0 = arith.constant 0 : i32
    return %c0_i32, %arg0 : i32, i32
  }
}

module attributes {stable_mosaic.version = 11 : i64} {
  func.func @_dc_combine_kernel(%arg0: i32, %arg1: memref<1x2048xf32, #tpu.memory_space<vmem>>, %arg2: memref<1x2048xf32, #tpu.memory_space<vmem>>, %arg3: memref<1x2048xf32, #tpu.memory_space<vmem>>, %arg4: memref<1x2048xf32, #tpu.memory_space<vmem>>, %arg5: memref<1x2048xf32, #tpu.memory_space<vmem>>, %arg6: memref<1x2048xf32, #tpu.memory_space<vmem>>, %arg7: memref<1x2048xf32, #tpu.memory_space<vmem>>) attributes {dimension_semantics = [#tpu.dimension_semantics<parallel>], iteration_bounds = array<i64: 1>, scalar_prefetch = 0 : i64, scratch_operands = 0 : i64, tpu.core_type = #tpu.core_type<tc>, window_params = [{transform_indices = @transform_0, window_bounds = array<i64: 1, 2048>}, {transform_indices = @transform_1, window_bounds = array<i64: 1, 2048>}, {transform_indices = @transform_2, window_bounds = array<i64: 1, 2048>}, {transform_indices = @transform_3, window_bounds = array<i64: 1, 2048>}, {transform_indices = @transform_4, window_bounds = array<i64: 1, 2048>}, {transform_indices = @transform_5, window_bounds = array<i64: 1, 2048>}, {transform_indices = @transform_6, window_bounds = array<i64: 1, 2048>}]} {
    %c0 = arith.constant 0 : index
    %c0_0 = arith.constant 0 : index
    %0 = vector.load %arg5[%c0, %c0_0] : memref<1x2048xf32, #tpu.memory_space<vmem>>, vector<1x2048xf32>
    %c0_1 = arith.constant 0 : index
    %c0_2 = arith.constant 0 : index
    %1 = vector.load %arg1[%c0_1, %c0_2] : memref<1x2048xf32, #tpu.memory_space<vmem>>, vector<1x2048xf32>
    %c0_3 = arith.constant 0 : index
    %c0_4 = arith.constant 0 : index
    %2 = vector.load %arg2[%c0_3, %c0_4] : memref<1x2048xf32, #tpu.memory_space<vmem>>, vector<1x2048xf32>
    %c0_5 = arith.constant 0 : index
    %c0_6 = arith.constant 0 : index
    %3 = vector.load %arg3[%c0_5, %c0_6] : memref<1x2048xf32, #tpu.memory_space<vmem>>, vector<1x2048xf32>
    %4 = arith.subf %3, %1 : vector<1x2048xf32>
    %5 = arith.mulf %0, %4 : vector<1x2048xf32>
    %6 = arith.addf %1, %5 : vector<1x2048xf32>
    %c0_7 = arith.constant 0 : index
    %c0_8 = arith.constant 0 : index
    %7 = vector.load %arg6[%c0_7, %c0_8] : memref<1x2048xf32, #tpu.memory_space<vmem>>, vector<1x2048xf32>
    tpu.vector_store %arg6[%c0_7, %c0_8], %6 {strides = array<i32>} : memref<1x2048xf32, #tpu.memory_space<vmem>>, vector<1x2048xf32>,
    %c0_9 = arith.constant 0 : index
    %c0_10 = arith.constant 0 : index
    %8 = vector.load %arg4[%c0_9, %c0_10] : memref<1x2048xf32, #tpu.memory_space<vmem>>, vector<1x2048xf32>
    %9 = arith.subf %8, %2 : vector<1x2048xf32>
    %10 = arith.mulf %0, %9 : vector<1x2048xf32>
    %11 = arith.addf %2, %10 : vector<1x2048xf32>
    %c0_11 = arith.constant 0 : index
    %c0_12 = arith.constant 0 : index
    %12 = vector.load %arg7[%c0_11, %c0_12] : memref<1x2048xf32, #tpu.memory_space<vmem>>, vector<1x2048xf32>
    tpu.vector_store %arg7[%c0_11, %c0_12], %11 {strides = array<i32>} : memref<1x2048xf32, #tpu.memory_space<vmem>>, vector<1x2048xf32>,
    return
  }
  func.func @transform_0(%arg0: i32) -> (i32, i32) {
    %c0_i32 = arith.constant 0 : i32
    %c0_i32_0 = arith.constant 0 : i32
    return %arg0, %c0_i32 : i32, i32
  }
  func.func @transform_1(%arg0: i32) -> (i32, i32) {
    %c0_i32 = arith.constant 0 : i32
    %c0_i32_0 = arith.constant 0 : i32
    return %arg0, %c0_i32 : i32, i32
  }
  func.func @transform_2(%arg0: i32) -> (i32, i32) {
    %c0_i32 = arith.constant 0 : i32
    %c0_i32_0 = arith.constant 0 : i32
    return %arg0, %c0_i32 : i32, i32
  }
  func.func @transform_3(%arg0: i32) -> (i32, i32) {
    %c0_i32 = arith.constant 0 : i32
    %c0_i32_0 = arith.constant 0 : i32
    return %arg0, %c0_i32 : i32, i32
  }
  func.func @transform_4(%arg0: i32) -> (i32, i32) {
    %c0_i32 = arith.constant 0 : i32
    %c0_i32_0 = arith.constant 0 : i32
    return %arg0, %c0_i32 : i32, i32
  }
  func.func @transform_5(%arg0: i32) -> (i32, i32) {
    %c0_i32 = arith.constant 0 : i32
    %c0_i32_0 = arith.constant 0 : i32
    return %arg0, %c0_i32 : i32, i32
  }
  func.func @transform_6(%arg0: i32) -> (i32, i32) {
    %c0_i32 = arith.constant 0 : i32
    %c0_i32_0 = arith.constant 0 : i32
    return %arg0, %c0_i32 : i32, i32
  }
}

</mosaic_0001>

<llo_original>
// kernel: squeeze.8
$region0: #{squeeze.8}
  %s0 = inlined_call_operand.vmem [shape: f32[2,16,16,4,1], index: 0, kind: input, shape index: {}]
  %s1 = inlined_call_operand.vmem [shape: f32[1,2048], index: 1, kind: output, shape index: {}]
  $region1: #{squeeze.8} parent=0
    #allocation0 [shape = 'u8[65536]{0}', space=vmem, size = 0x10000, scoped, tag = 'scoped mem for output reshape']
    %v2 = vld [vmem:[%s0] sm:$0x1]
    %s3 = scalar_lea.vmem %s0, 31
    %v4 = vld [vmem:[%s3] sm:$0x2]
    %vm5 = vcmask 1041409
    %v6 = vsel %vm5, %v4, %v2
    %s7 = scalar_lea.vmem %s0, 62
    %v8 = vld [vmem:[%s7] sm:$0x4]
    %vm9 = vcmask 1042434
    %v10 = vsel %vm9, %v8, %v6
    %s11 = scalar_lea.vmem %s0, 93
    %v12 = vld [vmem:[%s11] sm:$0x8]
    %vm13 = vcmask 1043459
    %v14 = vsel %vm13, %v12, %v10
    %s15 = scalar_lea.vmem %s0, 124
    %v16 = vld [vmem:[%s15] sm:$0x10]
    %vm17 = vcmask 1044484
    %v18 = vsel %vm17, %v16, %v14
    %s19 = scalar_lea.vmem %s0, 155
    %v20 = vld [vmem:[%s19] sm:$0x20]
    %vm21 = vcmask 1045509
    %v22 = vsel %vm21, %v20, %v18
    %s23 = scalar_lea.vmem %s0, 186
    %v24 = vld [vmem:[%s23] sm:$0x40]
    %vm25 = vcmask 1046534
    %v26 = vsel %vm25, %v24, %v22
    %s27 = scalar_lea.vmem %s0, 217
    %v28 = vld [vmem:[%s27] sm:$0x80]
    %vm29 = vcmask 1047559
    %v30 = vsel %vm29, %v28, %v26
    %vm31 = vcmask 31744
    %32 = vst.msk [vmem:[#allocation0] ss:$8 sm:$0xf] %vm31, %v30
    %33 = vst.msk [vmem:[#allocation0] ss:$8 sm:$0xf0] %vm31, %v30
    %s34 = scalar_lea.vmem %s0, 256
    %v35 = vld [vmem:[%s34] sm:$0x1]
    %s36 = scalar_lea.vmem %s0, 287
    %v37 = vld [vmem:[%s36] sm:$0x2]
    %vm38 = vcmask 1041409
    %v39 = vsel %vm38, %v37, %v35
    %s40 = scalar_lea.vmem %s0, 318
    %v41 = vld [vmem:[%s40] sm:$0x4]
    %vm42 = vcmask 1042434
    %v43 = vsel %vm42, %v41, %v39
    %s44 = scalar_lea.vmem %s0, 349
    %v45 = vld [vmem:[%s44] sm:$0x8]
    %vm46 = vcmask 1043459
    %v47 = vsel %vm46, %v45, %v43
    %s48 = scalar_lea.vmem %s0, 380
    %v49 = vld [vmem:[%s48] sm:$0x10]
    %vm50 = vcmask 1044484
    %v51 = vsel %vm50, %v49, %v47
    %s52 = scalar_lea.vmem %s0, 411
    %v53 = vld [vmem:[%s52] sm:$0x20]
    %vm54 = vcmask 1045509
    %v55 = vsel %vm54, %v53, %v51
    %s56 = scalar_lea.vmem %s0, 442
    %v57 = vld [vmem:[%s56] sm:$0x40]
    %vm58 = vcmask 1046534
    %v59 = vsel %vm58, %v57, %v55
    %s60 = scalar_lea.vmem %s0, 473
    %v61 = vld [vmem:[%s60] sm:$0x80]
    %vm62 = vcmask 1047559
    %v63 = vsel %vm62, %v61, %v59
    %vm64 = vcmask 31744
    %s65 = scalar_lea.vmem [#allocation0], 64
    %66 = vst.msk [vmem:[%s65] ss:$8 sm:$0xf] %vm64, %v63
    %s67 = scalar_lea.vmem [#allocation0], 64
    %68 = vst.msk [vmem:[%s67] ss:$8 sm:$0xf0] %vm64, %v63
    %s69 = scalar_lea.vmem %s0, 31
    %v70 = vld [vmem:[%s69] sm:$0x1]
    %s71 = scalar_lea.vmem %s0, 62
    %v72 = vld [vmem:[%s71] sm:$0x2]
    %vm73 = vcmask 1041409
    %v74 = vsel %vm73, %v72, %v70
    %s75 = scalar_lea.vmem %s0, 93
    %v76 = vld [vmem:[%s75] sm:$0x4]
    %vm77 = vcmask 1042434
    %v78 = vsel %vm77, %v76, %v74
    %s79 = scalar_lea.vmem %s0, 124
    %v80 = vld [vmem:[%s79] sm:$0x8]
    %vm81 = vcmask 1043459
    %v82 = vsel %vm81, %v80, %v78
    %s83 = scalar_lea.vmem %s0, 155
    %v84 = vld [vmem:[%s83] sm:$0x10]
    %vm85 = vcmask 1044484
    %v86 = vsel %vm85, %v84, %v82
    %s87 = scalar_lea.vmem %s0, 186
    %v88 = vld [vmem:[%s87] sm:$0x20]
    %vm89 = vcmask 1045509
    %v90 = vsel %vm89, %v88, %v86
    %s91 = scalar_lea.vmem %s0, 217
    %v92 = vld [vmem:[%s91] sm:$0x40]
    %vm93 = vcmask 1046534
    %v94 = vsel %vm93, %v92, %v90
    %s95 = scalar_lea.vmem %s0, 248
    %v96 = vld [vmem:[%s95] sm:$0x80]
    %vm97 = vcmask 1047559
    %v98 = vsel %vm97, %v96, %v94
    %99 = vrot.lane.b32.xlu0 %v98, 124
    %v100 = vpop.permute.xlu0 %99
    %vm101 = vcmask 1048544
    %102 = vst.msk [vmem:[#allocation0] ss:$8 sm:$0xf] %vm101, %v100
    %103 = vst.msk [vmem:[#allocation0] ss:$8 sm:$0xf0] %vm101, %v100
    %s104 = scalar_lea.vmem %s0, 287
    %v105 = vld [vmem:[%s104] sm:$0x1]
    %s106 = scalar_lea.vmem %s0, 318
    %v107 = vld [vmem:[%s106] sm:$0x2]
    %vm108 = vcmask 1041409
    %v109 = vsel %vm108, %v107, %v105
    %s110 = scalar_lea.vmem %s0, 349
    %v111 = vld [vmem:[%s110] sm:$0x4]
    %vm112 = vcmask 1042434
    %v113 = vsel %vm112, %v111, %v109
    %s114 = scalar_lea.vmem %s0, 380
    %v115 = vld [vmem:[%s114] sm:$0x8]
    %vm116 = vcmask 1043459
    %v117 = vsel %vm116, %v115, %v113
    %s118 = scalar_lea.vmem %s0, 411
    %v119 = vld [vmem:[%s118] sm:$0x10]
    %vm120 = vcmask 1044484
    %v121 = vsel %vm120, %v119, %v117
    %s122 = scalar_lea.vmem %s0, 442
    %v123 = vld [vmem:[%s122] sm:$0x20]
    %vm124 = vcmask 1045509
    %v125 = vsel %vm124, %v123, %v121
    %s126 = scalar_lea.vmem %s0, 473
    %v127 = vld [vmem:[%s126] sm:$0x40]
    %vm128 = vcmask 1046534
    %v129 = vsel %vm128, %v127, %v125
    %s130 = scalar_lea.vmem %s0, 504
    %v131 = vld [vmem:[%s130] sm:$0x80]
    %vm132 = vcmask 1047559
    %v133 = vsel %vm132, %v131, %v129
    %134 = vrot.lane.b32.xlu0 %v133, 124
    %v135 = vpop.permute.xlu0 %134
    %vm136 = vcmask 1048544
    %s137 = scalar_lea.vmem [#allocation0], 64
    %138 = vst.msk [vmem:[%s137] ss:$8 sm:$0xf] %vm136, %v135
    %s139 = scalar_lea.vmem [#allocation0], 64
    %140 = vst.msk [vmem:[%s139] ss:$8 sm:$0xf0] %vm136, %v135
    %s141 = scalar_lea.vmem %s0, 30
    %v142 = vld [vmem:[%s141] sm:$0x1]
    %s143 = scalar_lea.vmem %s0, 61
    %v144 = vld [vmem:[%s143] sm:$0x2]
    %vm145 = vcmask 1041409
    %v146 = vsel %vm145, %v144, %v142
    %s147 = scalar_lea.vmem %s0, 92
    %v148 = vld [vmem:[%s147] sm:$0x4]
    %vm149 = vcmask 1042434
    %v150 = vsel %vm149, %v148, %v146
    %s151 = scalar_lea.vmem %s0, 123
    %v152 = vld [vmem:[%s151] sm:$0x8]
    %vm153 = vcmask 1043459
    %v154 = vsel %vm153, %v152, %v150
    %s155 = scalar_lea.vmem %s0, 154
    %v156 = vld [vmem:[%s155] sm:$0x10]
    %vm157 = vcmask 1044484
    %v158 = vsel %vm157, %v156, %v154
    %s159 = scalar_lea.vmem %s0, 185
    %v160 = vld [vmem:[%s159] sm:$0x20]
    %vm161 = vcmask 1045509
    %v162 = vsel %vm161, %v160, %v158
    %s163 = scalar_lea.vmem %s0, 216
    %v164 = vld [vmem:[%s163] sm:$0x40]
    %vm165 = vcmask 1046534
    %v166 = vsel %vm165, %v164, %v162
    %s167 = scalar_lea.vmem %s0, 247
    %v168 = vld [vmem:[%s167] sm:$0x80]
    %vm169 = vcmask 1047559
    %v170 = vsel %vm169, %v168, %v166
    %171 = vrot.lane.b32.xlu0 %v170, 120
    %v172 = vpop.permute.xlu0 %171
    %vm173 = vcmask 1015744
    %174 = vst.msk [vmem:[#allocation0] ss:$8 sm:$0xf] %vm173, %v172
    %175 = vst.msk [vmem:[#allocation0] ss:$8 sm:$0xf0] %vm173, %v172
    %s176 = scalar_lea.vmem %s0, 286
    %v177 = vld [vmem:[%s176] sm:$0x1]
    %s178 = scalar_lea.vmem %s0, 317
    %v179 = vld [vmem:[%s178] sm:$0x2]
    %vm180 = vcmask 1041409
    %v181 = vsel %vm180, %v179, %v177
    %s182 = scalar_lea.vmem %s0, 348
    %v183 = vld [vmem:[%s182] sm:$0x4]
    %vm184 = vcmask 1042434
    %v185 = vsel %vm184, %v183, %v181
    %s186 = scalar_lea.vmem %s0, 379
    %v187 = vld [vmem:[%s186] sm:$0x8]
    %vm188 = vcmask 1043459
    %v189 = vsel %vm188, %v187, %v185
    %s190 = scalar_lea.vmem %s0, 410
    %v191 = vld [vmem:[%s190] sm:$0x10]
    %vm192 = vcmask 1044484
    %v193 = vsel %vm192, %v191, %v189
    %s194 = scalar_lea.vmem %s0, 441
    %v195 = vld [vmem:[%s194] sm:$0x20]
    %vm196 = vcmask 1045509
    %v197 = vsel %vm196, %v195, %v193
    %s198 = scalar_lea.vmem %s0, 472
    %v199 = vld [vmem:[%s198] sm:$0x40]
    %vm200 = vcmask 1046534
    %v201 = vsel %vm200, %v199, %v197
    %s202 = scalar_lea.vmem %s0, 503
    %v203 = vld [vmem:[%s202] sm:$0x80]
    %vm204 = vcmask 1047559
    %v205 = vsel %vm204, %v203, %v201
    %206 = vrot.lane.b32.xlu0 %v205, 120
    %v207 = vpop.permute.xlu0 %206
    %vm208 = vcmask 1015744
    %s209 = scalar_lea.vmem [#allocation0], 64
    %210 = vst.msk [vmem:[%s209] ss:$8 sm:$0xf] %vm208, %v207
    %s211 = scalar_lea.vmem [#allocation0], 64
    %212 = vst.msk [vmem:[%s211] ss:$8 sm:$0xf0] %vm208, %v207
    %s213 = scalar_lea.vmem %s0, 29
    %v214 = vld [vmem:[%s213] sm:$0x1]
    %s215 = scalar_lea.vmem %s0, 60
    %v216 = vld [vmem:[%s215] sm:$0x2]
    %vm217 = vcmask 1041409
    %v218 = vsel %vm217, %v216, %v214
    %s219 = scalar_lea.vmem %s0, 91
    %v220 = vld [vmem:[%s219] sm:$0x4]
    %vm221 = vcmask 1042434
    %v222 = vsel %vm221, %v220, %v218
    %s223 = scalar_lea.vmem %s0, 122
    %v224 = vld [vmem:[%s223] sm:$0x8]
    %vm225 = vcmask 1043459
    %v226 = vsel %vm225, %v224, %v222
    %s227 = scalar_lea.vmem %s0, 153
    %v228 = vld [vmem:[%s227] sm:$0x10]
    %vm229 = vcmask 1044484
    %v230 = vsel %vm229, %v228, %v226
    %s231 = scalar_lea.vmem %s0, 184
    %v232 = vld [vmem:[%s231] sm:$0x20]
    %vm233 = vcmask 1045509
    %v234 = vsel %vm233, %v232, %v230
    %s235 = scalar_lea.vmem %s0, 215
    %v236 = vld [vmem:[%s235] sm:$0x40]
    %vm237 = vcmask 1046534
    %v238 = vsel %vm237, %v236, %v234
    %s239 = scalar_lea.vmem %s0, 246
    %v240 = vld [vmem:[%s239] sm:$0x80]
    %vm241 = vcmask 1047559
    %v242 = vsel %vm241, %v240, %v238
    %243 = vrot.lane.b32.xlu0 %v242, 116
    %v244 = vpop.permute.xlu0 %243
    %vm245 = vcmask 982944
    %246 = vst.msk [vmem:[#allocation0] ss:$8 sm:$0xf] %vm245, %v244
    %247 = vst.msk [vmem:[#allocation0] ss:$8 sm:$0xf0] %vm245, %v244
    %s248 = scalar_lea.vmem %s0, 285
    %v249 = vld [vmem:[%s248] sm:$0x1]
    %s250 = scalar_lea.vmem %s0, 316
    %v251 = vld [vmem:[%s250] sm:$0x2]
    %vm252 = vcmask 1041409
    %v253 = vsel %vm252, %v251, %v249
    %s254 = scalar_lea.vmem %s0, 347
    %v255 = vld [vmem:[%s254] sm:$0x4]
    %vm256 = vcmask 1042434
    %v257 = vsel %vm256, %v255, %v253
    %s258 = scalar_lea.vmem %s0, 378
    %v259 = vld [vmem:[%s258] sm:$0x8]
    %vm260 = vcmask 1043459
    %v261 = vsel %vm260, %v259, %v257
    %s262 = scalar_lea.vmem %s0, 409
    %v263 = vld [vmem:[%s262] sm:$0x10]
    %vm264 = vcmask 1044484
    %v265 = vsel %vm264, %v263, %v261
    %s266 = scalar_lea.vmem %s0, 440
    %v267 = vld [vmem:[%s266] sm:$0x20]
    %vm268 = vcmask 1045509
    %v269 = vsel %vm268, %v267, %v265
    %s270 = scalar_lea.vmem %s0, 471
    %v271 = vld [vmem:[%s270] sm:$0x40]
    %vm272 = vcmask 1046534
    %v273 = vsel %vm272, %v271, %v269
    %s274 = scalar_lea.vmem %s0, 502
    %v275 = vld [vmem:[%s274] sm:$0x80]
    %vm276 = vcmask 1047559
    %v277 = vsel %vm276, %v275, %v273
    %278 = vrot.lane.b32.xlu0 %v277, 116
    %v279 = vpop.permute.xlu0 %278
    %vm280 = vcmask 982944
    %s281 = scalar_lea.vmem [#allocation0], 64
    %282 = vst.msk [vmem:[%s281] ss:$8 sm:$0xf] %vm280, %v279
    %s283 = scalar_lea.vmem [#allocation0], 64
    %284 = vst.msk [vmem:[%s283] ss:$8 sm:$0xf0] %vm280, %v279
    %s285 = scalar_lea.vmem %s0, 28
    %v286 = vld [vmem:[%s285] sm:$0x1]
    %s287 = scalar_lea.vmem %s0, 59
    %v288 = vld [vmem:[%s287] sm:$0x2]
    %vm289 = vcmask 1041409
    %v290 = vsel %vm289, %v288, %v286
    %s291 = scalar_lea.vmem %s0, 90
    %v292 = vld [vmem:[%s291] sm:$0x4]
    %vm293 = vcmask 1042434
    %v294 = vsel %vm293, %v292, %v290
    %s295 = scalar_lea.vmem %s0, 121
    %v296 = vld [vmem:[%s295] sm:$0x8]
    %vm297 = vcmask 1043459
    %v298 = vsel %vm297, %v296, %v294
    %s299 = scalar_lea.vmem %s0, 152
    %v300 = vld [vmem:[%s299] sm:$0x10]
    %vm301 = vcmask 1044484
    %v302 = vsel %vm301, %v300, %v298
    %s303 = scalar_lea.vmem %s0, 183
    %v304 = vld [vmem:[%s303] sm:$0x20]
    %vm305 = vcmask 1045509
    %v306 = vsel %vm305, %v304, %v302
    %s307 = scalar_lea.vmem %s0, 214
    %v308 = vld [vmem:[%s307] sm:$0x40]
    %vm309 = vcmask 1046534
    %v310 = vsel %vm309, %v308, %v306
    %s311 = scalar_lea.vmem %s0, 245
    %v312 = vld [vmem:[%s311] sm:$0x80]
    %vm313 = vcmask 1047559
    %v314 = vsel %vm313, %v312, %v310
    %315 = vrot.lane.b32.xlu0 %v314, 112
    %v316 = vpop.permute.xlu0 %315
    %vm317 = vcmask 950144
    %318 = vst.msk [vmem:[#allocation0] ss:$8 sm:$0xf] %vm317, %v316
    %319 = vst.msk [vmem:[#allocation0] ss:$8 sm:$0xf0] %vm317, %v316
    %s320 = scalar_lea.vmem %s0, 284
    %v321 = vld [vmem:[%s320] sm:$0x1]
    %s322 = scalar_lea.vmem %s0, 315
    %v323 = vld [vmem:[%s322] sm:$0x2]
    %vm324 = vcmask 1041409
    %v325 = vsel %vm324, %v323, %v321
    %s326 = scalar_lea.vmem %s0, 346
    %v327 = vld [vmem:[%s326] sm:$0x4]
    %vm328 = vcmask 1042434
    %v329 = vsel %vm328, %v327, %v325
    %s330 = scalar_lea.vmem %s0, 377
    %v331 = vld [vmem:[%s330] sm:$0x8]
    %vm332 = vcmask 1043459
    %v333 = vsel %vm332, %v331, %v329
    %s334 = scalar_lea.vmem %s0, 408
    %v335 = vld [vmem:[%s334] sm:$0x10]
    %vm336 = vcmask 1044484
    %v337 = vsel %vm336, %v335, %v333
    %s338 = scalar_lea.vmem %s0, 439
    %v339 = vld [vmem:[%s338] sm:$0x20]
    %vm340 = vcmask 1045509
    %v341 = vsel %vm340, %v339, %v337
    %s342 = scalar_lea.vmem %s0, 470
    %v343 = vld [vmem:[%s342] sm:$0x40]
    %vm344 = vcmask 1046534
    %v345 = vsel %vm344, %v343, %v341
    %s346 = scalar_lea.vmem %s0, 501
    %v347 = vld [vmem:[%s346] sm:$0x80]
    %vm348 = vcmask 1047559
    %v349 = vsel %vm348, %v347, %v345
    %350 = vrot.lane.b32.xlu0 %v349, 112
    %v351 = vpop.permute.xlu0 %350
    %vm352 = vcmask 950144
    %s353 = scalar_lea.vmem [#allocation0], 64
    %354 = vst.msk [vmem:[%s353] ss:$8 sm:$0xf] %vm352, %v351
    %s355 = scalar_lea.vmem [#allocation0], 64
    %356 = vst.msk [vmem:[%s355] ss:$8 sm:$0xf0] %vm352, %v351
    %s357 = scalar_lea.vmem %s0, 27
    %v358 = vld [vmem:[%s357] sm:$0x1]
    %s359 = scalar_lea.vmem %s0, 58
    %v360 = vld [vmem:[%s359] sm:$0x2]
    %vm361 = vcmask 1041409
    %v362 = vsel %vm361, %v360, %v358
    %s363 = scalar_lea.vmem %s0, 89
    %v364 = vld [vmem:[%s363] sm:$0x4]
    %vm365 = vcmask 1042434
    %v366 = vsel %vm365, %v364, %v362
    %s367 = scalar_lea.vmem %s0, 120
    %v368 = vld [vmem:[%s367] sm:$0x8]
    %vm369 = vcmask 1043459
    %v370 = vsel %vm369, %v368, %v366
    %s371 = scalar_lea.vmem %s0, 151
    %v372 = vld [vmem:[%s371] sm:$0x10]
    %vm373 = vcmask 1044484
    %v374 = vsel %vm373, %v372, %v370
    %s375 = scalar_lea.vmem %s0, 182
    %v376 = vld [vmem:[%s375] sm:$0x20]
    %vm377 = vcmask 1045509
    %v378 = vsel %vm377, %v376, %v374
    %s379 = scalar_lea.vmem %s0, 213
    %v380 = vld [vmem:[%s379] sm:$0x40]
    %vm381 = vcmask 1046534
    %v382 = vsel %vm381, %v380, %v378
    %s383 = scalar_lea.vmem %s0, 244
    %v384 = vld [vmem:[%s383] sm:$0x80]
    %vm385 = vcmask 1047559
    %v386 = vsel %vm385, %v384, %v382
    %387 = vrot.lane.b32.xlu0 %v386, 108
    %v388 = vpop.permute.xlu0 %387
    %vm389 = vcmask 917344
    %390 = vst.msk [vmem:[#allocation0] ss:$8 sm:$0xf] %vm389, %v388
    %391 = vst.msk [vmem:[#allocation0] ss:$8 sm:$0xf0] %vm389, %v388
    %s392 = scalar_lea.vmem %s0, 283
    %v393 = vld [vmem:[%s392] sm:$0x1]
    %s394 = scalar_lea.vmem %s0, 314
    %v395 = vld [vmem:[%s394] sm:$0x2]
    %vm396 = vcmask 1041409
    %v397 = vsel %vm396, %v395, %v393
    %s398 = scalar_lea.vmem %s0, 345
    %v399 = vld [vmem:[%s398] sm:$0x4]
    %vm400 = vcmask 1042434
    %v401 = vsel %vm400, %v399, %v397
    %s402 = scalar_lea.vmem %s0, 376
    %v403 = vld [vmem:[%s402] sm:$0x8]
    %vm404 = vcmask 1043459
    %v405 = vsel %vm404, %v403, %v401
    %s406 = scalar_lea.vmem %s0, 407
    %v407 = vld [vmem:[%s406] sm:$0x10]
    %vm408 = vcmask 1044484
    %v409 = vsel %vm408, %v407, %v405
    %s410 = scalar_lea.vmem %s0, 438
    %v411 = vld [vmem:[%s410] sm:$0x20]
    %vm412 = vcmask 1045509
    %v413 = vsel %vm412, %v411, %v409
    %s414 = scalar_lea.vmem %s0, 469
    %v415 = vld [vmem:[%s414] sm:$0x40]
    %vm416 = vcmask 1046534
    %v417 = vsel %vm416, %v415, %v413
    %s418 = scalar_lea.vmem %s0, 500
    %v419 = vld [vmem:[%s418] sm:$0x80]
    %vm420 = vcmask 1047559
    %v421 = vsel %vm420, %v419, %v417
    %422 = vrot.lane.b32.xlu0 %v421, 108
    %v423 = vpop.permute.xlu0 %422
    %vm424 = vcmask 917344
    %s425 = scalar_lea.vmem [#allocation0], 64
    %426 = vst.msk [vmem:[%s425] ss:$8 sm:$0xf] %vm424, %v423
    %s427 = scalar_lea.vmem [#allocation0], 64
    %428 = vst.msk [vmem:[%s427] ss:$8 sm:$0xf0] %vm424, %v423
    %s429 = scalar_lea.vmem %s0, 26
    %v430 = vld [vmem:[%s429] sm:$0x1]
    %s431 = scalar_lea.vmem %s0, 57
    %v432 = vld [vmem:[%s431] sm:$0x2]
    %vm433 = vcmask 1041409
    %v434 = vsel %vm433, %v432, %v430
    %s435 = scalar_lea.vmem %s0, 88
    %v436 = vld [vmem:[%s435] sm:$0x4]
    %vm437 = vcmask 1042434
    %v438 = vsel %vm437, %v436, %v434
    %s439 = scalar_lea.vmem %s0, 119
    %v440 = vld [vmem:[%s439] sm:$0x8]
    %vm441 = vcmask 1043459
    %v442 = vsel %vm441, %v440, %v438
    %s443 = scalar_lea.vmem %s0, 150
    %v444 = vld [vmem:[%s443] sm:$0x10]
    %vm445 = vcmask 1044484
    %v446 = vsel %vm445, %v444, %v442
    %s447 = scalar_lea.vmem %s0, 181
    %v448 = vld [vmem:[%s447] sm:$0x20]
    %vm449 = vcmask 1045509
    %v450 = vsel %vm449, %v448, %v446
    %s451 = scalar_lea.vmem %s0, 212
    %v452 = vld [vmem:[%s451] sm:$0x40]
    %vm453 = vcmask 1046534
    %v454 = vsel %vm453, %v452, %v450
    %s455 = scalar_lea.vmem %s0, 243
    %v456 = vld [vmem:[%s455] sm:$0x80]
    %vm457 = vcmask 1047559
    %v458 = vsel %vm457, %v456, %v454
    %459 = vrot.lane.b32.xlu0 %v458, 104
    %v460 = vpop.permute.xlu0 %459
    %vm461 = vcmask 884544
    %462 = vst.msk [vmem:[#allocation0] ss:$8 sm:$0xf] %vm461, %v460
    %463 = vst.msk [vmem:[#allocation0] ss:$8 sm:$0xf0] %vm461, %v460
    %s464 = scalar_lea.vmem %s0, 282
    %v465 = vld [vmem:[%s464] sm:$0x1]
    %s466 = scalar_lea.vmem %s0, 313
    %v467 = vld [vmem:[%s466] sm:$0x2]
    %vm468 = vcmask 1041409
    %v469 = vsel %vm468, %v467, %v465
    %s470 = scalar_lea.vmem %s0, 344
    %v471 = vld [vmem:[%s470] sm:$0x4]
    %vm472 = vcmask 1042434
    %v473 = vsel %vm472, %v471, %v469
    %s474 = scalar_lea.vmem %s0, 375
    %v475 = vld [vmem:[%s474] sm:$0x8]
    %vm476 = vcmask 1043459
    %v477 = vsel %vm476, %v475, %v473
    %s478 = scalar_lea.vmem %s0, 406
    %v479 = vld [vmem:[%s478] sm:$0x10]
    %vm480 = vcmask 1044484
    %v481 = vsel %vm480, %v479, %v477
    %s482 = scalar_lea.vmem %s0, 437
    %v483 = vld [vmem:[%s482] sm:$0x20]
    %vm484 = vcmask 1045509
    %v485 = vsel %vm484, %v483, %v481
    %s486 = scalar_lea.vmem %s0, 468
    %v487 = vld [vmem:[%s486] sm:$0x40]
    %vm488 = vcmask 1046534
    %v489 = vsel %vm488, %v487, %v485
    %s490 = scalar_lea.vmem %s0, 499
    %v491 = vld [vmem:[%s490] sm:$0x80]
    %vm492 = vcmask 1047559
    %v493 = vsel %vm492, %v491, %v489
    %494 = vrot.lane.b32.xlu0 %v493, 104
    %v495 = vpop.permute.xlu0 %494
    %vm496 = vcmask 884544
    %s497 = scalar_lea.vmem [#allocation0], 64
    %498 = vst.msk [vmem:[%s497] ss:$8 sm:$0xf] %vm496, %v495
    %s499 = scalar_lea.vmem [#allocation0], 64
    %500 = vst.msk [vmem:[%s499] ss:$8 sm:$0xf0] %vm496, %v495
    %s501 = scalar_lea.vmem %s0, 25
    %v502 = vld [vmem:[%s501] sm:$0x1]
    %s503 = scalar_lea.vmem %s0, 56
    %v504 = vld [vmem:[%s503] sm:$0x2]
    %vm505 = vcmask 1041409
    %v506 = vsel %vm505, %v504, %v502
    %s507 = scalar_lea.vmem %s0, 87
    %v508 = vld [vmem:[%s507] sm:$0x4]
    %vm509 = vcmask 1042434
    %v510 = vsel %vm509, %v508, %v506
    %s511 = scalar_lea.vmem %s0, 118
    %v512 = vld [vmem:[%s511] sm:$0x8]
    %vm513 = vcmask 1043459
    %v514 = vsel %vm513, %v512, %v510
    %s515 = scalar_lea.vmem %s0, 149
    %v516 = vld [vmem:[%s515] sm:$0x10]
    %vm517 = vcmask 1044484
    %v518 = vsel %vm517, %v516, %v514
    %s519 = scalar_lea.vmem %s0, 180
    %v520 = vld [vmem:[%s519] sm:$0x20]
    %vm521 = vcmask 1045509
    %v522 = vsel %vm521, %v520, %v518
    %s523 = scalar_lea.vmem %s0, 211
    %v524 = vld [vmem:[%s523] sm:$0x40]
    %vm525 = vcmask 1046534
    %v526 = vsel %vm525, %v524, %v522
    %s527 = scalar_lea.vmem %s0, 242
    %v528 = vld [vmem:[%s527] sm:$0x80]
    %vm529 = vcmask 1047559
    %v530 = vsel %vm529, %v528, %v526
    %531 = vrot.lane.b32.xlu0 %v530, 100
    %v532 = vpop.permute.xlu0 %531
    %vm533 = vcmask 851744
    %534 = vst.msk [vmem:[#allocation0] ss:$8 sm:$0xf] %vm533, %v532
    %535 = vst.msk [vmem:[#allocation0] ss:$8 sm:$0xf0] %vm533, %v532
    %s536 = scalar_lea.vmem %s0, 281
    %v537 = vld [vmem:[%s536] sm:$0x1]
    %s538 = scalar_lea.vmem %s0, 312
    %v539 = vld [vmem:[%s538] sm:$0x2]
    %vm540 = vcmask 1041409
    %v541 = vsel %vm540, %v539, %v537
    %s542 = scalar_lea.vmem %s0, 343
    %v543 = vld [vmem:[%s542] sm:$0x4]
    %vm544 = vcmask 1042434
    %v545 = vsel %vm544, %v543, %v541
    %s546 = scalar_lea.vmem %s0, 374
    %v547 = vld [vmem:[%s546] sm:$0x8]
    %vm548 = vcmask 1043459
    %v549 = vsel %vm548, %v547, %v545
    %s550 = scalar_lea.vmem %s0, 405
    %v551 = vld [vmem:[%s550] sm:$0x10]
    %vm552 = vcmask 1044484
    %v553 = vsel %vm552, %v551, %v549
    %s554 = scalar_lea.vmem %s0, 436
    %v555 = vld [vmem:[%s554] sm:$0x20]
    %vm556 = vcmask 1045509
    %v557 = vsel %vm556, %v555, %v553
    %s558 = scalar_lea.vmem %s0, 467
    %v559 = vld [vmem:[%s558] sm:$0x40]
    %vm560 = vcmask 1046534
    %v561 = vsel %vm560, %v559, %v557
    %s562 = scalar_lea.vmem %s0, 498
    %v563 = vld [vmem:[%s562] sm:$0x80]
    %vm564 = vcmask 1047559
    %v565 = vsel %vm564, %v563, %v561
    %566 = vrot.lane.b32.xlu0 %v565, 100
    %v567 = vpop.permute.xlu0 %566
    %vm568 = vcmask 851744
    %s569 = scalar_lea.vmem [#allocation0], 64
    %570 = vst.msk [vmem:[%s569] ss:$8 sm:$0xf] %vm568, %v567
    %s571 = scalar_lea.vmem [#allocation0], 64
    %572 = vst.msk [vmem:[%s571] ss:$8 sm:$0xf0] %vm568, %v567
    %s573 = scalar_lea.vmem %s0, 24
    %v574 = vld [vmem:[%s573] sm:$0x1]
    %s575 = scalar_lea.vmem %s0, 55
    %v576 = vld [vmem:[%s575] sm:$0x2]
    %vm577 = vcmask 1041409
    %v578 = vsel %vm577, %v576, %v574
    %s579 = scalar_lea.vmem %s0, 86
    %v580 = vld [vmem:[%s579] sm:$0x4]
    %vm581 = vcmask 1042434
    %v582 = vsel %vm581, %v580, %v578
    %s583 = scalar_lea.vmem %s0, 117
    %v584 = vld [vmem:[%s583] sm:$0x8]
    %vm585 = vcmask 1043459
    %v586 = vsel %vm585, %v584, %v582
    %s587 = scalar_lea.vmem %s0, 148
    %v588 = vld [vmem:[%s587] sm:$0x10]
    %vm589 = vcmask 1044484
    %v590 = vsel %vm589, %v588, %v586
    %s591 = scalar_lea.vmem %s0, 179
    %v592 = vld [vmem:[%s591] sm:$0x20]
    %vm593 = vcmask 1045509
    %v594 = vsel %vm593, %v592, %v590
    %s595 = scalar_lea.vmem %s0, 210
    %v596 = vld [vmem:[%s595] sm:$0x40]
    %vm597 = vcmask 1046534
    %v598 = vsel %vm597, %v596, %v594
    %s599 = scalar_lea.vmem %s0, 241
    %v600 = vld [vmem:[%s599] sm:$0x80]
    %vm601 = vcmask 1047559
    %v602 = vsel %vm601, %v600, %v598
    %603 = vrot.lane.b32.xlu0 %v602, 96
    %v604 = vpop.permute.xlu0 %603
    %vm605 = vcmask 818944
    %606 = vst.msk [vmem:[#allocation0] ss:$8 sm:$0xf] %vm605, %v604
    %607 = vst.msk [vmem:[#allocation0] ss:$8 sm:$0xf0] %vm605, %v604
    %s608 = scalar_lea.vmem %s0, 280
    %v609 = vld [vmem:[%s608] sm:$0x1]
    %s610 = scalar_lea.vmem %s0, 311
    %v611 = vld [vmem:[%s610] sm:$0x2]
    %vm612 = vcmask 1041409
    %v613 = vsel %vm612, %v611, %v609
    %s614 = scalar_lea.vmem %s0, 342
    %v615 = vld [vmem:[%s614] sm:$0x4]
    %vm616 = vcmask 1042434
    %v617 = vsel %vm616, %v615, %v613
    %s618 = scalar_lea.vmem %s0, 373
    %v619 = vld [vmem:[%s618] sm:$0x8]
    %vm620 = vcmask 1043459
    %v621 = vsel %vm620, %v619, %v617
    %s622 = scalar_lea.vmem %s0, 404
    %v623 = vld [vmem:[%s622] sm:$0x10]
    %vm624 = vcmask 1044484
    %v625 = vsel %vm624, %v623, %v621
    %s626 = scalar_lea.vmem %s0, 435
    %v627 = vld [vmem:[%s626] sm:$0x20]
    %vm628 = vcmask 1045509
    %v629 = vsel %vm628, %v627, %v625
    %s630 = scalar_lea.vmem %s0, 466
    %v631 = vld [vmem:[%s630] sm:$0x40]
    %vm632 = vcmask 1046534
    %v633 = vsel %vm632, %v631, %v629
    %s634 = scalar_lea.vmem %s0, 497
    %v635 = vld [vmem:[%s634] sm:$0x80]
    %vm636 = vcmask 1047559
    %v637 = vsel %vm636, %v635, %v633
    %638 = vrot.lane.b32.xlu0 %v637, 96
    %v639 = vpop.permute.xlu0 %638
    %vm640 = vcmask 818944
    %s641 = scalar_lea.vmem [#allocation0], 64
    %642 = vst.msk [vmem:[%s641] ss:$8 sm:$0xf] %vm640, %v639
    %s643 = scalar_lea.vmem [#allocation0], 64
    %644 = vst.msk [vmem:[%s643] ss:$8 sm:$0xf0] %vm640, %v639
    %s645 = scalar_lea.vmem %s0, 23
    %v646 = vld [vmem:[%s645] sm:$0x1]
    %s647 = scalar_lea.vmem %s0, 54
    %v648 = vld [vmem:[%s647] sm:$0x2]
    %vm649 = vcmask 1041409
    %v650 = vsel %vm649, %v648, %v646
    %s651 = scalar_lea.vmem %s0, 85
    %v652 = vld [vmem:[%s651] sm:$0x4]
    %vm653 = vcmask 1042434
    %v654 = vsel %vm653, %v652, %v650
    %s655 = scalar_lea.vmem %s0, 116
    %v656 = vld [vmem:[%s655] sm:$0x8]
    %vm657 = vcmask 1043459
    %v658 = vsel %vm657, %v656, %v654
    %s659 = scalar_lea.vmem %s0, 147
    %v660 = vld [vmem:[%s659] sm:$0x10]
    %vm661 = vcmask 1044484
    %v662 = vsel %vm661, %v660, %v658
    %s663 = scalar_lea.vmem %s0, 178
    %v664 = vld [vmem:[%s663] sm:$0x20]
    %vm665 = vcmask 1045509
    %v666 = vsel %vm665, %v664, %v662
    %s667 = scalar_lea.vmem %s0, 209
    %v668 = vld [vmem:[%s667] sm:$0x40]
    %vm669 = vcmask 1046534
    %v670 = vsel %vm669, %v668, %v666
    %s671 = scalar_lea.vmem %s0, 240
    %v672 = vld [vmem:[%s671] sm:$0x80]
    %vm673 = vcmask 1047559
    %v674 = vsel %vm673, %v672, %v670
    %675 = vrot.lane.b32.xlu0 %v674, 92
    %v676 = vpop.permute.xlu0 %675
    %vm677 = vcmask 786144
    %678 = vst.msk [vmem:[#allocation0] ss:$8 sm:$0xf] %vm677, %v676
    %679 = vst.msk [vmem:[#allocation0] ss:$8 sm:$0xf0] %vm677, %v676
    %s680 = scalar_lea.vmem %s0, 279
    %v681 = vld [vmem:[%s680] sm:$0x1]
    %s682 = scalar_lea.vmem %s0, 310
    %v683 = vld [vmem:[%s682] sm:$0x2]
    %vm684 = vcmask 1041409
    %v685 = vsel %vm684, %v683, %v681
    %s686 = scalar_lea.vmem %s0, 341
    %v687 = vld [vmem:[%s686] sm:$0x4]
    %vm688 = vcmask 1042434
    %v689 = vsel %vm688, %v687, %v685
    %s690 = scalar_lea.vmem %s0, 372
    %v691 = vld [vmem:[%s690] sm:$0x8]
    %vm692 = vcmask 1043459
    %v693 = vsel %vm692, %v691, %v689
    %s694 = scalar_lea.vmem %s0, 403
    %v695 = vld [vmem:[%s694] sm:$0x10]
    %vm696 = vcmask 1044484
    %v697 = vsel %vm696, %v695, %v693
    %s698 = scalar_lea.vmem %s0, 434
    %v699 = vld [vmem:[%s698] sm:$0x20]
    %vm700 = vcmask 1045509
    %v701 = vsel %vm700, %v699, %v697
    %s702 = scalar_lea.vmem %s0, 465
    %v703 = vld [vmem:[%s702] sm:$0x40]
    %vm704 = vcmask 1046534
    %v705 = vsel %vm704, %v703, %v701
    %s706 = scalar_lea.vmem %s0, 496
    %v707 = vld [vmem:[%s706] sm:$0x80]
    %vm708 = vcmask 1047559
    %v709 = vsel %vm708, %v707, %v705
    %710 = vrot.lane.b32.xlu0 %v709, 92
    %v711 = vpop.permute.xlu0 %710
    %vm712 = vcmask 786144
    %s713 = scalar_lea.vmem [#allocation0], 64
    %714 = vst.msk [vmem:[%s713] ss:$8 sm:$0xf] %vm712, %v711
    %s715 = scalar_lea.vmem [#allocation0], 64
    %716 = vst.msk [vmem:[%s715] ss:$8 sm:$0xf0] %vm712, %v711
    %s717 = scalar_lea.vmem %s0, 22
    %v718 = vld [vmem:[%s717] sm:$0x1]
    %s719 = scalar_lea.vmem %s0, 53
    %v720 = vld [vmem:[%s719] sm:$0x2]
    %vm721 = vcmask 1041409
    %v722 = vsel %vm721, %v720, %v718
    %s723 = scalar_lea.vmem %s0, 84
    %v724 = vld [vmem:[%s723] sm:$0x4]
    %vm725 = vcmask 1042434
    %v726 = vsel %vm725, %v724, %v722
    %s727 = scalar_lea.vmem %s0, 115
    %v728 = vld [vmem:[%s727] sm:$0x8]
    %vm729 = vcmask 1043459
    %v730 = vsel %vm729, %v728, %v726
    %s731 = scalar_lea.vmem %s0, 146
    %v732 = vld [vmem:[%s731] sm:$0x10]
    %vm733 = vcmask 1044484
    %v734 = vsel %vm733, %v732, %v730
    %s735 = scalar_lea.vmem %s0, 177
    %v736 = vld [vmem:[%s735] sm:$0x20]
    %vm737 = vcmask 1045509
    %v738 = vsel %vm737, %v736, %v734
    %s739 = scalar_lea.vmem %s0, 208
    %v740 = vld [vmem:[%s739] sm:$0x40]
    %vm741 = vcmask 1046534
    %v742 = vsel %vm741, %v740, %v738
    %s743 = scalar_lea.vmem %s0, 239
    %v744 = vld [vmem:[%s743] sm:$0x80]
    %vm745 = vcmask 1047559
    %v746 = vsel %vm745, %v744, %v742
    %747 = vrot.lane.b32.xlu0 %v746, 88
    %v748 = vpop.permute.xlu0 %747
    %vm749 = vcmask 753344
    %750 = vst.msk [vmem:[#allocation0] ss:$8 sm:$0xf] %vm749, %v748
    %751 = vst.msk [vmem:[#allocation0] ss:$8 sm:$0xf0] %vm749, %v748
    %s752 = scalar_lea.vmem %s0, 278
    %v753 = vld [vmem:[%s752] sm:$0x1]
    %s754 = scalar_lea.vmem %s0, 309
    %v755 = vld [vmem:[%s754] sm:$0x2]
    %vm756 = vcmask 1041409
    %v757 = vsel %vm756, %v755, %v753
    %s758 = scalar_lea.vmem %s0, 340
    %v759 = vld [vmem:[%s758] sm:$0x4]
    %vm760 = vcmask 1042434
    %v761 = vsel %vm760, %v759, %v757
    %s762 = scalar_lea.vmem %s0, 371
    %v763 = vld [vmem:[%s762] sm:$0x8]
    %vm764 = vcmask 1043459
    %v765 = vsel %vm764, %v763, %v761
    %s766 = scalar_lea.vmem %s0, 402
    %v767 = vld [vmem:[%s766] sm:$0x10]
    %vm768 = vcmask 1044484
    %v769 = vsel %vm768, %v767, %v765
    %s770 = scalar_lea.vmem %s0, 433
    %v771 = vld [vmem:[%s770] sm:$0x20]
    %vm772 = vcmask 1045509
    %v773 = vsel %vm772, %v771, %v769
    %s774 = scalar_lea.vmem %s0, 464
    %v775 = vld [vmem:[%s774] sm:$0x40]
    %vm776 = vcmask 1046534
    %v777 = vsel %vm776, %v775, %v773
    %s778 = scalar_lea.vmem %s0, 495
    %v779 = vld [vmem:[%s778] sm:$0x80]
    %vm780 = vcmask 1047559
    %v781 = vsel %vm780, %v779, %v777
    %782 = vrot.lane.b32.xlu0 %v781, 88
    %v783 = vpop.permute.xlu0 %782
    %vm784 = vcmask 753344
    %s785 = scalar_lea.vmem [#allocation0], 64
    %786 = vst.msk [vmem:[%s785] ss:$8 sm:$0xf] %vm784, %v783
    %s787 = scalar_lea.vmem [#allocation0], 64
    %788 = vst.msk [vmem:[%s787] ss:$8 sm:$0xf0] %vm784, %v783
    %s789 = scalar_lea.vmem %s0, 21
    %v790 = vld [vmem:[%s789] sm:$0x1]
    %s791 = scalar_lea.vmem %s0, 52
    %v792 = vld [vmem:[%s791] sm:$0x2]
    %vm793 = vcmask 1041409
    %v794 = vsel %vm793, %v792, %v790
    %s795 = scalar_lea.vmem %s0, 83
    %v796 = vld [vmem:[%s795] sm:$0x4]
    %vm797 = vcmask 1042434
    %v798 = vsel %vm797, %v796, %v794
    %s799 = scalar_lea.vmem %s0, 114
    %v800 = vld [vmem:[%s799] sm:$0x8]
    %vm801 = vcmask 1043459
    %v802 = vsel %vm801, %v800, %v798
    %s803 = scalar_lea.vmem %s0, 145
    %v804 = vld [vmem:[%s803] sm:$0x10]
    %vm805 = vcmask 1044484
    %v806 = vsel %vm805, %v804, %v802
    %s807 = scalar_lea.vmem %s0, 176
    %v808 = vld [vmem:[%s807] sm:$0x20]
    %vm809 = vcmask 1045509
    %v810 = vsel %vm809, %v808, %v806
    %s811 = scalar_lea.vmem %s0, 207
    %v812 = vld [vmem:[%s811] sm:$0x40]
    %vm813 = vcmask 1046534
    %v814 = vsel %vm813, %v812, %v810
    %s815 = scalar_lea.vmem %s0, 238
    %v816 = vld [vmem:[%s815] sm:$0x80]
    %vm817 = vcmask 1047559
    %v818 = vsel %vm817, %v816, %v814
    %819 = vrot.lane.b32.xlu0 %v818, 84
    %v820 = vpop.permute.xlu0 %819
    %vm821 = vcmask 720544
    %822 = vst.msk [vmem:[#allocation0] ss:$8 sm:$0xf] %vm821, %v820
    %823 = vst.msk [vmem:[#allocation0] ss:$8 sm:$0xf0] %vm821, %v820
    %s824 = scalar_lea.vmem %s0, 277
    %v825 = vld [vmem:[%s824] sm:$0x1]
    %s826 = scalar_lea.vmem %s0, 308
    %v827 = vld [vmem:[%s826] sm:$0x2]
    %vm828 = vcmask 1041409
    %v829 = vsel %vm828, %v827, %v825
    %s830 = scalar_lea.vmem %s0, 339
    %v831 = vld [vmem:[%s830] sm:$0x4]
    %vm832 = vcmask 1042434
    %v833 = vsel %vm832, %v831, %v829
    %s834 = scalar_lea.vmem %s0, 370
    %v835 = vld [vmem:[%s834] sm:$0x8]
    %vm836 = vcmask 1043459
    %v837 = vsel %vm836, %v835, %v833
    %s838 = scalar_lea.vmem %s0, 401
    %v839 = vld [vmem:[%s838] sm:$0x10]
    %vm840 = vcmask 1044484
    %v841 = vsel %vm840, %v839, %v837
    %s842 = scalar_lea.vmem %s0, 432
    %v843 = vld [vmem:[%s842] sm:$0x20]
    %vm844 = vcmask 1045509
    %v845 = vsel %vm844, %v843, %v841
    %s846 = scalar_lea.vmem %s0, 463
    %v847 = vld [vmem:[%s846] sm:$0x40]
    %vm848 = vcmask 1046534
    %v849 = vsel %vm848, %v847, %v845
    %s850 = scalar_lea.vmem %s0, 494
    %v851 = vld [vmem:[%s850] sm:$0x80]
    %vm852 = vcmask 1047559
    %v853 = vsel %vm852, %v851, %v849
    %854 = vrot.lane.b32.xlu0 %v853, 84
    %v855 = vpop.permute.xlu0 %854
    %vm856 = vcmask 720544
    %s857 = scalar_lea.vmem [#allocation0], 64
    %858 = vst.msk [vmem:[%s857] ss:$8 sm:$0xf] %vm856, %v855
    %s859 = scalar_lea.vmem [#allocation0], 64
    %860 = vst.msk [vmem:[%s859] ss:$8 sm:$0xf0] %vm856, %v855
    %s861 = scalar_lea.vmem %s0, 20
    %v862 = vld [vmem:[%s861] sm:$0x1]
    %s863 = scalar_lea.vmem %s0, 51
    %v864 = vld [vmem:[%s863] sm:$0x2]
    %vm865 = vcmask 1041409
    %v866 = vsel %vm865, %v864, %v862
    %s867 = scalar_lea.vmem %s0, 82
    %v868 = vld [vmem:[%s867] sm:$0x4]
    %vm869 = vcmask 1042434
    %v870 = vsel %vm869, %v868, %v866
    %s871 = scalar_lea.vmem %s0, 113
    %v872 = vld [vmem:[%s871] sm:$0x8]
    %vm873 = vcmask 1043459
    %v874 = vsel %vm873, %v872, %v870
    %s875 = scalar_lea.vmem %s0, 144
    %v876 = vld [vmem:[%s875] sm:$0x10]
    %vm877 = vcmask 1044484
    %v878 = vsel %vm877, %v876, %v874
    %s879 = scalar_lea.vmem %s0, 175
    %v880 = vld [vmem:[%s879] sm:$0x20]
    %vm881 = vcmask 1045509
    %v882 = vsel %vm881, %v880, %v878
    %s883 = scalar_lea.vmem %s0, 206
    %v884 = vld [vmem:[%s883] sm:$0x40]
    %vm885 = vcmask 1046534
    %v886 = vsel %vm885, %v884, %v882
    %s887 = scalar_lea.vmem %s0, 237
    %v888 = vld [vmem:[%s887] sm:$0x80]
    %vm889 = vcmask 1047559
    %v890 = vsel %vm889, %v888, %v886
    %891 = vrot.lane.b32.xlu0 %v890, 80
    %v892 = vpop.permute.xlu0 %891
    %vm893 = vcmask 687744
    %894 = vst.msk [vmem:[#allocation0] ss:$8 sm:$0xf] %vm893, %v892
    %895 = vst.msk [vmem:[#allocation0] ss:$8 sm:$0xf0] %vm893, %v892
    %s896 = scalar_lea.vmem %s0, 276
    %v897 = vld [vmem:[%s896] sm:$0x1]
    %s898 = scalar_lea.vmem %s0, 307
    %v899 = vld [vmem:[%s898] sm:$0x2]
    %vm900 = vcmask 1041409
    %v901 = vsel %vm900, %v899, %v897
    %s902 = scalar_lea.vmem %s0, 338
    %v903 = vld [vmem:[%s902] sm:$0x4]
    %vm904 = vcmask 1042434
    %v905 = vsel %vm904, %v903, %v901
    %s906 = scalar_lea.vmem %s0, 369
    %v907 = vld [vmem:[%s906] sm:$0x8]
    %vm908 = vcmask 1043459
    %v909 = vsel %vm908, %v907, %v905
    %s910 = scalar_lea.vmem %s0, 400
    %v911 = vld [vmem:[%s910] sm:$0x10]
    %vm912 = vcmask 1044484
    %v913 = vsel %vm912, %v911, %v909
    %s914 = scalar_lea.vmem %s0, 431
    %v915 = vld [vmem:[%s914] sm:$0x20]
    %vm916 = vcmask 1045509
    %v917 = vsel %vm916, %v915, %v913
    %s918 = scalar_lea.vmem %s0, 462
    %v919 = vld [vmem:[%s918] sm:$0x40]
    %vm920 = vcmask 1046534
    %v921 = vsel %vm920, %v919, %v917
    %s922 = scalar_lea.vmem %s0, 493
    %v923 = vld [vmem:[%s922] sm:$0x80]
    %vm924 = vcmask 1047559
    %v925 = vsel %vm924, %v923, %v921
    %926 = vrot.lane.b32.xlu0 %v925, 80
    %v927 = vpop.permute.xlu0 %926
    %vm928 = vcmask 687744
    %s929 = scalar_lea.vmem [#allocation0], 64
    %930 = vst.msk [vmem:[%s929] ss:$8 sm:$0xf] %vm928, %v927
    %s931 = scalar_lea.vmem [#allocation0], 64
    %932 = vst.msk [vmem:[%s931] ss:$8 sm:$0xf0] %vm928, %v927
    %s933 = scalar_lea.vmem %s0, 19
    %v934 = vld [vmem:[%s933] sm:$0x1]
    %s935 = scalar_lea.vmem %s0, 50
    %v936 = vld [vmem:[%s935] sm:$0x2]
    %vm937 = vcmask 1041409
    %v938 = vsel %vm937, %v936, %v934
    %s939 = scalar_lea.vmem %s0, 81
    %v940 = vld [vmem:[%s939] sm:$0x4]
    %vm941 = vcmask 1042434
    %v942 = vsel %vm941, %v940, %v938
    %s943 = scalar_lea.vmem %s0, 112
    %v944 = vld [vmem:[%s943] sm:$0x8]
    %vm945 = vcmask 1043459
    %v946 = vsel %vm945, %v944, %v942
    %s947 = scalar_lea.vmem %s0, 143
    %v948 = vld [vmem:[%s947] sm:$0x10]
    %vm949 = vcmask 1044484
    %v950 = vsel %vm949, %v948, %v946
    %s951 = scalar_lea.vmem %s0, 174
    %v952 = vld [vmem:[%s951] sm:$0x20]
    %vm953 = vcmask 1045509
    %v954 = vsel %vm953, %v952, %v950
    %s955 = scalar_lea.vmem %s0, 205
    %v956 = vld [vmem:[%s955] sm:$0x40]
    %vm957 = vcmask 1046534
    %v958 = vsel %vm957, %v956, %v954
    %s959 = scalar_lea.vmem %s0, 236
    %v960 = vld [vmem:[%s959] sm:$0x80]
    %vm961 = vcmask 1047559
    %v962 = vsel %vm961, %v960, %v958
    %963 = vrot.lane.b32.xlu0 %v962, 76
    %v964 = vpop.permute.xlu0 %963
    %vm965 = vcmask 654944
    %966 = vst.msk [vmem:[#allocation0] ss:$8 sm:$0xf] %vm965, %v964
    %967 = vst.msk [vmem:[#allocation0] ss:$8 sm:$0xf0] %vm965, %v964
    %s968 = scalar_lea.vmem %s0, 275
    %v969 = vld [vmem:[%s968] sm:$0x1]
    %s970 = scalar_lea.vmem %s0, 306
    %v971 = vld [vmem:[%s970] sm:$0x2]
    %vm972 = vcmask 1041409
    %v973 = vsel %vm972, %v971, %v969
    %s974 = scalar_lea.vmem %s0, 337
    %v975 = vld [vmem:[%s974] sm:$0x4]
    %vm976 = vcmask 1042434
    %v977 = vsel %vm976, %v975, %v973
    %s978 = scalar_lea.vmem %s0, 368
    %v979 = vld [vmem:[%s978] sm:$0x8]
    %vm980 = vcmask 1043459
    %v981 = vsel %vm980, %v979, %v977
    %s982 = scalar_lea.vmem %s0, 399
    %v983 = vld [vmem:[%s982] sm:$0x10]
    %vm984 = vcmask 1044484
    %v985 = vsel %vm984, %v983, %v981
    %s986 = scalar_lea.vmem %s0, 430
    %v987 = vld [vmem:[%s986] sm:$0x20]
    %vm988 = vcmask 1045509
    %v989 = vsel %vm988, %v987, %v985
    %s990 = scalar_lea.vmem %s0, 461
    %v991 = vld [vmem:[%s990] sm:$0x40]
    %vm992 = vcmask 1046534
    %v993 = vsel %vm992, %v991, %v989
    %s994 = scalar_lea.vmem %s0, 492
    %v995 = vld [vmem:[%s994] sm:$0x80]
    %vm996 = vcmask 1047559
    %v997 = vsel %vm996, %v995, %v993
    %998 = vrot.lane.b32.xlu0 %v997, 76
    %v999 = vpop.permute.xlu0 %998
    %vm1000 = vcmask 654944
    %s1001 = scalar_lea.vmem [#allocation0], 64
    %1002 = vst.msk [vmem:[%s1001] ss:$8 sm:$0xf] %vm1000, %v999
    %s1003 = scalar_lea.vmem [#allocation0], 64
    %1004 = vst.msk [vmem:[%s1003] ss:$8 sm:$0xf0] %vm1000, %v999
    %s1005 = scalar_lea.vmem %s0, 18
    %v1006 = vld [vmem:[%s1005] sm:$0x1]
    %s1007 = scalar_lea.vmem %s0, 49
    %v1008 = vld [vmem:[%s1007] sm:$0x2]
    %vm1009 = vcmask 1041409
    %v1010 = vsel %vm1009, %v1008, %v1006
    %s1011 = scalar_lea.vmem %s0, 80
    %v1012 = vld [vmem:[%s1011] sm:$0x4]
    %vm1013 = vcmask 1042434
    %v1014 = vsel %vm1013, %v1012, %v1010
    %s1015 = scalar_lea.vmem %s0, 111
    %v1016 = vld [vmem:[%s1015] sm:$0x8]
    %vm1017 = vcmask 1043459
    %v1018 = vsel %vm1017, %v1016, %v1014
    %s1019 = scalar_lea.vmem %s0, 142
    %v1020 = vld [vmem:[%s1019] sm:$0x10]
    %vm1021 = vcmask 1044484
    %v1022 = vsel %vm1021, %v1020, %v1018
    %s1023 = scalar_lea.vmem %s0, 173
    %v1024 = vld [vmem:[%s1023] sm:$0x20]
    %vm1025 = vcmask 1045509
    %v1026 = vsel %vm1025, %v1024, %v1022
    %s1027 = scalar_lea.vmem %s0, 204
    %v1028 = vld [vmem:[%s1027] sm:$0x40]
    %vm1029 = vcmask 1046534
    %v1030 = vsel %vm1029, %v1028, %v1026
    %s1031 = scalar_lea.vmem %s0, 235
    %v1032 = vld [vmem:[%s1031] sm:$0x80]
    %vm1033 = vcmask 1047559
    %v1034 = vsel %vm1033, %v1032, %v1030
    %1035 = vrot.lane.b32.xlu0 %v1034, 72
    %v1036 = vpop.permute.xlu0 %1035
    %vm1037 = vcmask 622144
    %1038 = vst.msk [vmem:[#allocation0] ss:$8 sm:$0xf] %vm1037, %v1036
    %1039 = vst.msk [vmem:[#allocation0] ss:$8 sm:$0xf0] %vm1037, %v1036
    %s1040 = scalar_lea.vmem %s0, 274
    %v1041 = vld [vmem:[%s1040] sm:$0x1]
    %s1042 = scalar_lea.vmem %s0, 305
    %v1043 = vld [vmem:[%s1042] sm:$0x2]
    %vm1044 = vcmask 1041409
    %v1045 = vsel %vm1044, %v1043, %v1041
    %s1046 = scalar_lea.vmem %s0, 336
    %v1047 = vld [vmem:[%s1046] sm:$0x4]
    %vm1048 = vcmask 1042434
    %v1049 = vsel %vm1048, %v1047, %v1045
    %s1050 = scalar_lea.vmem %s0, 367
    %v1051 = vld [vmem:[%s1050] sm:$0x8]
    %vm1052 = vcmask 1043459
    %v1053 = vsel %vm1052, %v1051, %v1049
    %s1054 = scalar_lea.vmem %s0, 398
    %v1055 = vld [vmem:[%s1054] sm:$0x10]
    %vm1056 = vcmask 1044484
    %v1057 = vsel %vm1056, %v1055, %v1053
    %s1058 = scalar_lea.vmem %s0, 429
    %v1059 = vld [vmem:[%s1058] sm:$0x20]
    %vm1060 = vcmask 1045509
    %v1061 = vsel %vm1060, %v1059, %v1057
    %s1062 = scalar_lea.vmem %s0, 460
    %v1063 = vld [vmem:[%s1062] sm:$0x40]
    %vm1064 = vcmask 1046534
    %v1065 = vsel %vm1064, %v1063, %v1061
    %s1066 = scalar_lea.vmem %s0, 491
    %v1067 = vld [vmem:[%s1066] sm:$0x80]
    %vm1068 = vcmask 1047559
    %v1069 = vsel %vm1068, %v1067, %v1065
    %1070 = vrot.lane.b32.xlu0 %v1069, 72
    %v1071 = vpop.permute.xlu0 %1070
    %vm1072 = vcmask 622144
    %s1073 = scalar_lea.vmem [#allocation0], 64
    %1074 = vst.msk [vmem:[%s1073] ss:$8 sm:$0xf] %vm1072, %v1071
    %s1075 = scalar_lea.vmem [#allocation0], 64
    %1076 = vst.msk [vmem:[%s1075] ss:$8 sm:$0xf0] %vm1072, %v1071
    %s1077 = scalar_lea.vmem %s0, 17
    %v1078 = vld [vmem:[%s1077] sm:$0x1]
    %s1079 = scalar_lea.vmem %s0, 48
    %v1080 = vld [vmem:[%s1079] sm:$0x2]
    %vm1081 = vcmask 1041409
    %v1082 = vsel %vm1081, %v1080, %v1078
    %s1083 = scalar_lea.vmem %s0, 79
    %v1084 = vld [vmem:[%s1083] sm:$0x4]
    %vm1085 = vcmask 1042434
    %v1086 = vsel %vm1085, %v1084, %v1082
    %s1087 = scalar_lea.vmem %s0, 110
    %v1088 = vld [vmem:[%s1087] sm:$0x8]
    %vm1089 = vcmask 1043459
    %v1090 = vsel %vm1089, %v1088, %v1086
    %s1091 = scalar_lea.vmem %s0, 141
    %v1092 = vld [vmem:[%s1091] sm:$0x10]
    %vm1093 = vcmask 1044484
    %v1094 = vsel %vm1093, %v1092, %v1090
    %s1095 = scalar_lea.vmem %s0, 172
    %v1096 = vld [vmem:[%s1095] sm:$0x20]
    %vm1097 = vcmask 1045509
    %v1098 = vsel %vm1097, %v1096, %v1094
    %s1099 = scalar_lea.vmem %s0, 203
    %v1100 = vld [vmem:[%s1099] sm:$0x40]
    %vm1101 = vcmask 1046534
    %v1102 = vsel %vm1101, %v1100, %v1098
    %s1103 = scalar_lea.vmem %s0, 234
    %v1104 = vld [vmem:[%s1103] sm:$0x80]
    %vm1105 = vcmask 1047559
    %v1106 = vsel %vm1105, %v1104, %v1102
    %1107 = vrot.lane.b32.xlu0 %v1106, 68
    %v1108 = vpop.permute.xlu0 %1107
    %vm1109 = vcmask 589344
    %1110 = vst.msk [vmem:[#allocation0] ss:$8 sm:$0xf] %vm1109, %v1108
    %1111 = vst.msk [vmem:[#allocation0] ss:$8 sm:$0xf0] %vm1109, %v1108
    %s1112 = scalar_lea.vmem %s0, 273
    %v1113 = vld [vmem:[%s1112] sm:$0x1]
    %s1114 = scalar_lea.vmem %s0, 304
    %v1115 = vld [vmem:[%s1114] sm:$0x2]
    %vm1116 = vcmask 1041409
    %v1117 = vsel %vm1116, %v1115, %v1113
    %s1118 = scalar_lea.vmem %s0, 335
    %v1119 = vld [vmem:[%s1118] sm:$0x4]
    %vm1120 = vcmask 1042434
    %v1121 = vsel %vm1120, %v1119, %v1117
    %s1122 = scalar_lea.vmem %s0, 366
    %v1123 = vld [vmem:[%s1122] sm:$0x8]
    %vm1124 = vcmask 1043459
    %v1125 = vsel %vm1124, %v1123, %v1121
    %s1126 = scalar_lea.vmem %s0, 397
    %v1127 = vld [vmem:[%s1126] sm:$0x10]
    %vm1128 = vcmask 1044484
    %v1129 = vsel %vm1128, %v1127, %v1125
    %s1130 = scalar_lea.vmem %s0, 428
    %v1131 = vld [vmem:[%s1130] sm:$0x20]
    %vm1132 = vcmask 1045509
    %v1133 = vsel %vm1132, %v1131, %v1129
    %s1134 = scalar_lea.vmem %s0, 459
    %v1135 = vld [vmem:[%s1134] sm:$0x40]
    %vm1136 = vcmask 1046534
    %v1137 = vsel %vm1136, %v1135, %v1133
    %s1138 = scalar_lea.vmem %s0, 490
    %v1139 = vld [vmem:[%s1138] sm:$0x80]
    %vm1140 = vcmask 1047559
    %v1141 = vsel %vm1140, %v1139, %v1137
    %1142 = vrot.lane.b32.xlu0 %v1141, 68
    %v1143 = vpop.permute.xlu0 %1142
    %vm1144 = vcmask 589344
    %s1145 = scalar_lea.vmem [#allocation0], 64
    %1146 = vst.msk [vmem:[%s1145] ss:$8 sm:$0xf] %vm1144, %v1143
    %s1147 = scalar_lea.vmem [#allocation0], 64
    %1148 = vst.msk [vmem:[%s1147] ss:$8 sm:$0xf0] %vm1144, %v1143
    %s1149 = scalar_lea.vmem %s0, 16
    %v1150 = vld [vmem:[%s1149] sm:$0x1]
    %s1151 = scalar_lea.vmem %s0, 47
    %v1152 = vld [vmem:[%s1151] sm:$0x2]
    %vm1153 = vcmask 1041409
    %v1154 = vsel %vm1153, %v1152, %v1150
    %s1155 = scalar_lea.vmem %s0, 78
    %v1156 = vld [vmem:[%s1155] sm:$0x4]
    %vm1157 = vcmask 1042434
    %v1158 = vsel %vm1157, %v1156, %v1154
    %s1159 = scalar_lea.vmem %s0, 109
    %v1160 = vld [vmem:[%s1159] sm:$0x8]
    %vm1161 = vcmask 1043459
    %v1162 = vsel %vm1161, %v1160, %v1158
    %s1163 = scalar_lea.vmem %s0, 140
    %v1164 = vld [vmem:[%s1163] sm:$0x10]
    %vm1165 = vcmask 1044484
    %v1166 = vsel %vm1165, %v1164, %v1162
    %s1167 = scalar_lea.vmem %s0, 171
    %v1168 = vld [vmem:[%s1167] sm:$0x20]
    %vm1169 = vcmask 1045509
    %v1170 = vsel %vm1169, %v1168, %v1166
    %s1171 = scalar_lea.vmem %s0, 202
    %v1172 = vld [vmem:[%s1171] sm:$0x40]
    %vm1173 = vcmask 1046534
    %v1174 = vsel %vm1173, %v1172, %v1170
    %s1175 = scalar_lea.vmem %s0, 233
    %v1176 = vld [vmem:[%s1175] sm:$0x80]
    %vm1177 = vcmask 1047559
    %v1178 = vsel %vm1177, %v1176, %v1174
    %1179 = vrot.lane.b32.xlu0 %v1178, 64
    %v1180 = vpop.permute.xlu0 %1179
    %vm1181 = vcmask 556544
    %1182 = vst.msk [vmem:[#allocation0] ss:$8 sm:$0xf] %vm1181, %v1180
    %1183 = vst.msk [vmem:[#allocation0] ss:$8 sm:$0xf0] %vm1181, %v1180
    %s1184 = scalar_lea.vmem %s0, 272
    %v1185 = vld [vmem:[%s1184] sm:$0x1]
    %s1186 = scalar_lea.vmem %s0, 303
    %v1187 = vld [vmem:[%s1186] sm:$0x2]
    %vm1188 = vcmask 1041409
    %v1189 = vsel %vm1188, %v1187, %v1185
    %s1190 = scalar_lea.vmem %s0, 334
    %v1191 = vld [vmem:[%s1190] sm:$0x4]
    %vm1192 = vcmask 1042434
    %v1193 = vsel %vm1192, %v1191, %v1189
    %s1194 = scalar_lea.vmem %s0, 365
    %v1195 = vld [vmem:[%s1194] sm:$0x8]
    %vm1196 = vcmask 1043459
    %v1197 = vsel %vm1196, %v1195, %v1193
    %s1198 = scalar_lea.vmem %s0, 396
    %v1199 = vld [vmem:[%s1198] sm:$0x10]
    %vm1200 = vcmask 1044484
    %v1201 = vsel %vm1200, %v1199, %v1197
    %s1202 = scalar_lea.vmem %s0, 427
    %v1203 = vld [vmem:[%s1202] sm:$0x20]
    %vm1204 = vcmask 1045509
    %v1205 = vsel %vm1204, %v1203, %v1201
    %s1206 = scalar_lea.vmem %s0, 458
    %v1207 = vld [vmem:[%s1206] sm:$0x40]
    %vm1208 = vcmask 1046534
    %v1209 = vsel %vm1208, %v1207, %v1205
    %s1210 = scalar_lea.vmem %s0, 489
    %v1211 = vld [vmem:[%s1210] sm:$0x80]
    %vm1212 = vcmask 1047559
    %v1213 = vsel %vm1212, %v1211, %v1209
    %1214 = vrot.lane.b32.xlu0 %v1213, 64
    %v1215 = vpop.permute.xlu0 %1214
    %vm1216 = vcmask 556544
    %s1217 = scalar_lea.vmem [#allocation0], 64
    %1218 = vst.msk [vmem:[%s1217] ss:$8 sm:$0xf] %vm1216, %v1215
    %s1219 = scalar_lea.vmem [#allocation0], 64
    %1220 = vst.msk [vmem:[%s1219] ss:$8 sm:$0xf0] %vm1216, %v1215
    %s1221 = scalar_lea.vmem %s0, 15
    %v1222 = vld [vmem:[%s1221] sm:$0x1]
    %s1223 = scalar_lea.vmem %s0, 46
    %v1224 = vld [vmem:[%s1223] sm:$0x2]
    %vm1225 = vcmask 1041409
    %v1226 = vsel %vm1225, %v1224, %v1222
    %s1227 = scalar_lea.vmem %s0, 77
    %v1228 = vld [vmem:[%s1227] sm:$0x4]
    %vm1229 = vcmask 1042434
    %v1230 = vsel %vm1229, %v1228, %v1226
    %s1231 = scalar_lea.vmem %s0, 108
    %v1232 = vld [vmem:[%s1231] sm:$0x8]
    %vm1233 = vcmask 1043459
    %v1234 = vsel %vm1233, %v1232, %v1230
    %s1235 = scalar_lea.vmem %s0, 139
    %v1236 = vld [vmem:[%s1235] sm:$0x10]
    %vm1237 = vcmask 1044484
    %v1238 = vsel %vm1237, %v1236, %v1234
    %s1239 = scalar_lea.vmem %s0, 170
    %v1240 = vld [vmem:[%s1239] sm:$0x20]
    %vm1241 = vcmask 1045509
    %v1242 = vsel %vm1241, %v1240, %v1238
    %s1243 = scalar_lea.vmem %s0, 201
    %v1244 = vld [vmem:[%s1243] sm:$0x40]
    %vm1245 = vcmask 1046534
    %v1246 = vsel %vm1245, %v1244, %v1242
    %s1247 = scalar_lea.vmem %s0, 232
    %v1248 = vld [vmem:[%s1247] sm:$0x80]
    %vm1249 = vcmask 1047559
    %v1250 = vsel %vm1249, %v1248, %v1246
    %1251 = vrot.lane.b32.xlu0 %v1250, 60
    %v1252 = vpop.permute.xlu0 %1251
    %vm1253 = vcmask 523744
    %1254 = vst.msk [vmem:[#allocation0] ss:$8 sm:$0xf] %vm1253, %v1252
    %1255 = vst.msk [vmem:[#allocation0] ss:$8 sm:$0xf0] %vm1253, %v1252
    %s1256 = scalar_lea.vmem %s0, 271
    %v1257 = vld [vmem:[%s1256] sm:$0x1]
    %s1258 = scalar_lea.vmem %s0, 302
    %v1259 = vld [vmem:[%s1258] sm:$0x2]
    %vm1260 = vcmask 1041409
    %v1261 = vsel %vm1260, %v1259, %v1257
    %s1262 = scalar_lea.vmem %s0, 333
    %v1263 = vld [vmem:[%s1262] sm:$0x4]
    %vm1264 = vcmask 1042434
    %v1265 = vsel %vm1264, %v1263, %v1261
    %s1266 = scalar_lea.vmem %s0, 364
    %v1267 = vld [vmem:[%s1266] sm:$0x8]
    %vm1268 = vcmask 1043459
    %v1269 = vsel %vm1268, %v1267, %v1265
    %s1270 = scalar_lea.vmem %s0, 395
    %v1271 = vld [vmem:[%s1270] sm:$0x10]
    %vm1272 = vcmask 1044484
    %v1273 = vsel %vm1272, %v1271, %v1269
    %s1274 = scalar_lea.vmem %s0, 426
    %v1275 = vld [vmem:[%s1274] sm:$0x20]
    %vm1276 = vcmask 1045509
    %v1277 = vsel %vm1276, %v1275, %v1273
    %s1278 = scalar_lea.vmem %s0, 457
    %v1279 = vld [vmem:[%s1278] sm:$0x40]
    %vm1280 = vcmask 1046534
    %v1281 = vsel %vm1280, %v1279, %v1277
    %s1282 = scalar_lea.vmem %s0, 488
    %v1283 = vld [vmem:[%s1282] sm:$0x80]
    %vm1284 = vcmask 1047559
    %v1285 = vsel %vm1284, %v1283, %v1281
    %1286 = vrot.lane.b32.xlu0 %v1285, 60
    %v1287 = vpop.permute.xlu0 %1286
    %vm1288 = vcmask 523744
    %s1289 = scalar_lea.vmem [#allocation0], 64
    %1290 = vst.msk [vmem:[%s1289] ss:$8 sm:$0xf] %vm1288, %v1287
    %s1291 = scalar_lea.vmem [#allocation0], 64
    %1292 = vst.msk [vmem:[%s1291] ss:$8 sm:$0xf0] %vm1288, %v1287
    %s1293 = scalar_lea.vmem %s0, 14
    %v1294 = vld [vmem:[%s1293] sm:$0x1]
    %s1295 = scalar_lea.vmem %s0, 45
    %v1296 = vld [vmem:[%s1295] sm:$0x2]
    %vm1297 = vcmask 1041409
    %v1298 = vsel %vm1297, %v1296, %v1294
    %s1299 = scalar_lea.vmem %s0, 76
    %v1300 = vld [vmem:[%s1299] sm:$0x4]
    %vm1301 = vcmask 1042434
    %v1302 = vsel %vm1301, %v1300, %v1298
    %s1303 = scalar_lea.vmem %s0, 107
    %v1304 = vld [vmem:[%s1303] sm:$0x8]
    %vm1305 = vcmask 1043459
    %v1306 = vsel %vm1305, %v1304, %v1302
    %s1307 = scalar_lea.vmem %s0, 138
    %v1308 = vld [vmem:[%s1307] sm:$0x10]
    %vm1309 = vcmask 1044484
    %v1310 = vsel %vm1309, %v1308, %v1306
    %s1311 = scalar_lea.vmem %s0, 169
    %v1312 = vld [vmem:[%s1311] sm:$0x20]
    %vm1313 = vcmask 1045509
    %v1314 = vsel %vm1313, %v1312, %v1310
    %s1315 = scalar_lea.vmem %s0, 200
    %v1316 = vld [vmem:[%s1315] sm:$0x40]
    %vm1317 = vcmask 1046534
    %v1318 = vsel %vm1317, %v1316, %v1314
    %s1319 = scalar_lea.vmem %s0, 231
    %v1320 = vld [vmem:[%s1319] sm:$0x80]
    %vm1321 = vcmask 1047559
    %v1322 = vsel %vm1321, %v1320, %v1318
    %1323 = vrot.lane.b32.xlu0 %v1322, 56
    %v1324 = vpop.permute.xlu0 %1323
    %vm1325 = vcmask 490944
    %1326 = vst.msk [vmem:[#allocation0] ss:$8 sm:$0xf] %vm1325, %v1324
    %1327 = vst.msk [vmem:[#allocation0] ss:$8 sm:$0xf0] %vm1325, %v1324
    %s1328 = scalar_lea.vmem %s0, 270
    %v1329 = vld [vmem:[%s1328] sm:$0x1]
    %s1330 = scalar_lea.vmem %s0, 301
    %v1331 = vld [vmem:[%s1330] sm:$0x2]
    %vm1332 = vcmask 1041409
    %v1333 = vsel %vm1332, %v1331, %v1329
    %s1334 = scalar_lea.vmem %s0, 332
    %v1335 = vld [vmem:[%s1334] sm:$0x4]
    %vm1336 = vcmask 1042434
    %v1337 = vsel %vm1336, %v1335, %v1333
    %s1338 = scalar_lea.vmem %s0, 363
    %v1339 = vld [vmem:[%s1338] sm:$0x8]
    %vm1340 = vcmask 1043459
    %v1341 = vsel %vm1340, %v1339, %v1337
    %s1342 = scalar_lea.vmem %s0, 394
    %v1343 = vld [vmem:[%s1342] sm:$0x10]
    %vm1344 = vcmask 1044484
    %v1345 = vsel %vm1344, %v1343, %v1341
    %s1346 = scalar_lea.vmem %s0, 425
    %v1347 = vld [vmem:[%s1346] sm:$0x20]
    %vm1348 = vcmask 1045509
    %v1349 = vsel %vm1348, %v1347, %v1345
    %s1350 = scalar_lea.vmem %s0, 456
    %v1351 = vld [vmem:[%s1350] sm:$0x40]
    %vm1352 = vcmask 1046534
    %v1353 = vsel %vm1352, %v1351, %v1349
    %s1354 = scalar_lea.vmem %s0, 487
    %v1355 = vld [vmem:[%s1354] sm:$0x80]
    %vm1356 = vcmask 1047559
    %v1357 = vsel %vm1356, %v1355, %v1353
    %1358 = vrot.lane.b32.xlu0 %v1357, 56
    %v1359 = vpop.permute.xlu0 %1358
    %vm1360 = vcmask 490944
    %s1361 = scalar_lea.vmem [#allocation0], 64
    %1362 = vst.msk [vmem:[%s1361] ss:$8 sm:$0xf] %vm1360, %v1359
    %s1363 = scalar_lea.vmem [#allocation0], 64
    %1364 = vst.msk [vmem:[%s1363] ss:$8 sm:$0xf0] %vm1360, %v1359
    %s1365 = scalar_lea.vmem %s0, 13
    %v1366 = vld [vmem:[%s1365] sm:$0x1]
    %s1367 = scalar_lea.vmem %s0, 44
    %v1368 = vld [vmem:[%s1367] sm:$0x2]
    %vm1369 = vcmask 1041409
    %v1370 = vsel %vm1369, %v1368, %v1366
    %s1371 = scalar_lea.vmem %s0, 75
    %v1372 = vld [vmem:[%s1371] sm:$0x4]
    %vm1373 = vcmask 1042434
    %v1374 = vsel %vm1373, %v1372, %v1370
    %s1375 = scalar_lea.vmem %s0, 106
    %v1376 = vld [vmem:[%s1375] sm:$0x8]
    %vm1377 = vcmask 1043459
    %v1378 = vsel %vm1377, %v1376, %v1374
    %s1379 = scalar_lea.vmem %s0, 137
    %v1380 = vld [vmem:[%s1379] sm:$0x10]
    %vm1381 = vcmask 1044484
    %v1382 = vsel %vm1381, %v1380, %v1378
    %s1383 = scalar_lea.vmem %s0, 168
    %v1384 = vld [vmem:[%s1383] sm:$0x20]
    %vm1385 = vcmask 1045509
    %v1386 = vsel %vm1385, %v1384, %v1382
    %s1387 = scalar_lea.vmem %s0, 199
    %v1388 = vld [vmem:[%s1387] sm:$0x40]
    %vm1389 = vcmask 1046534
    %v1390 = vsel %vm1389, %v1388, %v1386
    %s1391 = scalar_lea.vmem %s0, 230
    %v1392 = vld [vmem:[%s1391] sm:$0x80]
    %vm1393 = vcmask 1047559
    %v1394 = vsel %vm1393, %v1392, %v1390
    %1395 = vrot.lane.b32.xlu0 %v1394, 52
    %v1396 = vpop.permute.xlu0 %1395
    %vm1397 = vcmask 458144
    %1398 = vst.msk [vmem:[#allocation0] ss:$8 sm:$0xf] %vm1397, %v1396
    %1399 = vst.msk [vmem:[#allocation0] ss:$8 sm:$0xf0] %vm1397, %v1396
    %s1400 = scalar_lea.vmem %s0, 269
    %v1401 = vld [vmem:[%s1400] sm:$0x1]
    %s1402 = scalar_lea.vmem %s0, 300
    %v1403 = vld [vmem:[%s1402] sm:$0x2]
    %vm1404 = vcmask 1041409
    %v1405 = vsel %vm1404, %v1403, %v1401
    %s1406 = scalar_lea.vmem %s0, 331
    %v1407 = vld [vmem:[%s1406] sm:$0x4]
    %vm1408 = vcmask 1042434
    %v1409 = vsel %vm1408, %v1407, %v1405
    %s1410 = scalar_lea.vmem %s0, 362
    %v1411 = vld [vmem:[%s1410] sm:$0x8]
    %vm1412 = vcmask 1043459
    %v1413 = vsel %vm1412, %v1411, %v1409
    %s1414 = scalar_lea.vmem %s0, 393
    %v1415 = vld [vmem:[%s1414] sm:$0x10]
    %vm1416 = vcmask 1044484
    %v1417 = vsel %vm1416, %v1415, %v1413
    %s1418 = scalar_lea.vmem %s0, 424
    %v1419 = vld [vmem:[%s1418] sm:$0x20]
    %vm1420 = vcmask 1045509
    %v1421 = vsel %vm1420, %v1419, %v1417
    %s1422 = scalar_lea.vmem %s0, 455
    %v1423 = vld [vmem:[%s1422] sm:$0x40]
    %vm1424 = vcmask 1046534
    %v1425 = vsel %vm1424, %v1423, %v1421
    %s1426 = scalar_lea.vmem %s0, 486
    %v1427 = vld [vmem:[%s1426] sm:$0x80]
    %vm1428 = vcmask 1047559
    %v1429 = vsel %vm1428, %v1427, %v1425
    %1430 = vrot.lane.b32.xlu0 %v1429, 52
    %v1431 = vpop.permute.xlu0 %1430
    %vm1432 = vcmask 458144
    %s1433 = scalar_lea.vmem [#allocation0], 64
    %1434 = vst.msk [vmem:[%s1433] ss:$8 sm:$0xf] %vm1432, %v1431
    %s1435 = scalar_lea.vmem [#allocation0], 64
    %1436 = vst.msk [vmem:[%s1435] ss:$8 sm:$0xf0] %vm1432, %v1431
    %s1437 = scalar_lea.vmem %s0, 12
    %v1438 = vld [vmem:[%s1437] sm:$0x1]
    %s1439 = scalar_lea.vmem %s0, 43
    %v1440 = vld [vmem:[%s1439] sm:$0x2]
    %vm1441 = vcmask 1041409
    %v1442 = vsel %vm1441, %v1440, %v1438
    %s1443 = scalar_lea.vmem %s0, 74
    %v1444 = vld [vmem:[%s1443] sm:$0x4]
    %vm1445 = vcmask 1042434
    %v1446 = vsel %vm1445, %v1444, %v1442
    %s1447 = scalar_lea.vmem %s0, 105
    %v1448 = vld [vmem:[%s1447] sm:$0x8]
    %vm1449 = vcmask 1043459
    %v1450 = vsel %vm1449, %v1448, %v1446
    %s1451 = scalar_lea.vmem %s0, 136
    %v1452 = vld [vmem:[%s1451] sm:$0x10]
    %vm1453 = vcmask 1044484
    %v1454 = vsel %vm1453, %v1452, %v1450
    %s1455 = scalar_lea.vmem %s0, 167
    %v1456 = vld [vmem:[%s1455] sm:$0x20]
    %vm1457 = vcmask 1045509
    %v1458 = vsel %vm1457, %v1456, %v1454
    %s1459 = scalar_lea.vmem %s0, 198
    %v1460 = vld [vmem:[%s1459] sm:$0x40]
    %vm1461 = vcmask 1046534
    %v1462 = vsel %vm1461, %v1460, %v1458
    %s1463 = scalar_lea.vmem %s0, 229
    %v1464 = vld [vmem:[%s1463] sm:$0x80]
    %vm1465 = vcmask 1047559
    %v1466 = vsel %vm1465, %v1464, %v1462
    %1467 = vrot.lane.b32.xlu0 %v1466, 48
    %v1468 = vpop.permute.xlu0 %1467
    %vm1469 = vcmask 425344
    %1470 = vst.msk [vmem:[#allocation0] ss:$8 sm:$0xf] %vm1469, %v1468
    %1471 = vst.msk [vmem:[#allocation0] ss:$8 sm:$0xf0] %vm1469, %v1468
    %s1472 = scalar_lea.vmem %s0, 268
    %v1473 = vld [vmem:[%s1472] sm:$0x1]
    %s1474 = scalar_lea.vmem %s0, 299
    %v1475 = vld [vmem:[%s1474] sm:$0x2]
    %vm1476 = vcmask 1041409
    %v1477 = vsel %vm1476, %v1475, %v1473
    %s1478 = scalar_lea.vmem %s0, 330
    %v1479 = vld [vmem:[%s1478] sm:$0x4]
    %vm1480 = vcmask 1042434
    %v1481 = vsel %vm1480, %v1479, %v1477
    %s1482 = scalar_lea.vmem %s0, 361
    %v1483 = vld [vmem:[%s1482] sm:$0x8]
    %vm1484 = vcmask 1043459
    %v1485 = vsel %vm1484, %v1483, %v1481
    %s1486 = scalar_lea.vmem %s0, 392
    %v1487 = vld [vmem:[%s1486] sm:$0x10]
    %vm1488 = vcmask 1044484
    %v1489 = vsel %vm1488, %v1487, %v1485
    %s1490 = scalar_lea.vmem %s0, 423
    %v1491 = vld [vmem:[%s1490] sm:$0x20]
    %vm1492 = vcmask 1045509
    %v1493 = vsel %vm1492, %v1491, %v1489
    %s1494 = scalar_lea.vmem %s0, 454
    %v1495 = vld [vmem:[%s1494] sm:$0x40]
    %vm1496 = vcmask 1046534
    %v1497 = vsel %vm1496, %v1495, %v1493
    %s1498 = scalar_lea.vmem %s0, 485
    %v1499 = vld [vmem:[%s1498] sm:$0x80]
    %vm1500 = vcmask 1047559
    %v1501 = vsel %vm1500, %v1499, %v1497
    %1502 = vrot.lane.b32.xlu0 %v1501, 48
    %v1503 = vpop.permute.xlu0 %1502
    %vm1504 = vcmask 425344
    %s1505 = scalar_lea.vmem [#allocation0], 64
    %1506 = vst.msk [vmem:[%s1505] ss:$8 sm:$0xf] %vm1504, %v1503
    %s1507 = scalar_lea.vmem [#allocation0], 64
    %1508 = vst.msk [vmem:[%s1507] ss:$8 sm:$0xf0] %vm1504, %v1503
    %s1509 = scalar_lea.vmem %s0, 11
    %v1510 = vld [vmem:[%s1509] sm:$0x1]
    %s1511 = scalar_lea.vmem %s0, 42
    %v1512 = vld [vmem:[%s1511] sm:$0x2]
    %vm1513 = vcmask 1041409
    %v1514 = vsel %vm1513, %v1512, %v1510
    %s1515 = scalar_lea.vmem %s0, 73
    %v1516 = vld [vmem:[%s1515] sm:$0x4]
    %vm1517 = vcmask 1042434
    %v1518 = vsel %vm1517, %v1516, %v1514
    %s1519 = scalar_lea.vmem %s0, 104
    %v1520 = vld [vmem:[%s1519] sm:$0x8]
    %vm1521 = vcmask 1043459
    %v1522 = vsel %vm1521, %v1520, %v1518
    %s1523 = scalar_lea.vmem %s0, 135
    %v1524 = vld [vmem:[%s1523] sm:$0x10]
    %vm1525 = vcmask 1044484
    %v1526 = vsel %vm1525, %v1524, %v1522
    %s1527 = scalar_lea.vmem %s0, 166
    %v1528 = vld [vmem:[%s1527] sm:$0x20]
    %vm1529 = vcmask 1045509
    %v1530 = vsel %vm1529, %v1528, %v1526
    %s1531 = scalar_lea.vmem %s0, 197
    %v1532 = vld [vmem:[%s1531] sm:$0x40]
    %vm1533 = vcmask 1046534
    %v1534 = vsel %vm1533, %v1532, %v1530
    %s1535 = scalar_lea.vmem %s0, 228
    %v1536 = vld [vmem:[%s1535] sm:$0x80]
    %vm1537 = vcmask 1047559
    %v1538 = vsel %vm1537, %v1536, %v1534
    %1539 = vrot.lane.b32.xlu0 %v1538, 44
    %v1540 = vpop.permute.xlu0 %1539
    %vm1541 = vcmask 392544
    %1542 = vst.msk [vmem:[#allocation0] ss:$8 sm:$0xf] %vm1541, %v1540
    %1543 = vst.msk [vmem:[#allocation0] ss:$8 sm:$0xf0] %vm1541, %v1540
    %s1544 = scalar_lea.vmem %s0, 267
    %v1545 = vld [vmem:[%s1544] sm:$0x1]
    %s1546 = scalar_lea.vmem %s0, 298
    %v1547 = vld [vmem:[%s1546] sm:$0x2]
    %vm1548 = vcmask 1041409
    %v1549 = vsel %vm1548, %v1547, %v1545
    %s1550 = scalar_lea.vmem %s0, 329
    %v1551 = vld [vmem:[%s1550] sm:$0x4]
    %vm1552 = vcmask 1042434
    %v1553 = vsel %vm1552, %v1551, %v1549
    %s1554 = scalar_lea.vmem %s0, 360
    %v1555 = vld [vmem:[%s1554] sm:$0x8]
    %vm1556 = vcmask 1043459
    %v1557 = vsel %vm1556, %v1555, %v1553
    %s1558 = scalar_lea.vmem %s0, 391
    %v1559 = vld [vmem:[%s1558] sm:$0x10]
    %vm1560 = vcmask 1044484
    %v1561 = vsel %vm1560, %v1559, %v1557
    %s1562 = scalar_lea.vmem %s0, 422
    %v1563 = vld [vmem:[%s1562] sm:$0x20]
    %vm1564 = vcmask 1045509
    %v1565 = vsel %vm1564, %v1563, %v1561
    %s1566 = scalar_lea.vmem %s0, 453
    %v1567 = vld [vmem:[%s1566] sm:$0x40]
    %vm1568 = vcmask 1046534
    %v1569 = vsel %vm1568, %v1567, %v1565
    %s1570 = scalar_lea.vmem %s0, 484
    %v1571 = vld [vmem:[%s1570] sm:$0x80]
    %vm1572 = vcmask 1047559
    %v1573 = vsel %vm1572, %v1571, %v1569
    %1574 = vrot.lane.b32.xlu0 %v1573, 44
    %v1575 = vpop.permute.xlu0 %1574
    %vm1576 = vcmask 392544
    %s1577 = scalar_lea.vmem [#allocation0], 64
    %1578 = vst.msk [vmem:[%s1577] ss:$8 sm:$0xf] %vm1576, %v1575
    %s1579 = scalar_lea.vmem [#allocation0], 64
    %1580 = vst.msk [vmem:[%s1579] ss:$8 sm:$0xf0] %vm1576, %v1575
    %s1581 = scalar_lea.vmem %s0, 10
    %v1582 = vld [vmem:[%s1581] sm:$0x1]
    %s1583 = scalar_lea.vmem %s0, 41
    %v1584 = vld [vmem:[%s1583] sm:$0x2]
    %vm1585 = vcmask 1041409
    %v1586 = vsel %vm1585, %v1584, %v1582
    %s1587 = scalar_lea.vmem %s0, 72
    %v1588 = vld [vmem:[%s1587] sm:$0x4]
    %vm1589 = vcmask 1042434
    %v1590 = vsel %vm1589, %v1588, %v1586
    %s1591 = scalar_lea.vmem %s0, 103
    %v1592 = vld [vmem:[%s1591] sm:$0x8]
    %vm1593 = vcmask 1043459
    %v1594 = vsel %vm1593, %v1592, %v1590
    %s1595 = scalar_lea.vmem %s0, 134
    %v1596 = vld [vmem:[%s1595] sm:$0x10]
    %vm1597 = vcmask 1044484
    %v1598 = vsel %vm1597, %v1596, %v1594
    %s1599 = scalar_lea.vmem %s0, 165
    %v1600 = vld [vmem:[%s1599] sm:$0x20]
    %vm1601 = vcmask 1045509
    %v1602 = vsel %vm1601, %v1600, %v1598
    %s1603 = scalar_lea.vmem %s0, 196
    %v1604 = vld [vmem:[%s1603] sm:$0x40]
    %vm1605 = vcmask 1046534
    %v1606 = vsel %vm1605, %v1604, %v1602
    %s1607 = scalar_lea.vmem %s0, 227
    %v1608 = vld [vmem:[%s1607] sm:$0x80]
    %vm1609 = vcmask 1047559
    %v1610 = vsel %vm1609, %v1608, %v1606
    %1611 = vrot.lane.b32.xlu0 %v1610, 40
    %v1612 = vpop.permute.xlu0 %1611
    %vm1613 = vcmask 359744
    %1614 = vst.msk [vmem:[#allocation0] ss:$8 sm:$0xf] %vm1613, %v1612
    %1615 = vst.msk [vmem:[#allocation0] ss:$8 sm:$0xf0] %vm1613, %v1612
    %s1616 = scalar_lea.vmem %s0, 266
    %v1617 = vld [vmem:[%s1616] sm:$0x1]
    %s1618 = scalar_lea.vmem %s0, 297
    %v1619 = vld [vmem:[%s1618] sm:$0x2]
    %vm1620 = vcmask 1041409
    %v1621 = vsel %vm1620, %v1619, %v1617
    %s1622 = scalar_lea.vmem %s0, 328
    %v1623 = vld [vmem:[%s1622] sm:$0x4]
    %vm1624 = vcmask 1042434
    %v1625 = vsel %vm1624, %v1623, %v1621
    %s1626 = scalar_lea.vmem %s0, 359
    %v1627 = vld [vmem:[%s1626] sm:$0x8]
    %vm1628 = vcmask 1043459
    %v1629 = vsel %vm1628, %v1627, %v1625
    %s1630 = scalar_lea.vmem %s0, 390
    %v1631 = vld [vmem:[%s1630] sm:$0x10]
    %vm1632 = vcmask 1044484
    %v1633 = vsel %vm1632, %v1631, %v1629
    %s1634 = scalar_lea.vmem %s0, 421
    %v1635 = vld [vmem:[%s1634] sm:$0x20]
    %vm1636 = vcmask 1045509
    %v1637 = vsel %vm1636, %v1635, %v1633
    %s1638 = scalar_lea.vmem %s0, 452
    %v1639 = vld [vmem:[%s1638] sm:$0x40]
    %vm1640 = vcmask 1046534
    %v1641 = vsel %vm1640, %v1639, %v1637
    %s1642 = scalar_lea.vmem %s0, 483
    %v1643 = vld [vmem:[%s1642] sm:$0x80]
    %vm1644 = vcmask 1047559
    %v1645 = vsel %vm1644, %v1643, %v1641
    %1646 = vrot.lane.b32.xlu0 %v1645, 40
    %v1647 = vpop.permute.xlu0 %1646
    %vm1648 = vcmask 359744
    %s1649 = scalar_lea.vmem [#allocation0], 64
    %1650 = vst.msk [vmem:[%s1649] ss:$8 sm:$0xf] %vm1648, %v1647
    %s1651 = scalar_lea.vmem [#allocation0], 64
    %1652 = vst.msk [vmem:[%s1651] ss:$8 sm:$0xf0] %vm1648, %v1647
    %s1653 = scalar_lea.vmem %s0, 9
    %v1654 = vld [vmem:[%s1653] sm:$0x1]
    %s1655 = scalar_lea.vmem %s0, 40
    %v1656 = vld [vmem:[%s1655] sm:$0x2]
    %vm1657 = vcmask 1041409
    %v1658 = vsel %vm1657, %v1656, %v1654
    %s1659 = scalar_lea.vmem %s0, 71
    %v1660 = vld [vmem:[%s1659] sm:$0x4]
    %vm1661 = vcmask 1042434
    %v1662 = vsel %vm1661, %v1660, %v1658
    %s1663 = scalar_lea.vmem %s0, 102
    %v1664 = vld [vmem:[%s1663] sm:$0x8]
    %vm1665 = vcmask 1043459
    %v1666 = vsel %vm1665, %v1664, %v1662
    %s1667 = scalar_lea.vmem %s0, 133
    %v1668 = vld [vmem:[%s1667] sm:$0x10]
    %vm1669 = vcmask 1044484
    %v1670 = vsel %vm1669, %v1668, %v1666
    %s1671 = scalar_lea.vmem %s0, 164
    %v1672 = vld [vmem:[%s1671] sm:$0x20]
    %vm1673 = vcmask 1045509
    %v1674 = vsel %vm1673, %v1672, %v1670
    %s1675 = scalar_lea.vmem %s0, 195
    %v1676 = vld [vmem:[%s1675] sm:$0x40]
    %vm1677 = vcmask 1046534
    %v1678 = vsel %vm1677, %v1676, %v1674
    %s1679 = scalar_lea.vmem %s0, 226
    %v1680 = vld [vmem:[%s1679] sm:$0x80]
    %vm1681 = vcmask 1047559
    %v1682 = vsel %vm1681, %v1680, %v1678
    %1683 = vrot.lane.b32.xlu0 %v1682, 36
    %v1684 = vpop.permute.xlu0 %1683
    %vm1685 = vcmask 326944
    %1686 = vst.msk [vmem:[#allocation0] ss:$8 sm:$0xf] %vm1685, %v1684
    %1687 = vst.msk [vmem:[#allocation0] ss:$8 sm:$0xf0] %vm1685, %v1684
    %s1688 = scalar_lea.vmem %s0, 265
    %v1689 = vld [vmem:[%s1688] sm:$0x1]
    %s1690 = scalar_lea.vmem %s0, 296
    %v1691 = vld [vmem:[%s1690] sm:$0x2]
    %vm1692 = vcmask 1041409
    %v1693 = vsel %vm1692, %v1691, %v1689
    %s1694 = scalar_lea.vmem %s0, 327
    %v1695 = vld [vmem:[%s1694] sm:$0x4]
    %vm1696 = vcmask 1042434
    %v1697 = vsel %vm1696, %v1695, %v1693
    %s1698 = scalar_lea.vmem %s0, 358
    %v1699 = vld [vmem:[%s1698] sm:$0x8]
    %vm1700 = vcmask 1043459
    %v1701 = vsel %vm1700, %v1699, %v1697
    %s1702 = scalar_lea.vmem %s0, 389
    %v1703 = vld [vmem:[%s1702] sm:$0x10]
    %vm1704 = vcmask 1044484
    %v1705 = vsel %vm1704, %v1703, %v1701
    %s1706 = scalar_lea.vmem %s0, 420
    %v1707 = vld [vmem:[%s1706] sm:$0x20]
    %vm1708 = vcmask 1045509
    %v1709 = vsel %vm1708, %v1707, %v1705
    %s1710 = scalar_lea.vmem %s0, 451
    %v1711 = vld [vmem:[%s1710] sm:$0x40]
    %vm1712 = vcmask 1046534
    %v1713 = vsel %vm1712, %v1711, %v1709
    %s1714 = scalar_lea.vmem %s0, 482
    %v1715 = vld [vmem:[%s1714] sm:$0x80]
    %vm1716 = vcmask 1047559
    %v1717 = vsel %vm1716, %v1715, %v1713
    %1718 = vrot.lane.b32.xlu0 %v1717, 36
    %v1719 = vpop.permute.xlu0 %1718
    %vm1720 = vcmask 326944
    %s1721 = scalar_lea.vmem [#allocation0], 64
    %1722 = vst.msk [vmem:[%s1721] ss:$8 sm:$0xf] %vm1720, %v1719
    %s1723 = scalar_lea.vmem [#allocation0], 64
    %1724 = vst.msk [vmem:[%s1723] ss:$8 sm:$0xf0] %vm1720, %v1719
    %s1725 = scalar_lea.vmem %s0, 8
    %v1726 = vld [vmem:[%s1725] sm:$0x1]
    %s1727 = scalar_lea.vmem %s0, 39
    %v1728 = vld [vmem:[%s1727] sm:$0x2]
    %vm1729 = vcmask 1041409
    %v1730 = vsel %vm1729, %v1728, %v1726
    %s1731 = scalar_lea.vmem %s0, 70
    %v1732 = vld [vmem:[%s1731] sm:$0x4]
    %vm1733 = vcmask 1042434
    %v1734 = vsel %vm1733, %v1732, %v1730
    %s1735 = scalar_lea.vmem %s0, 101
    %v1736 = vld [vmem:[%s1735] sm:$0x8]
    %vm1737 = vcmask 1043459
    %v1738 = vsel %vm1737, %v1736, %v1734
    %s1739 = scalar_lea.vmem %s0, 132
    %v1740 = vld [vmem:[%s1739] sm:$0x10]
    %vm1741 = vcmask 1044484
    %v1742 = vsel %vm1741, %v1740, %v1738
    %s1743 = scalar_lea.vmem %s0, 163
    %v1744 = vld [vmem:[%s1743] sm:$0x20]
    %vm1745 = vcmask 1045509
    %v1746 = vsel %vm1745, %v1744, %v1742
    %s1747 = scalar_lea.vmem %s0, 194
    %v1748 = vld [vmem:[%s1747] sm:$0x40]
    %vm1749 = vcmask 1046534
    %v1750 = vsel %vm1749, %v1748, %v1746
    %s1751 = scalar_lea.vmem %s0, 225
    %v1752 = vld [vmem:[%s1751] sm:$0x80]
    %vm1753 = vcmask 1047559
    %v1754 = vsel %vm1753, %v1752, %v1750
    %1755 = vrot.lane.b32.xlu0 %v1754, 32
    %v1756 = vpop.permute.xlu0 %1755
    %vm1757 = vcmask 294144
    %1758 = vst.msk [vmem:[#allocation0] ss:$8 sm:$0xf] %vm1757, %v1756
    %1759 = vst.msk [vmem:[#allocation0] ss:$8 sm:$0xf0] %vm1757, %v1756
    %s1760 = scalar_lea.vmem %s0, 264
    %v1761 = vld [vmem:[%s1760] sm:$0x1]
    %s1762 = scalar_lea.vmem %s0, 295
    %v1763 = vld [vmem:[%s1762] sm:$0x2]
    %vm1764 = vcmask 1041409
    %v1765 = vsel %vm1764, %v1763, %v1761
    %s1766 = scalar_lea.vmem %s0, 326
    %v1767 = vld [vmem:[%s1766] sm:$0x4]
    %vm1768 = vcmask 1042434
    %v1769 = vsel %vm1768, %v1767, %v1765
    %s1770 = scalar_lea.vmem %s0, 357
    %v1771 = vld [vmem:[%s1770] sm:$0x8]
    %vm1772 = vcmask 1043459
    %v1773 = vsel %vm1772, %v1771, %v1769
    %s1774 = scalar_lea.vmem %s0, 388
    %v1775 = vld [vmem:[%s1774] sm:$0x10]
    %vm1776 = vcmask 1044484
    %v1777 = vsel %vm1776, %v1775, %v1773
    %s1778 = scalar_lea.vmem %s0, 419
    %v1779 = vld [vmem:[%s1778] sm:$0x20]
    %vm1780 = vcmask 1045509
    %v1781 = vsel %vm1780, %v1779, %v1777
    %s1782 = scalar_lea.vmem %s0, 450
    %v1783 = vld [vmem:[%s1782] sm:$0x40]
    %vm1784 = vcmask 1046534
    %v1785 = vsel %vm1784, %v1783, %v1781
    %s1786 = scalar_lea.vmem %s0, 481
    %v1787 = vld [vmem:[%s1786] sm:$0x80]
    %vm1788 = vcmask 1047559
    %v1789 = vsel %vm1788, %v1787, %v1785
    %1790 = vrot.lane.b32.xlu0 %v1789, 32
    %v1791 = vpop.permute.xlu0 %1790
    %vm1792 = vcmask 294144
    %s1793 = scalar_lea.vmem [#allocation0], 64
    %1794 = vst.msk [vmem:[%s1793] ss:$8 sm:$0xf] %vm1792, %v1791
    %s1795 = scalar_lea.vmem [#allocation0], 64
    %1796 = vst.msk [vmem:[%s1795] ss:$8 sm:$0xf0] %vm1792, %v1791
    %s1797 = scalar_lea.vmem %s0, 7
    %v1798 = vld [vmem:[%s1797] sm:$0x1]
    %s1799 = scalar_lea.vmem %s0, 38
    %v1800 = vld [vmem:[%s1799] sm:$0x2]
    %vm1801 = vcmask 1041409
    %v1802 = vsel %vm1801, %v1800, %v1798
    %s1803 = scalar_lea.vmem %s0, 69
    %v1804 = vld [vmem:[%s1803] sm:$0x4]
    %vm1805 = vcmask 1042434
    %v1806 = vsel %vm1805, %v1804, %v1802
    %s1807 = scalar_lea.vmem %s0, 100
    %v1808 = vld [vmem:[%s1807] sm:$0x8]
    %vm1809 = vcmask 1043459
    %v1810 = vsel %vm1809, %v1808, %v1806
    %s1811 = scalar_lea.vmem %s0, 131
    %v1812 = vld [vmem:[%s1811] sm:$0x10]
    %vm1813 = vcmask 1044484
    %v1814 = vsel %vm1813, %v1812, %v1810
    %s1815 = scalar_lea.vmem %s0, 162
    %v1816 = vld [vmem:[%s1815] sm:$0x20]
    %vm1817 = vcmask 1045509
    %v1818 = vsel %vm1817, %v1816, %v1814
    %s1819 = scalar_lea.vmem %s0, 193
    %v1820 = vld [vmem:[%s1819] sm:$0x40]
    %vm1821 = vcmask 1046534
    %v1822 = vsel %vm1821, %v1820, %v1818
    %s1823 = scalar_lea.vmem %s0, 224
    %v1824 = vld [vmem:[%s1823] sm:$0x80]
    %vm1825 = vcmask 1047559
    %v1826 = vsel %vm1825, %v1824, %v1822
    %1827 = vrot.lane.b32.xlu0 %v1826, 28
    %v1828 = vpop.permute.xlu0 %1827
    %vm1829 = vcmask 261344
    %1830 = vst.msk [vmem:[#allocation0] ss:$8 sm:$0xf] %vm1829, %v1828
    %1831 = vst.msk [vmem:[#allocation0] ss:$8 sm:$0xf0] %vm1829, %v1828
    %s1832 = scalar_lea.vmem %s0, 263
    %v1833 = vld [vmem:[%s1832] sm:$0x1]
    %s1834 = scalar_lea.vmem %s0, 294
    %v1835 = vld [vmem:[%s1834] sm:$0x2]
    %vm1836 = vcmask 1041409
    %v1837 = vsel %vm1836, %v1835, %v1833
    %s1838 = scalar_lea.vmem %s0, 325
    %v1839 = vld [vmem:[%s1838] sm:$0x4]
    %vm1840 = vcmask 1042434
    %v1841 = vsel %vm1840, %v1839, %v1837
    %s1842 = scalar_lea.vmem %s0, 356
    %v1843 = vld [vmem:[%s1842] sm:$0x8]
    %vm1844 = vcmask 1043459
    %v1845 = vsel %vm1844, %v1843, %v1841
    %s1846 = scalar_lea.vmem %s0, 387
    %v1847 = vld [vmem:[%s1846] sm:$0x10]
    %vm1848 = vcmask 1044484
    %v1849 = vsel %vm1848, %v1847, %v1845
    %s1850 = scalar_lea.vmem %s0, 418
    %v1851 = vld [vmem:[%s1850] sm:$0x20]
    %vm1852 = vcmask 1045509
    %v1853 = vsel %vm1852, %v1851, %v1849
    %s1854 = scalar_lea.vmem %s0, 449
    %v1855 = vld [vmem:[%s1854] sm:$0x40]
    %vm1856 = vcmask 1046534
    %v1857 = vsel %vm1856, %v1855, %v1853
    %s1858 = scalar_lea.vmem %s0, 480
    %v1859 = vld [vmem:[%s1858] sm:$0x80]
    %vm1860 = vcmask 1047559
    %v1861 = vsel %vm1860, %v1859, %v1857
    %1862 = vrot.lane.b32.xlu0 %v1861, 28
    %v1863 = vpop.permute.xlu0 %1862
    %vm1864 = vcmask 261344
    %s1865 = scalar_lea.vmem [#allocation0], 64
    %1866 = vst.msk [vmem:[%s1865] ss:$8 sm:$0xf] %vm1864, %v1863
    %s1867 = scalar_lea.vmem [#allocation0], 64
    %1868 = vst.msk [vmem:[%s1867] ss:$8 sm:$0xf0] %vm1864, %v1863
    %s1869 = scalar_lea.vmem %s0, 6
    %v1870 = vld [vmem:[%s1869] sm:$0x1]
    %s1871 = scalar_lea.vmem %s0, 37
    %v1872 = vld [vmem:[%s1871] sm:$0x2]
    %vm1873 = vcmask 1041409
    %v1874 = vsel %vm1873, %v1872, %v1870
    %s1875 = scalar_lea.vmem %s0, 68
    %v1876 = vld [vmem:[%s1875] sm:$0x4]
    %vm1877 = vcmask 1042434
    %v1878 = vsel %vm1877, %v1876, %v1874
    %s1879 = scalar_lea.vmem %s0, 99
    %v1880 = vld [vmem:[%s1879] sm:$0x8]
    %vm1881 = vcmask 1043459
    %v1882 = vsel %vm1881, %v1880, %v1878
    %s1883 = scalar_lea.vmem %s0, 130
    %v1884 = vld [vmem:[%s1883] sm:$0x10]
    %vm1885 = vcmask 1044484
    %v1886 = vsel %vm1885, %v1884, %v1882
    %s1887 = scalar_lea.vmem %s0, 161
    %v1888 = vld [vmem:[%s1887] sm:$0x20]
    %vm1889 = vcmask 1045509
    %v1890 = vsel %vm1889, %v1888, %v1886
    %s1891 = scalar_lea.vmem %s0, 192
    %v1892 = vld [vmem:[%s1891] sm:$0x40]
    %vm1893 = vcmask 1046534
    %v1894 = vsel %vm1893, %v1892, %v1890
    %s1895 = scalar_lea.vmem %s0, 223
    %v1896 = vld [vmem:[%s1895] sm:$0x80]
    %vm1897 = vcmask 1047559
    %v1898 = vsel %vm1897, %v1896, %v1894
    %1899 = vrot.lane.b32.xlu0 %v1898, 24
    %v1900 = vpop.permute.xlu0 %1899
    %vm1901 = vcmask 228544
    %1902 = vst.msk [vmem:[#allocation0] ss:$8 sm:$0xf] %vm1901, %v1900
    %1903 = vst.msk [vmem:[#allocation0] ss:$8 sm:$0xf0] %vm1901, %v1900
    %s1904 = scalar_lea.vmem %s0, 262
    %v1905 = vld [vmem:[%s1904] sm:$0x1]
    %s1906 = scalar_lea.vmem %s0, 293
    %v1907 = vld [vmem:[%s1906] sm:$0x2]
    %vm1908 = vcmask 1041409
    %v1909 = vsel %vm1908, %v1907, %v1905
    %s1910 = scalar_lea.vmem %s0, 324
    %v1911 = vld [vmem:[%s1910] sm:$0x4]
    %vm1912 = vcmask 1042434
    %v1913 = vsel %vm1912, %v1911, %v1909
    %s1914 = scalar_lea.vmem %s0, 355
    %v1915 = vld [vmem:[%s1914] sm:$0x8]
    %vm1916 = vcmask 1043459
    %v1917 = vsel %vm1916, %v1915, %v1913
    %s1918 = scalar_lea.vmem %s0, 386
    %v1919 = vld [vmem:[%s1918] sm:$0x10]
    %vm1920 = vcmask 1044484
    %v1921 = vsel %vm1920, %v1919, %v1917
    %s1922 = scalar_lea.vmem %s0, 417
    %v1923 = vld [vmem:[%s1922] sm:$0x20]
    %vm1924 = vcmask 1045509
    %v1925 = vsel %vm1924, %v1923, %v1921
    %s1926 = scalar_lea.vmem %s0, 448
    %v1927 = vld [vmem:[%s1926] sm:$0x40]
    %vm1928 = vcmask 1046534
    %v1929 = vsel %vm1928, %v1927, %v1925
    %s1930 = scalar_lea.vmem %s0, 479
    %v1931 = vld [vmem:[%s1930] sm:$0x80]
    %vm1932 = vcmask 1047559
    %v1933 = vsel %vm1932, %v1931, %v1929
    %1934 = vrot.lane.b32.xlu0 %v1933, 24
    %v1935 = vpop.permute.xlu0 %1934
    %vm1936 = vcmask 228544
    %s1937 = scalar_lea.vmem [#allocation0], 64
    %1938 = vst.msk [vmem:[%s1937] ss:$8 sm:$0xf] %vm1936, %v1935
    %s1939 = scalar_lea.vmem [#allocation0], 64
    %1940 = vst.msk [vmem:[%s1939] ss:$8 sm:$0xf0] %vm1936, %v1935
    %s1941 = scalar_lea.vmem %s0, 5
    %v1942 = vld [vmem:[%s1941] sm:$0x1]
    %s1943 = scalar_lea.vmem %s0, 36
    %v1944 = vld [vmem:[%s1943] sm:$0x2]
    %vm1945 = vcmask 1041409
    %v1946 = vsel %vm1945, %v1944, %v1942
    %s1947 = scalar_lea.vmem %s0, 67
    %v1948 = vld [vmem:[%s1947] sm:$0x4]
    %vm1949 = vcmask 1042434
    %v1950 = vsel %vm1949, %v1948, %v1946
    %s1951 = scalar_lea.vmem %s0, 98
    %v1952 = vld [vmem:[%s1951] sm:$0x8]
    %vm1953 = vcmask 1043459
    %v1954 = vsel %vm1953, %v1952, %v1950
    %s1955 = scalar_lea.vmem %s0, 129
    %v1956 = vld [vmem:[%s1955] sm:$0x10]
    %vm1957 = vcmask 1044484
    %v1958 = vsel %vm1957, %v1956, %v1954
    %s1959 = scalar_lea.vmem %s0, 160
    %v1960 = vld [vmem:[%s1959] sm:$0x20]
    %vm1961 = vcmask 1045509
    %v1962 = vsel %vm1961, %v1960, %v1958
    %s1963 = scalar_lea.vmem %s0, 191
    %v1964 = vld [vmem:[%s1963] sm:$0x40]
    %vm1965 = vcmask 1046534
    %v1966 = vsel %vm1965, %v1964, %v1962
    %s1967 = scalar_lea.vmem %s0, 222
    %v1968 = vld [vmem:[%s1967] sm:$0x80]
    %vm1969 = vcmask 1047559
    %v1970 = vsel %vm1969, %v1968, %v1966
    %1971 = vrot.lane.b32.xlu0 %v1970, 20
    %v1972 = vpop.permute.xlu0 %1971
    %vm1973 = vcmask 195744
    %1974 = vst.msk [vmem:[#allocation0] ss:$8 sm:$0xf] %vm1973, %v1972
    %1975 = vst.msk [vmem:[#allocation0] ss:$8 sm:$0xf0] %vm1973, %v1972
    %s1976 = scalar_lea.vmem %s0, 261
    %v1977 = vld [vmem:[%s1976] sm:$0x1]
    %s1978 = scalar_lea.vmem %s0, 292
    %v1979 = vld [vmem:[%s1978] sm:$0x2]
    %vm1980 = vcmask 1041409
    %v1981 = vsel %vm1980, %v1979, %v1977
    %s1982 = scalar_lea.vmem %s0, 323
    %v1983 = vld [vmem:[%s1982] sm:$0x4]
    %vm1984 = vcmask 1042434
    %v1985 = vsel %vm1984, %v1983, %v1981
    %s1986 = scalar_lea.vmem %s0, 354
    %v1987 = vld [vmem:[%s1986] sm:$0x8]
    %vm1988 = vcmask 1043459
    %v1989 = vsel %vm1988, %v1987, %v1985
    %s1990 = scalar_lea.vmem %s0, 385
    %v1991 = vld [vmem:[%s1990] sm:$0x10]
    %vm1992 = vcmask 1044484
    %v1993 = vsel %vm1992, %v1991, %v1989
    %s1994 = scalar_lea.vmem %s0, 416
    %v1995 = vld [vmem:[%s1994] sm:$0x20]
    %vm1996 = vcmask 1045509
    %v1997 = vsel %vm1996, %v1995, %v1993
    %s1998 = scalar_lea.vmem %s0, 447
    %v1999 = vld [vmem:[%s1998] sm:$0x40]
    %vm2000 = vcmask 1046534
    %v2001 = vsel %vm2000, %v1999, %v1997
    %s2002 = scalar_lea.vmem %s0, 478
    %v2003 = vld [vmem:[%s2002] sm:$0x80]
    %vm2004 = vcmask 1047559
    %v2005 = vsel %vm2004, %v2003, %v2001
    %2006 = vrot.lane.b32.xlu0 %v2005, 20
    %v2007 = vpop.permute.xlu0 %2006
    %vm2008 = vcmask 195744
    %s2009 = scalar_lea.vmem [#allocation0], 64
    %2010 = vst.msk [vmem:[%s2009] ss:$8 sm:$0xf] %vm2008, %v2007
    %s2011 = scalar_lea.vmem [#allocation0], 64
    %2012 = vst.msk [vmem:[%s2011] ss:$8 sm:$0xf0] %vm2008, %v2007
    %s2013 = scalar_lea.vmem %s0, 4
    %v2014 = vld [vmem:[%s2013] sm:$0x1]
    %s2015 = scalar_lea.vmem %s0, 35
    %v2016 = vld [vmem:[%s2015] sm:$0x2]
    %vm2017 = vcmask 1041409
    %v2018 = vsel %vm2017, %v2016, %v2014
    %s2019 = scalar_lea.vmem %s0, 66
    %v2020 = vld [vmem:[%s2019] sm:$0x4]
    %vm2021 = vcmask 1042434
    %v2022 = vsel %vm2021, %v2020, %v2018
    %s2023 = scalar_lea.vmem %s0, 97
    %v2024 = vld [vmem:[%s2023] sm:$0x8]
    %vm2025 = vcmask 1043459
    %v2026 = vsel %vm2025, %v2024, %v2022
    %s2027 = scalar_lea.vmem %s0, 128
    %v2028 = vld [vmem:[%s2027] sm:$0x10]
    %vm2029 = vcmask 1044484
    %v2030 = vsel %vm2029, %v2028, %v2026
    %s2031 = scalar_lea.vmem %s0, 159
    %v2032 = vld [vmem:[%s2031] sm:$0x20]
    %vm2033 = vcmask 1045509
    %v2034 = vsel %vm2033, %v2032, %v2030
    %s2035 = scalar_lea.vmem %s0, 190
    %v2036 = vld [vmem:[%s2035] sm:$0x40]
    %vm2037 = vcmask 1046534
    %v2038 = vsel %vm2037, %v2036, %v2034
    %s2039 = scalar_lea.vmem %s0, 221
    %v2040 = vld [vmem:[%s2039] sm:$0x80]
    %vm2041 = vcmask 1047559
    %v2042 = vsel %vm2041, %v2040, %v2038
    %2043 = vrot.lane.b32.xlu0 %v2042, 16
    %v2044 = vpop.permute.xlu0 %2043
    %vm2045 = vcmask 162944
    %2046 = vst.msk [vmem:[#allocation0] ss:$8 sm:$0xf] %vm2045, %v2044
    %2047 = vst.msk [vmem:[#allocation0] ss:$8 sm:$0xf0] %vm2045, %v2044
    %s2048 = scalar_lea.vmem %s0, 260
    %v2049 = vld [vmem:[%s2048] sm:$0x1]
    %s2050 = scalar_lea.vmem %s0, 291
    %v2051 = vld [vmem:[%s2050] sm:$0x2]
    %vm2052 = vcmask 1041409
    %v2053 = vsel %vm2052, %v2051, %v2049
    %s2054 = scalar_lea.vmem %s0, 322
    %v2055 = vld [vmem:[%s2054] sm:$0x4]
    %vm2056 = vcmask 1042434
    %v2057 = vsel %vm2056, %v2055, %v2053
    %s2058 = scalar_lea.vmem %s0, 353
    %v2059 = vld [vmem:[%s2058] sm:$0x8]
    %vm2060 = vcmask 1043459
    %v2061 = vsel %vm2060, %v2059, %v2057
    %s2062 = scalar_lea.vmem %s0, 384
    %v2063 = vld [vmem:[%s2062] sm:$0x10]
    %vm2064 = vcmask 1044484
    %v2065 = vsel %vm2064, %v2063, %v2061
    %s2066 = scalar_lea.vmem %s0, 415
    %v2067 = vld [vmem:[%s2066] sm:$0x20]
    %vm2068 = vcmask 1045509
    %v2069 = vsel %vm2068, %v2067, %v2065
    %s2070 = scalar_lea.vmem %s0, 446
    %v2071 = vld [vmem:[%s2070] sm:$0x40]
    %vm2072 = vcmask 1046534
    %v2073 = vsel %vm2072, %v2071, %v2069
    %s2074 = scalar_lea.vmem %s0, 477
    %v2075 = vld [vmem:[%s2074] sm:$0x80]
    %vm2076 = vcmask 1047559
    %v2077 = vsel %vm2076, %v2075, %v2073
    %2078 = vrot.lane.b32.xlu0 %v2077, 16
    %v2079 = vpop.permute.xlu0 %2078
    %vm2080 = vcmask 162944
    %s2081 = scalar_lea.vmem [#allocation0], 64
    %2082 = vst.msk [vmem:[%s2081] ss:$8 sm:$0xf] %vm2080, %v2079
    %s2083 = scalar_lea.vmem [#allocation0], 64
    %2084 = vst.msk [vmem:[%s2083] ss:$8 sm:$0xf0] %vm2080, %v2079
    %s2085 = scalar_lea.vmem %s0, 3
    %v2086 = vld [vmem:[%s2085] sm:$0x1]
    %s2087 = scalar_lea.vmem %s0, 34
    %v2088 = vld [vmem:[%s2087] sm:$0x2]
    %vm2089 = vcmask 1041409
    %v2090 = vsel %vm2089, %v2088, %v2086
    %s2091 = scalar_lea.vmem %s0, 65
    %v2092 = vld [vmem:[%s2091] sm:$0x4]
    %vm2093 = vcmask 1042434
    %v2094 = vsel %vm2093, %v2092, %v2090
    %s2095 = scalar_lea.vmem %s0, 96
    %v2096 = vld [vmem:[%s2095] sm:$0x8]
    %vm2097 = vcmask 1043459
    %v2098 = vsel %vm2097, %v2096, %v2094
    %s2099 = scalar_lea.vmem %s0, 127
    %v2100 = vld [vmem:[%s2099] sm:$0x10]
    %vm2101 = vcmask 1044484
    %v2102 = vsel %vm2101, %v2100, %v2098
    %s2103 = scalar_lea.vmem %s0, 158
    %v2104 = vld [vmem:[%s2103] sm:$0x20]
    %vm2105 = vcmask 1045509
    %v2106 = vsel %vm2105, %v2104, %v2102
    %s2107 = scalar_lea.vmem %s0, 189
    %v2108 = vld [vmem:[%s2107] sm:$0x40]
    %vm2109 = vcmask 1046534
    %v2110 = vsel %vm2109, %v2108, %v2106
    %s2111 = scalar_lea.vmem %s0, 220
    %v2112 = vld [vmem:[%s2111] sm:$0x80]
    %vm2113 = vcmask 1047559
    %v2114 = vsel %vm2113, %v2112, %v2110
    %2115 = vrot.lane.b32.xlu0 %v2114, 12
    %v2116 = vpop.permute.xlu0 %2115
    %vm2117 = vcmask 130144
    %2118 = vst.msk [vmem:[#allocation0] ss:$8 sm:$0xf] %vm2117, %v2116
    %2119 = vst.msk [vmem:[#allocation0] ss:$8 sm:$0xf0] %vm2117, %v2116
    %s2120 = scalar_lea.vmem %s0, 259
    %v2121 = vld [vmem:[%s2120] sm:$0x1]
    %s2122 = scalar_lea.vmem %s0, 290
    %v2123 = vld [vmem:[%s2122] sm:$0x2]
    %vm2124 = vcmask 1041409
    %v2125 = vsel %vm2124, %v2123, %v2121
    %s2126 = scalar_lea.vmem %s0, 321
    %v2127 = vld [vmem:[%s2126] sm:$0x4]
    %vm2128 = vcmask 1042434
    %v2129 = vsel %vm2128, %v2127, %v2125
    %s2130 = scalar_lea.vmem %s0, 352
    %v2131 = vld [vmem:[%s2130] sm:$0x8]
    %vm2132 = vcmask 1043459
    %v2133 = vsel %vm2132, %v2131, %v2129
    %s2134 = scalar_lea.vmem %s0, 383
    %v2135 = vld [vmem:[%s2134] sm:$0x10]
    %vm2136 = vcmask 1044484
    %v2137 = vsel %vm2136, %v2135, %v2133
    %s2138 = scalar_lea.vmem %s0, 414
    %v2139 = vld [vmem:[%s2138] sm:$0x20]
    %vm2140 = vcmask 1045509
    %v2141 = vsel %vm2140, %v2139, %v2137
    %s2142 = scalar_lea.vmem %s0, 445
    %v2143 = vld [vmem:[%s2142] sm:$0x40]
    %vm2144 = vcmask 1046534
    %v2145 = vsel %vm2144, %v2143, %v2141
    %s2146 = scalar_lea.vmem %s0, 476
    %v2147 = vld [vmem:[%s2146] sm:$0x80]
    %vm2148 = vcmask 1047559
    %v2149 = vsel %vm2148, %v2147, %v2145
    %2150 = vrot.lane.b32.xlu0 %v2149, 12
    %v2151 = vpop.permute.xlu0 %2150
    %vm2152 = vcmask 130144
    %s2153 = scalar_lea.vmem [#allocation0], 64
    %2154 = vst.msk [vmem:[%s2153] ss:$8 sm:$0xf] %vm2152, %v2151
    %s2155 = scalar_lea.vmem [#allocation0], 64
    %2156 = vst.msk [vmem:[%s2155] ss:$8 sm:$0xf0] %vm2152, %v2151
    %s2157 = scalar_lea.vmem %s0, 2
    %v2158 = vld [vmem:[%s2157] sm:$0x1]
    %s2159 = scalar_lea.vmem %s0, 33
    %v2160 = vld [vmem:[%s2159] sm:$0x2]
    %vm2161 = vcmask 1041409
    %v2162 = vsel %vm2161, %v2160, %v2158
    %s2163 = scalar_lea.vmem %s0, 64
    %v2164 = vld [vmem:[%s2163] sm:$0x4]
    %vm2165 = vcmask 1042434
    %v2166 = vsel %vm2165, %v2164, %v2162
    %s2167 = scalar_lea.vmem %s0, 95
    %v2168 = vld [vmem:[%s2167] sm:$0x8]
    %vm2169 = vcmask 1043459
    %v2170 = vsel %vm2169, %v2168, %v2166
    %s2171 = scalar_lea.vmem %s0, 126
    %v2172 = vld [vmem:[%s2171] sm:$0x10]
    %vm2173 = vcmask 1044484
    %v2174 = vsel %vm2173, %v2172, %v2170
    %s2175 = scalar_lea.vmem %s0, 157
    %v2176 = vld [vmem:[%s2175] sm:$0x20]
    %vm2177 = vcmask 1045509
    %v2178 = vsel %vm2177, %v2176, %v2174
    %s2179 = scalar_lea.vmem %s0, 188
    %v2180 = vld [vmem:[%s2179] sm:$0x40]
    %vm2181 = vcmask 1046534
    %v2182 = vsel %vm2181, %v2180, %v2178
    %s2183 = scalar_lea.vmem %s0, 219
    %v2184 = vld [vmem:[%s2183] sm:$0x80]
    %vm2185 = vcmask 1047559
    %v2186 = vsel %vm2185, %v2184, %v2182
    %2187 = vrot.lane.b32.xlu0 %v2186, 8
    %v2188 = vpop.permute.xlu0 %2187
    %vm2189 = vcmask 97344
    %2190 = vst.msk [vmem:[#allocation0] ss:$8 sm:$0xf] %vm2189, %v2188
    %2191 = vst.msk [vmem:[#allocation0] ss:$8 sm:$0xf0] %vm2189, %v2188
    %s2192 = scalar_lea.vmem %s0, 258
    %v2193 = vld [vmem:[%s2192] sm:$0x1]
    %s2194 = scalar_lea.vmem %s0, 289
    %v2195 = vld [vmem:[%s2194] sm:$0x2]
    %vm2196 = vcmask 1041409
    %v2197 = vsel %vm2196, %v2195, %v2193
    %s2198 = scalar_lea.vmem %s0, 320
    %v2199 = vld [vmem:[%s2198] sm:$0x4]
    %vm2200 = vcmask 1042434
    %v2201 = vsel %vm2200, %v2199, %v2197
    %s2202 = scalar_lea.vmem %s0, 351
    %v2203 = vld [vmem:[%s2202] sm:$0x8]
    %vm2204 = vcmask 1043459
    %v2205 = vsel %vm2204, %v2203, %v2201
    %s2206 = scalar_lea.vmem %s0, 382
    %v2207 = vld [vmem:[%s2206] sm:$0x10]
    %vm2208 = vcmask 1044484
    %v2209 = vsel %vm2208, %v2207, %v2205
    %s2210 = scalar_lea.vmem %s0, 413
    %v2211 = vld [vmem:[%s2210] sm:$0x20]
    %vm2212 = vcmask 1045509
    %v2213 = vsel %vm2212, %v2211, %v2209
    %s2214 = scalar_lea.vmem %s0, 444
    %v2215 = vld [vmem:[%s2214] sm:$0x40]
    %vm2216 = vcmask 1046534
    %v2217 = vsel %vm2216, %v2215, %v2213
    %s2218 = scalar_lea.vmem %s0, 475
    %v2219 = vld [vmem:[%s2218] sm:$0x80]
    %vm2220 = vcmask 1047559
    %v2221 = vsel %vm2220, %v2219, %v2217
    %2222 = vrot.lane.b32.xlu0 %v2221, 8
    %v2223 = vpop.permute.xlu0 %2222
    %vm2224 = vcmask 97344
    %s2225 = scalar_lea.vmem [#allocation0], 64
    %2226 = vst.msk [vmem:[%s2225] ss:$8 sm:$0xf] %vm2224, %v2223
    %s2227 = scalar_lea.vmem [#allocation0], 64
    %2228 = vst.msk [vmem:[%s2227] ss:$8 sm:$0xf0] %vm2224, %v2223
    %s2229 = scalar_lea.vmem %s0, 1
    %v2230 = vld [vmem:[%s2229] sm:$0x1]
    %s2231 = scalar_lea.vmem %s0, 32
    %v2232 = vld [vmem:[%s2231] sm:$0x2]
    %vm2233 = vcmask 1041409
    %v2234 = vsel %vm2233, %v2232, %v2230
    %s2235 = scalar_lea.vmem %s0, 63
    %v2236 = vld [vmem:[%s2235] sm:$0x4]
    %vm2237 = vcmask 1042434
    %v2238 = vsel %vm2237, %v2236, %v2234
    %s2239 = scalar_lea.vmem %s0, 94
    %v2240 = vld [vmem:[%s2239] sm:$0x8]
    %vm2241 = vcmask 1043459
    %v2242 = vsel %vm2241, %v2240, %v2238
    %s2243 = scalar_lea.vmem %s0, 125
    %v2244 = vld [vmem:[%s2243] sm:$0x10]
    %vm2245 = vcmask 1044484
    %v2246 = vsel %vm2245, %v2244, %v2242
    %s2247 = scalar_lea.vmem %s0, 156
    %v2248 = vld [vmem:[%s2247] sm:$0x20]
    %vm2249 = vcmask 1045509
    %v2250 = vsel %vm2249, %v2248, %v2246
    %s2251 = scalar_lea.vmem %s0, 187
    %v2252 = vld [vmem:[%s2251] sm:$0x40]
    %vm2253 = vcmask 1046534
    %v2254 = vsel %vm2253, %v2252, %v2250
    %s2255 = scalar_lea.vmem %s0, 218
    %v2256 = vld [vmem:[%s2255] sm:$0x80]
    %vm2257 = vcmask 1047559
    %v2258 = vsel %vm2257, %v2256, %v2254
    %2259 = vrot.lane.b32.xlu0 %v2258, 4
    %v2260 = vpop.permute.xlu0 %2259
    %vm2261 = vcmask 64544
    %2262 = vst.msk [vmem:[#allocation0] ss:$8 sm:$0xf] %vm2261, %v2260
    %2263 = vst.msk [vmem:[#allocation0] ss:$8 sm:$0xf0] %vm2261, %v2260
    %s2264 = scalar_lea.vmem %s0, 257
    %v2265 = vld [vmem:[%s2264] sm:$0x1]
    %s2266 = scalar_lea.vmem %s0, 288
    %v2267 = vld [vmem:[%s2266] sm:$0x2]
    %vm2268 = vcmask 1041409
    %v2269 = vsel %vm2268, %v2267, %v2265
    %s2270 = scalar_lea.vmem %s0, 319
    %v2271 = vld [vmem:[%s2270] sm:$0x4]
    %vm2272 = vcmask 1042434
    %v2273 = vsel %vm2272, %v2271, %v2269
    %s2274 = scalar_lea.vmem %s0, 350
    %v2275 = vld [vmem:[%s2274] sm:$0x8]
    %vm2276 = vcmask 1043459
    %v2277 = vsel %vm2276, %v2275, %v2273
    %s2278 = scalar_lea.vmem %s0, 381
    %v2279 = vld [vmem:[%s2278] sm:$0x10]
    %vm2280 = vcmask 1044484
    %v2281 = vsel %vm2280, %v2279, %v2277
    %s2282 = scalar_lea.vmem %s0, 412
    %v2283 = vld [vmem:[%s2282] sm:$0x20]
    %vm2284 = vcmask 1045509
    %v2285 = vsel %vm2284, %v2283, %v2281
    %s2286 = scalar_lea.vmem %s0, 443
    %v2287 = vld [vmem:[%s2286] sm:$0x40]
    %vm2288 = vcmask 1046534
    %v2289 = vsel %vm2288, %v2287, %v2285
    %s2290 = scalar_lea.vmem %s0, 474
    %v2291 = vld [vmem:[%s2290] sm:$0x80]
    %vm2292 = vcmask 1047559
    %v2293 = vsel %vm2292, %v2291, %v2289
    %2294 = vrot.lane.b32.xlu0 %v2293, 4
    %v2295 = vpop.permute.xlu0 %2294
    %vm2296 = vcmask 64544
    %s2297 = scalar_lea.vmem [#allocation0], 64
    %2298 = vst.msk [vmem:[%s2297] ss:$8 sm:$0xf] %vm2296, %v2295
    %s2299 = scalar_lea.vmem [#allocation0], 64
    %2300 = vst.msk [vmem:[%s2299] ss:$8 sm:$0xf0] %vm2296, %v2295
    %s2302 = sshll.u32 1, 1
    %s2303 = ssub.s32 %s2302, 1
    %v2305 = vld [vmem:[#allocation0] sm:%s2303]
    %s2306 = sshll.u32 1, 1
    %s2307 = ssub.s32 %s2306, 1
    %2308 = vst [vmem:[%s1] sm:%s2307] %v2305
    %s2309 = scalar_lea.vmem [#allocation0], 8
    %v2310 = vld [vmem:[%s2309] sm:%s2303]
    %s2311 = sshll.u32 1, 1
    %s2312 = ssub.s32 %s2311, 1
    %s2313 = scalar_lea.vmem %s1, 1
    %2314 = vst [vmem:[%s2313] sm:%s2312] %v2310
    %s2315 = scalar_lea.vmem [#allocation0], 16
    %v2316 = vld [vmem:[%s2315] sm:%s2303]
    %s2317 = sshll.u32 1, 1
    %s2318 = ssub.s32 %s2317, 1
    %s2319 = smul.addr 1, 2
    %s2320 = scalar_lea.vmem %s1, %s2319
    %2321 = vst [vmem:[%s2320] sm:%s2318] %v2316
    %s2322 = scalar_lea.vmem [#allocation0], 24
    %v2323 = vld [vmem:[%s2322] sm:%s2303]
    %s2324 = sshll.u32 1, 1
    %s2325 = ssub.s32 %s2324, 1
    %s2326 = smul.addr 1, 3
    %s2327 = scalar_lea.vmem %s1, %s2326
    %2328 = vst [vmem:[%s2327] sm:%s2325] %v2323
    %s2329 = scalar_lea.vmem [#allocation0], 32
    %v2330 = vld [vmem:[%s2329] sm:%s2303]
    %s2331 = sshll.u32 1, 1
    %s2332 = ssub.s32 %s2331, 1
    %s2333 = smul.addr 1, 4
    %s2334 = scalar_lea.vmem %s1, %s2333
    %2335 = vst [vmem:[%s2334] sm:%s2332] %v2330
    %s2336 = scalar_lea.vmem [#allocation0], 40
    %v2337 = vld [vmem:[%s2336] sm:%s2303]
    %s2338 = sshll.u32 1, 1
    %s2339 = ssub.s32 %s2338, 1
    %s2340 = smul.addr 1, 5
    %s2341 = scalar_lea.vmem %s1, %s2340
    %2342 = vst [vmem:[%s2341] sm:%s2339] %v2337
    %s2343 = scalar_lea.vmem [#allocation0], 48
    %v2344 = vld [vmem:[%s2343] sm:%s2303]
    %s2345 = sshll.u32 1, 1
    %s2346 = ssub.s32 %s2345, 1
    %s2347 = smul.addr 1, 6
    %s2348 = scalar_lea.vmem %s1, %s2347
    %2349 = vst [vmem:[%s2348] sm:%s2346] %v2344
    %s2350 = scalar_lea.vmem [#allocation0], 56
    %v2351 = vld [vmem:[%s2350] sm:%s2303]
    %s2352 = sshll.u32 1, 1
    %s2353 = ssub.s32 %s2352, 1
    %s2354 = smul.addr 1, 7
    %s2355 = scalar_lea.vmem %s1, %s2354
    %2356 = vst [vmem:[%s2355] sm:%s2353] %v2351
    %s2357 = scalar_lea.vmem [#allocation0], 64
    %v2358 = vld [vmem:[%s2357] sm:%s2303]
    %s2359 = sshll.u32 1, 1
    %s2360 = ssub.s32 %s2359, 1
    %s2361 = smul.addr 1, 8
    %s2362 = scalar_lea.vmem %s1, %s2361
    %2363 = vst [vmem:[%s2362] sm:%s2360] %v2358
    %s2364 = scalar_lea.vmem [#allocation0], 72
    %v2365 = vld [vmem:[%s2364] sm:%s2303]
    %s2366 = sshll.u32 1, 1
    %s2367 = ssub.s32 %s2366, 1
    %s2368 = smul.addr 1, 9
    %s2369 = scalar_lea.vmem %s1, %s2368
    %2370 = vst [vmem:[%s2369] sm:%s2367] %v2365
    %s2371 = scalar_lea.vmem [#allocation0], 80
    %v2372 = vld [vmem:[%s2371] sm:%s2303]
    %s2373 = sshll.u32 1, 1
    %s2374 = ssub.s32 %s2373, 1
    %s2375 = smul.addr 1, 10
    %s2376 = scalar_lea.vmem %s1, %s2375
    %2377 = vst [vmem:[%s2376] sm:%s2374] %v2372
    %s2378 = scalar_lea.vmem [#allocation0], 88
    %v2379 = vld [vmem:[%s2378] sm:%s2303]
    %s2380 = sshll.u32 1, 1
    %s2381 = ssub.s32 %s2380, 1
    %s2382 = smul.addr 1, 11
    %s2383 = scalar_lea.vmem %s1, %s2382
    %2384 = vst [vmem:[%s2383] sm:%s2381] %v2379
    %s2385 = scalar_lea.vmem [#allocation0], 96
    %v2386 = vld [vmem:[%s2385] sm:%s2303]
    %s2387 = sshll.u32 1, 1
    %s2388 = ssub.s32 %s2387, 1
    %s2389 = smul.addr 1, 12
    %s2390 = scalar_lea.vmem %s1, %s2389
    %2391 = vst [vmem:[%s2390] sm:%s2388] %v2386
    %s2392 = scalar_lea.vmem [#allocation0], 104
    %v2393 = vld [vmem:[%s2392] sm:%s2303]
    %s2394 = sshll.u32 1, 1
    %s2395 = ssub.s32 %s2394, 1
    %s2396 = smul.addr 1, 13
    %s2397 = scalar_lea.vmem %s1, %s2396
    %2398 = vst [vmem:[%s2397] sm:%s2395] %v2393
    %s2399 = scalar_lea.vmem [#allocation0], 112
    %v2400 = vld [vmem:[%s2399] sm:%s2303]
    %s2401 = sshll.u32 1, 1
    %s2402 = ssub.s32 %s2401, 1
    %s2403 = smul.addr 1, 14
    %s2404 = scalar_lea.vmem %s1, %s2403
    %2405 = vst [vmem:[%s2404] sm:%s2402] %v2400
    %s2406 = scalar_lea.vmem [#allocation0], 120
    %v2407 = vld [vmem:[%s2406] sm:%s2303]
    %s2408 = sshll.u32 1, 1
    %s2409 = ssub.s32 %s2408, 1
    %s2410 = smul.addr 1, 15
    %s2411 = scalar_lea.vmem %s1, %s2410
    %2412 = vst [vmem:[%s2411] sm:%s2409] %v2407

// kernel: _lambda_.4
$region0: #{_lambda_.4}
  #allocation0 [shape = 'u32[]', space=smem, size = 0x4, offset = 0x4, fixed_abs, tag = 'smem constant byte address 0x4 - core index']
  #allocation1 [shape = 'u32[144,128]{1,0:T(1,128)}', space=vmem, size = 0x12000, scoped, tag = 'internal scratch']
  %s0 = inlined_call_operand.vmem [shape: f32[8,2048], index: 0, kind: input, shape index: {}]
  %s1 = inlined_call_operand.vmem [shape: f32[9,2048], index: 1, kind: input, shape index: {}]
  %s2 = inlined_call_operand.vmem [shape: bf16[8,72], index: 2, kind: input, shape index: {}]
  %s3 = inlined_call_operand.vmem [shape: f32[8,1], index: 3, kind: input, shape index: {}]
  %s4 = inlined_call_operand.vmem [shape: bf16[8,72], index: 4, kind: input, shape index: {}]
  %s5 = inlined_call_operand.vmem [shape: f32[8,1], index: 5, kind: input, shape index: {}]
  %s6 = inlined_call_operand.vmem [shape: bf16[2,72], index: 6, kind: input, shape index: {}]
  %s7 = inlined_call_operand.vmem [shape: f32[2,1], index: 7, kind: input, shape index: {}]
  %s8 = inlined_call_operand.vmem [shape: f32[2,2048], index: 8, kind: output, shape index: {}]
  %s9 = sld [smem:[#allocation0]]
  $region42: #{_lambda_.4} parent=0
    _
  %s11 = ssub.s32 1, %s9
  %s12 = scalar_select 0, %s11, %s9
  // Predicated region
  $region2: #{_lambda_.4} parent=0 // pred_check
    _
  $region3: #{_lambda_.4} parent=0 // pred_check_branch
    %14 = sbr.rel (0) target = $region5
  $region4: #{_lambda_.4} parent=0 // pred_region
    _
  $region5: #{_lambda_.4} parent=0 // pred_fallthru
    _
  // Predicated region
  $region6: #{_lambda_.4} parent=0 // pred_check
    _
  $region7: #{_lambda_.4} parent=0 // pred_check_branch
    %16 = sbr.rel (0) target = $region9
  $region8: #{_lambda_.4} parent=0 // pred_region
    _
  $region9: #{_lambda_.4} parent=0 // pred_fallthru
    _
  // Predicated region
  $region10: #{_lambda_.4} parent=0 // pred_check
    _
  $region11: #{_lambda_.4} parent=0 // pred_check_branch
    %18 = sbr.rel (0) target = $region13
  $region12: #{_lambda_.4} parent=0 // pred_region
    _
  $region13: #{_lambda_.4} parent=0 // pred_fallthru
    _
  // Predicated region
  $region14: #{_lambda_.4} parent=0 // pred_check
    _
  $region15: #{_lambda_.4} parent=0 // pred_check_branch
    %20 = sbr.rel (0) target = $region17
  $region16: #{_lambda_.4} parent=0 // pred_region
    _
  $region17: #{_lambda_.4} parent=0 // pred_fallthru
    _
  // Predicated region
  $region18: #{_lambda_.4} parent=0 // pred_check
    _
  $region19: #{_lambda_.4} parent=0 // pred_check_branch
    %22 = sbr.rel (0) target = $region21
  $region20: #{_lambda_.4} parent=0 // pred_region
    _
  $region21: #{_lambda_.4} parent=0 // pred_fallthru
    _
  // Predicated region
  $region22: #{_lambda_.4} parent=0 // pred_check
    _
  $region23: #{_lambda_.4} parent=0 // pred_check_branch
    %24 = sbr.rel (0) target = $region25
  $region24: #{_lambda_.4} parent=0 // pred_region
    _
  $region25: #{_lambda_.4} parent=0 // pred_fallthru
    _
  // Predicated region
  $region26: #{_lambda_.4} parent=0 // pred_check
    _
  $region27: #{_lambda_.4} parent=0 // pred_check_branch
    %26 = sbr.rel (0) target = $region29
  $region28: #{_lambda_.4} parent=0 // pred_region
    _
  $region29: #{_lambda_.4} parent=0 // pred_fallthru
    _
  // Predicated region
  $region30: #{_lambda_.4} parent=0 // pred_check
    _
  $region31: #{_lambda_.4} parent=0 // pred_check_branch
    %28 = sbr.rel (0) target = $region33
  $region32: #{_lambda_.4} parent=0 // pred_region
    _
  $region33: #{_lambda_.4} parent=0 // pred_fallthru
    _
  %v30 = vld [vmem:[%s1] sm:$0xff]
  %v31 = vld [vmem:[%s1 + $0x8] sm:$0xff]
  %v32 = vld [vmem:[%s1 + $0x10] sm:$0xff]
  %v33 = vld [vmem:[%s1 + $0x18] sm:$0xff]
  %v34 = vld [vmem:[%s1 + $0x20] sm:$0xff]
  %v35 = vld [vmem:[%s1 + $0x28] sm:$0xff]
  %v36 = vld [vmem:[%s1 + $0x30] sm:$0xff]
  %v37 = vld [vmem:[%s1 + $0x38] sm:$0xff]
  %v38 = vld [vmem:[%s1 + $0x40] sm:$0xff]
  %v39 = vld [vmem:[%s1 + $0x48] sm:$0xff]
  %v40 = vld [vmem:[%s1 + $0x50] sm:$0xff]
  %v41 = vld [vmem:[%s1 + $0x58] sm:$0xff]
  %v42 = vld [vmem:[%s1 + $0x60] sm:$0xff]
  %v43 = vld [vmem:[%s1 + $0x68] sm:$0xff]
  %v44 = vld [vmem:[%s1 + $0x70] sm:$0xff]
  %v45 = vld [vmem:[%s1 + $0x78] sm:$0xff]
  %v46 = vld [vmem:[%s1 + $0x80] sm:$0x1]
  %v47 = vld [vmem:[%s1 + $0x88] sm:$0x1]
  %v48 = vld [vmem:[%s1 + $0x90] sm:$0x1]
  %v49 = vld [vmem:[%s1 + $0x98] sm:$0x1]
  %v50 = vld [vmem:[%s1 + $0xa0] sm:$0x1]
  %v51 = vld [vmem:[%s1 + $0xa8] sm:$0x1]
  %v52 = vld [vmem:[%s1 + $0xb0] sm:$0x1]
  %v53 = vld [vmem:[%s1 + $0xb8] sm:$0x1]
  %v54 = vld [vmem:[%s1 + $0xc0] sm:$0x1]
  %v55 = vld [vmem:[%s1 + $0xc8] sm:$0x1]
  %v56 = vld [vmem:[%s1 + $0xd0] sm:$0x1]
  %v57 = vld [vmem:[%s1 + $0xd8] sm:$0x1]
  %v58 = vld [vmem:[%s1 + $0xe0] sm:$0x1]
  %v59 = vld [vmem:[%s1 + $0xe8] sm:$0x1]
  %v60 = vld [vmem:[%s1 + $0xf0] sm:$0x1]
  %v61 = vld [vmem:[%s1 + $0xf8] sm:$0x1]
  %v62 = vld [vmem:[%s0] sm:$0xff]
  %v63 = vld [vmem:[%s0 + $0x8] sm:$0xff]
  %v64 = vld [vmem:[%s0 + $0x10] sm:$0xff]
  %v65 = vld [vmem:[%s0 + $0x18] sm:$0xff]
  %v66 = vld [vmem:[%s0 + $0x20] sm:$0xff]
  %v67 = vld [vmem:[%s0 + $0x28] sm:$0xff]
  %v68 = vld [vmem:[%s0 + $0x30] sm:$0xff]
  %v69 = vld [vmem:[%s0 + $0x38] sm:$0xff]
  %v70 = vld [vmem:[%s0 + $0x40] sm:$0xff]
  %v71 = vld [vmem:[%s0 + $0x48] sm:$0xff]
  %v72 = vld [vmem:[%s0 + $0x50] sm:$0xff]
  %v73 = vld [vmem:[%s0 + $0x58] sm:$0xff]
  %v74 = vld [vmem:[%s0 + $0x60] sm:$0xff]
  %v75 = vld [vmem:[%s0 + $0x68] sm:$0xff]
  %v76 = vld [vmem:[%s0 + $0x70] sm:$0xff]
  %v77 = vld [vmem:[%s0 + $0x78] sm:$0xff]
  %v78 = vld [vmem:[%s2] sm:$0xf]
  %v79 = vld [vmem:[%s3] sm:$0xff]
  %80 = vrot.lane.b32.xlu0 %v62, 17
  %v81 = vpop.permute.xlu0 %80
  %82 = vrot.lane.b32.xlu0 %v63, 17
  %v83 = vpop.permute.xlu0 %82
  %84 = vrot.lane.b32.xlu0 %v64, 17
  %v85 = vpop.permute.xlu0 %84
  %86 = vrot.lane.b32.xlu0 %v65, 17
  %v87 = vpop.permute.xlu0 %86
  %88 = vrot.lane.b32.xlu0 %v66, 17
  %v89 = vpop.permute.xlu0 %88
  %90 = vrot.lane.b32.xlu0 %v67, 17
  %v91 = vpop.permute.xlu0 %90
  %92 = vrot.lane.b32.xlu0 %v68, 17
  %v93 = vpop.permute.xlu0 %92
  %94 = vrot.lane.b32.xlu0 %v69, 17
  %v95 = vpop.permute.xlu0 %94
  %96 = vrot.lane.b32.xlu0 %v70, 17
  %v97 = vpop.permute.xlu0 %96
  %98 = vrot.lane.b32.xlu0 %v71, 17
  %v99 = vpop.permute.xlu0 %98
  %100 = vrot.lane.b32.xlu0 %v72, 17
  %v101 = vpop.permute.xlu0 %100
  %102 = vrot.lane.b32.xlu0 %v73, 17
  %v103 = vpop.permute.xlu0 %102
  %104 = vrot.lane.b32.xlu0 %v74, 17
  %v105 = vpop.permute.xlu0 %104
  %106 = vrot.lane.b32.xlu0 %v75, 17
  %v107 = vpop.permute.xlu0 %106
  %108 = vrot.lane.b32.xlu0 %v76, 17
  %v109 = vpop.permute.xlu0 %108
  %110 = vrot.lane.b32.xlu0 %v77, 17
  %v111 = vpop.permute.xlu0 %110
  %v112 = vlaneseq
  %v113 = vand.u32 %v112, 127
  %vm114 = vcmp.lt.s32.totalorder %v113, 17
  %v115 = vsel %vm114, %v109, %v111
  %v116 = vsel %vm114, %v107, %v109
  %v117 = vsel %vm114, %v105, %v107
  %v118 = vsel %vm114, %v103, %v105
  %v119 = vsel %vm114, %v101, %v103
  %v120 = vsel %vm114, %v99, %v101
  %v121 = vsel %vm114, %v97, %v99
  %v122 = vsel %vm114, %v95, %v97
  %v123 = vsel %vm114, %v93, %v95
  %v124 = vsel %vm114, %v91, %v93
  %v125 = vsel %vm114, %v89, %v91
  %v126 = vsel %vm114, %v87, %v89
  %v127 = vsel %vm114, %v85, %v87
  %v128 = vsel %vm114, %v83, %v85
  %v129 = vsel %vm114, %v81, %v83
  %v130 = vsel %vm114, %v111, %v81
  %v131 = vlaneseq
  %v132 = vshrl.u32 %v131, 7
  %v133 = vsub.s32 0, %v132
  %v134 = vrot.slane %v30, %v133
  %v135 = vlaneseq
  %v136 = vshrl.u32 %v135, 7
  %v137 = vsub.s32 0, %v136
  %v138 = vrot.slane %v31, %v137
  %v139 = vlaneseq
  %v140 = vshrl.u32 %v139, 7
  %v141 = vsub.s32 0, %v140
  %v142 = vrot.slane %v32, %v141
  %v143 = vlaneseq
  %v144 = vshrl.u32 %v143, 7
  %v145 = vsub.s32 0, %v144
  %v146 = vrot.slane %v33, %v145
  %v147 = vlaneseq
  %v148 = vshrl.u32 %v147, 7
  %v149 = vsub.s32 0, %v148
  %v150 = vrot.slane %v34, %v149
  %v151 = vlaneseq
  %v152 = vshrl.u32 %v151, 7
  %v153 = vsub.s32 0, %v152
  %v154 = vrot.slane %v35, %v153
  %v155 = vlaneseq
  %v156 = vshrl.u32 %v155, 7
  %v157 = vsub.s32 0, %v156
  %v158 = vrot.slane %v36, %v157
  %v159 = vlaneseq
  %v160 = vshrl.u32 %v159, 7
  %v161 = vsub.s32 0, %v160
  %v162 = vrot.slane %v37, %v161
  %v163 = vlaneseq
  %v164 = vshrl.u32 %v163, 7
  %v165 = vsub.s32 0, %v164
  %v166 = vrot.slane %v38, %v165
  %v167 = vlaneseq
  %v168 = vshrl.u32 %v167, 7
  %v169 = vsub.s32 0, %v168
  %v170 = vrot.slane %v39, %v169
  %v171 = vlaneseq
  %v172 = vshrl.u32 %v171, 7
  %v173 = vsub.s32 0, %v172
  %v174 = vrot.slane %v40, %v173
  %v175 = vlaneseq
  %v176 = vshrl.u32 %v175, 7
  %v177 = vsub.s32 0, %v176
  %v178 = vrot.slane %v41, %v177
  %v179 = vlaneseq
  %v180 = vshrl.u32 %v179, 7
  %v181 = vsub.s32 0, %v180
  %v182 = vrot.slane %v42, %v181
  %v183 = vlaneseq
  %v184 = vshrl.u32 %v183, 7
  %v185 = vsub.s32 0, %v184
  %v186 = vrot.slane %v43, %v185
  %v187 = vlaneseq
  %v188 = vshrl.u32 %v187, 7
  %v189 = vsub.s32 0, %v188
  %v190 = vrot.slane %v44, %v189
  %v191 = vlaneseq
  %v192 = vshrl.u32 %v191, 7
  %v193 = vsub.s32 0, %v192
  %v194 = vrot.slane %v45, %v193
  %v195 = vmul.f32 %v130, %v134
  %v196 = vmul.f32 %v129, %v138
  %v197 = vmul.f32 %v128, %v142
  %v198 = vmul.f32 %v127, %v146
  %v199 = vmul.f32 %v126, %v150
  %v200 = vmul.f32 %v125, %v154
  %v201 = vmul.f32 %v124, %v158
  %v202 = vmul.f32 %v123, %v162
  %v203 = vmul.f32 %v122, %v166
  %v204 = vmul.f32 %v121, %v170
  %v205 = vmul.f32 %v120, %v174
  %v206 = vmul.f32 %v119, %v178
  %v207 = vmul.f32 %v118, %v182
  %v208 = vmul.f32 %v117, %v186
  %v209 = vmul.f32 %v116, %v190
  %v210 = vmul.f32 %v115, %v194
  %211 = vrot.lane.b32.xlu0 %v62, 16
  %v212 = vpop.permute.xlu0 %211
  %213 = vrot.lane.b32.xlu0 %v63, 16
  %v214 = vpop.permute.xlu0 %213
  %215 = vrot.lane.b32.xlu0 %v64, 16
  %v216 = vpop.permute.xlu0 %215
  %217 = vrot.lane.b32.xlu0 %v65, 16
  %v218 = vpop.permute.xlu0 %217
  %219 = vrot.lane.b32.xlu0 %v66, 16
  %v220 = vpop.permute.xlu0 %219
  %221 = vrot.lane.b32.xlu0 %v67, 16
  %v222 = vpop.permute.xlu0 %221
  %223 = vrot.lane.b32.xlu0 %v68, 16
  %v224 = vpop.permute.xlu0 %223
  %225 = vrot.lane.b32.xlu0 %v69, 16
  %v226 = vpop.permute.xlu0 %225
  %227 = vrot.lane.b32.xlu0 %v70, 16
  %v228 = vpop.permute.xlu0 %227
  %229 = vrot.lane.b32.xlu0 %v71, 16
  %v230 = vpop.permute.xlu0 %229
  %231 = vrot.lane.b32.xlu0 %v72, 16
  %v232 = vpop.permute.xlu0 %231
  %233 = vrot.lane.b32.xlu0 %v73, 16
  %v234 = vpop.permute.xlu0 %233
  %235 = vrot.lane.b32.xlu0 %v74, 16
  %v236 = vpop.permute.xlu0 %235
  %237 = vrot.lane.b32.xlu0 %v75, 16
  %v238 = vpop.permute.xlu0 %237
  %239 = vrot.lane.b32.xlu0 %v76, 16
  %v240 = vpop.permute.xlu0 %239
  %241 = vrot.lane.b32.xlu0 %v77, 16
  %v242 = vpop.permute.xlu0 %241
  %vm243 = vcmp.lt.s32.totalorder %v113, 16
  %v244 = vsel %vm243, %v240, %v242
  %v245 = vsel %vm243, %v238, %v240
  %v246 = vsel %vm243, %v236, %v238
  %v247 = vsel %vm243, %v234, %v236
  %v248 = vsel %vm243, %v232, %v234
  %v249 = vsel %vm243, %v230, %v232
  %v250 = vsel %vm243, %v228, %v230
  %v251 = vsel %vm243, %v226, %v228
  %v252 = vsel %vm243, %v224, %v226
  %v253 = vsel %vm243, %v222, %v224
  %v254 = vsel %vm243, %v220, %v222
  %v255 = vsel %vm243, %v218, %v220
  %v256 = vsel %vm243, %v216, %v218
  %v257 = vsel %vm243, %v214, %v216
  %v258 = vsel %vm243, %v212, %v214
  %v259 = vsel %vm243, %v242, %v212
  %v260 = vlaneseq
  %v261 = vshrl.u32 %v260, 7
  %v262 = vsub.s32 1, %v261
  %v263 = vrot.slane %v30, %v262
  %v264 = vlaneseq
  %v265 = vshrl.u32 %v264, 7
  %v266 = vsub.s32 1, %v265
  %v267 = vrot.slane %v31, %v266
  %v268 = vlaneseq
  %v269 = vshrl.u32 %v268, 7
  %v270 = vsub.s32 1, %v269
  %v271 = vrot.slane %v32, %v270
  %v272 = vlaneseq
  %v273 = vshrl.u32 %v272, 7
  %v274 = vsub.s32 1, %v273
  %v275 = vrot.slane %v33, %v274
  %v276 = vlaneseq
  %v277 = vshrl.u32 %v276, 7
  %v278 = vsub.s32 1, %v277
  %v279 = vrot.slane %v34, %v278
  %v280 = vlaneseq
  %v281 = vshrl.u32 %v280, 7
  %v282 = vsub.s32 1, %v281
  %v283 = vrot.slane %v35, %v282
  %v284 = vlaneseq
  %v285 = vshrl.u32 %v284, 7
  %v286 = vsub.s32 1, %v285
  %v287 = vrot.slane %v36, %v286
  %v288 = vlaneseq
  %v289 = vshrl.u32 %v288, 7
  %v290 = vsub.s32 1, %v289
  %v291 = vrot.slane %v37, %v290
  %v292 = vlaneseq
  %v293 = vshrl.u32 %v292, 7
  %v294 = vsub.s32 1, %v293
  %v295 = vrot.slane %v38, %v294
  %v296 = vlaneseq
  %v297 = vshrl.u32 %v296, 7
  %v298 = vsub.s32 1, %v297
  %v299 = vrot.slane %v39, %v298
  %v300 = vlaneseq
  %v301 = vshrl.u32 %v300, 7
  %v302 = vsub.s32 1, %v301
  %v303 = vrot.slane %v40, %v302
  %v304 = vlaneseq
  %v305 = vshrl.u32 %v304, 7
  %v306 = vsub.s32 1, %v305
  %v307 = vrot.slane %v41, %v306
  %v308 = vlaneseq
  %v309 = vshrl.u32 %v308, 7
  %v310 = vsub.s32 1, %v309
  %v311 = vrot.slane %v42, %v310
  %v312 = vlaneseq
  %v313 = vshrl.u32 %v312, 7
  %v314 = vsub.s32 1, %v313
  %v315 = vrot.slane %v43, %v314
  %v316 = vlaneseq
  %v317 = vshrl.u32 %v316, 7
  %v318 = vsub.s32 1, %v317
  %v319 = vrot.slane %v44, %v318
  %v320 = vlaneseq
  %v321 = vshrl.u32 %v320, 7
  %v322 = vsub.s32 1, %v321
  %v323 = vrot.slane %v45, %v322
  %v324 = vmul.f32 %v259, %v263
  %v325 = vmul.f32 %v258, %v267
  %v326 = vmul.f32 %v257, %v271
  %v327 = vmul.f32 %v256, %v275
  %v328 = vmul.f32 %v255, %v279
  %v329 = vmul.f32 %v254, %v283
  %v330 = vmul.f32 %v253, %v287
  %v331 = vmul.f32 %v252, %v291
  %v332 = vmul.f32 %v251, %v295
  %v333 = vmul.f32 %v250, %v299
  %v334 = vmul.f32 %v249, %v303
  %v335 = vmul.f32 %v248, %v307
  %v336 = vmul.f32 %v247, %v311
  %v337 = vmul.f32 %v246, %v315
  %v338 = vmul.f32 %v245, %v319
  %v339 = vmul.f32 %v244, %v323
  %340 = vrot.lane.b32.xlu0 %v62, 15
  %v341 = vpop.permute.xlu0 %340
  %342 = vrot.lane.b32.xlu0 %v63, 15
  %v343 = vpop.permute.xlu0 %342
  %344 = vrot.lane.b32.xlu0 %v64, 15
  %v345 = vpop.permute.xlu0 %344
  %346 = vrot.lane.b32.xlu0 %v65, 15
  %v347 = vpop.permute.xlu0 %346
  %348 = vrot.lane.b32.xlu0 %v66, 15
  %v349 = vpop.permute.xlu0 %348
  %350 = vrot.lane.b32.xlu0 %v67, 15
  %v351 = vpop.permute.xlu0 %350
  %352 = vrot.lane.b32.xlu0 %v68, 15
  %v353 = vpop.permute.xlu0 %352
  %354 = vrot.lane.b32.xlu0 %v69, 15
  %v355 = vpop.permute.xlu0 %354
  %356 = vrot.lane.b32.xlu0 %v70, 15
  %v357 = vpop.permute.xlu0 %356
  %358 = vrot.lane.b32.xlu0 %v71, 15
  %v359 = vpop.permute.xlu0 %358
  %360 = vrot.lane.b32.xlu0 %v72, 15
  %v361 = vpop.permute.xlu0 %360
  %362 = vrot.lane.b32.xlu0 %v73, 15
  %v363 = vpop.permute.xlu0 %362
  %364 = vrot.lane.b32.xlu0 %v74, 15
  %v365 = vpop.permute.xlu0 %364
  %366 = vrot.lane.b32.xlu0 %v75, 15
  %v367 = vpop.permute.xlu0 %366
  %368 = vrot.lane.b32.xlu0 %v76, 15
  %v369 = vpop.permute.xlu0 %368
  %370 = vrot.lane.b32.xlu0 %v77, 15
  %v371 = vpop.permute.xlu0 %370
  %vm372 = vcmp.lt.s32.totalorder %v113, 15
  %v373 = vsel %vm372, %v369, %v371
  %v374 = vsel %vm372, %v367, %v369
  %v375 = vsel %vm372, %v365, %v367
  %v376 = vsel %vm372, %v363, %v365
  %v377 = vsel %vm372, %v361, %v363
  %v378 = vsel %vm372, %v359, %v361
  %v379 = vsel %vm372, %v357, %v359
  %v380 = vsel %vm372, %v355, %v357
  %v381 = vsel %vm372, %v353, %v355
  %v382 = vsel %vm372, %v351, %v353
  %v383 = vsel %vm372, %v349, %v351
  %v384 = vsel %vm372, %v347, %v349
  %v385 = vsel %vm372, %v345, %v347
  %v386 = vsel %vm372, %v343, %v345
  %v387 = vsel %vm372, %v341, %v343
  %v388 = vsel %vm372, %v371, %v341
  %v389 = vlaneseq
  %v390 = vshrl.u32 %v389, 7
  %v391 = vsub.s32 2, %v390
  %v392 = vrot.slane %v30, %v391
  %v393 = vlaneseq
  %v394 = vshrl.u32 %v393, 7
  %v395 = vsub.s32 2, %v394
  %v396 = vrot.slane %v31, %v395
  %v397 = vlaneseq
  %v398 = vshrl.u32 %v397, 7
  %v399 = vsub.s32 2, %v398
  %v400 = vrot.slane %v32, %v399
  %v401 = vlaneseq
  %v402 = vshrl.u32 %v401, 7
  %v403 = vsub.s32 2, %v402
  %v404 = vrot.slane %v33, %v403
  %v405 = vlaneseq
  %v406 = vshrl.u32 %v405, 7
  %v407 = vsub.s32 2, %v406
  %v408 = vrot.slane %v34, %v407
  %v409 = vlaneseq
  %v410 = vshrl.u32 %v409, 7
  %v411 = vsub.s32 2, %v410
  %v412 = vrot.slane %v35, %v411
  %v413 = vlaneseq
  %v414 = vshrl.u32 %v413, 7
  %v415 = vsub.s32 2, %v414
  %v416 = vrot.slane %v36, %v415
  %v417 = vlaneseq
  %v418 = vshrl.u32 %v417, 7
  %v419 = vsub.s32 2, %v418
  %v420 = vrot.slane %v37, %v419
  %v421 = vlaneseq
  %v422 = vshrl.u32 %v421, 7
  %v423 = vsub.s32 2, %v422
  %v424 = vrot.slane %v38, %v423
  %v425 = vlaneseq
  %v426 = vshrl.u32 %v425, 7
  %v427 = vsub.s32 2, %v426
  %v428 = vrot.slane %v39, %v427
  %v429 = vlaneseq
  %v430 = vshrl.u32 %v429, 7
  %v431 = vsub.s32 2, %v430
  %v432 = vrot.slane %v40, %v431
  %v433 = vlaneseq
  %v434 = vshrl.u32 %v433, 7
  %v435 = vsub.s32 2, %v434
  %v436 = vrot.slane %v41, %v435
  %v437 = vlaneseq
  %v438 = vshrl.u32 %v437, 7
  %v439 = vsub.s32 2, %v438
  %v440 = vrot.slane %v42, %v439
  %v441 = vlaneseq
  %v442 = vshrl.u32 %v441, 7
  %v443 = vsub.s32 2, %v442
  %v444 = vrot.slane %v43, %v443
  %v445 = vlaneseq
  %v446 = vshrl.u32 %v445, 7
  %v447 = vsub.s32 2, %v446
  %v448 = vrot.slane %v44, %v447
  %v449 = vlaneseq
  %v450 = vshrl.u32 %v449, 7
  %v451 = vsub.s32 2, %v450
  %v452 = vrot.slane %v45, %v451
  %v453 = vmul.f32 %v388, %v392
  %v454 = vmul.f32 %v387, %v396
  %v455 = vmul.f32 %v386, %v400
  %v456 = vmul.f32 %v385, %v404
  %v457 = vmul.f32 %v384, %v408
  %v458 = vmul.f32 %v383, %v412
  %v459 = vmul.f32 %v382, %v416
  %v460 = vmul.f32 %v381, %v420
  %v461 = vmul.f32 %v380, %v424
  %v462 = vmul.f32 %v379, %v428
  %v463 = vmul.f32 %v378, %v432
  %v464 = vmul.f32 %v377, %v436
  %v465 = vmul.f32 %v376, %v440
  %v466 = vmul.f32 %v375, %v444
  %v467 = vmul.f32 %v374, %v448
  %v468 = vmul.f32 %v373, %v452
  %469 = vrot.lane.b32.xlu0 %v62, 1
  %v470 = vpop.permute.xlu0 %469
  %471 = vrot.lane.b32.xlu0 %v63, 1
  %v472 = vpop.permute.xlu0 %471
  %473 = vrot.lane.b32.xlu0 %v64, 1
  %v474 = vpop.permute.xlu0 %473
  %475 = vrot.lane.b32.xlu0 %v65, 1
  %v476 = vpop.permute.xlu0 %475
  %477 = vrot.lane.b32.xlu0 %v66, 1
  %v478 = vpop.permute.xlu0 %477
  %479 = vrot.lane.b32.xlu0 %v67, 1
  %v480 = vpop.permute.xlu0 %479
  %481 = vrot.lane.b32.xlu0 %v68, 1
  %v482 = vpop.permute.xlu0 %481
  %483 = vrot.lane.b32.xlu0 %v69, 1
  %v484 = vpop.permute.xlu0 %483
  %485 = vrot.lane.b32.xlu0 %v70, 1
  %v486 = vpop.permute.xlu0 %485
  %487 = vrot.lane.b32.xlu0 %v71, 1
  %v488 = vpop.permute.xlu0 %487
  %489 = vrot.lane.b32.xlu0 %v72, 1
  %v490 = vpop.permute.xlu0 %489
  %491 = vrot.lane.b32.xlu0 %v73, 1
  %v492 = vpop.permute.xlu0 %491
  %493 = vrot.lane.b32.xlu0 %v74, 1
  %v494 = vpop.permute.xlu0 %493
  %495 = vrot.lane.b32.xlu0 %v75, 1
  %v496 = vpop.permute.xlu0 %495
  %497 = vrot.lane.b32.xlu0 %v76, 1
  %v498 = vpop.permute.xlu0 %497
  %499 = vrot.lane.b32.xlu0 %v77, 1
  %v500 = vpop.permute.xlu0 %499
  %vm501 = vcmp.lt.s32.totalorder %v113, 1
  %v502 = vsel %vm501, %v498, %v500
  %v503 = vsel %vm501, %v496, %v498
  %v504 = vsel %vm501, %v494, %v496
  %v505 = vsel %vm501, %v492, %v494
  %v506 = vsel %vm501, %v490, %v492
  %v507 = vsel %vm501, %v488, %v490
  %v508 = vsel %vm501, %v486, %v488
  %v509 = vsel %vm501, %v484, %v486
  %v510 = vsel %vm501, %v482, %v484
  %v511 = vsel %vm501, %v480, %v482
  %v512 = vsel %vm501, %v478, %v480
  %v513 = vsel %vm501, %v476, %v478
  %v514 = vsel %vm501, %v474, %v476
  %v515 = vsel %vm501, %v472, %v474
  %v516 = vsel %vm501, %v470, %v472
  %v517 = vsel %vm501, %v500, %v470
  %v518 = vlaneseq
  %v519 = vshrl.u32 %v518, 7
  %v520 = vsub.s32 3, %v519
  %v521 = vrot.slane %v30, %v520
  %v522 = vlaneseq
  %v523 = vshrl.u32 %v522, 7
  %v524 = vsub.s32 3, %v523
  %v525 = vrot.slane %v31, %v524
  %v526 = vlaneseq
  %v527 = vshrl.u32 %v526, 7
  %v528 = vsub.s32 3, %v527
  %v529 = vrot.slane %v32, %v528
  %v530 = vlaneseq
  %v531 = vshrl.u32 %v530, 7
  %v532 = vsub.s32 3, %v531
  %v533 = vrot.slane %v33, %v532
  %v534 = vlaneseq
  %v535 = vshrl.u32 %v534, 7
  %v536 = vsub.s32 3, %v535
  %v537 = vrot.slane %v34, %v536
  %v538 = vlaneseq
  %v539 = vshrl.u32 %v538, 7
  %v540 = vsub.s32 3, %v539
  %v541 = vrot.slane %v35, %v540
  %v542 = vlaneseq
  %v543 = vshrl.u32 %v542, 7
  %v544 = vsub.s32 3, %v543
  %v545 = vrot.slane %v36, %v544
  %v546 = vlaneseq
  %v547 = vshrl.u32 %v546, 7
  %v548 = vsub.s32 3, %v547
  %v549 = vrot.slane %v37, %v548
  %v550 = vlaneseq
  %v551 = vshrl.u32 %v550, 7
  %v552 = vsub.s32 3, %v551
  %v553 = vrot.slane %v38, %v552
  %v554 = vlaneseq
  %v555 = vshrl.u32 %v554, 7
  %v556 = vsub.s32 3, %v555
  %v557 = vrot.slane %v39, %v556
  %v558 = vlaneseq
  %v559 = vshrl.u32 %v558, 7
  %v560 = vsub.s32 3, %v559
  %v561 = vrot.slane %v40, %v560
  %v562 = vlaneseq
  %v563 = vshrl.u32 %v562, 7
  %v564 = vsub.s32 3, %v563
  %v565 = vrot.slane %v41, %v564
  %v566 = vlaneseq
  %v567 = vshrl.u32 %v566, 7
  %v568 = vsub.s32 3, %v567
  %v569 = vrot.slane %v42, %v568
  %v570 = vlaneseq
  %v571 = vshrl.u32 %v570, 7
  %v572 = vsub.s32 3, %v571
  %v573 = vrot.slane %v43, %v572
  %v574 = vlaneseq
  %v575 = vshrl.u32 %v574, 7
  %v576 = vsub.s32 3, %v575
  %v577 = vrot.slane %v44, %v576
  %v578 = vlaneseq
  %v579 = vshrl.u32 %v578, 7
  %v580 = vsub.s32 3, %v579
  %v581 = vrot.slane %v45, %v580
  %v582 = vmul.f32 %v517, %v521
  %v583 = vmul.f32 %v516, %v525
  %v584 = vmul.f32 %v515, %v529
  %v585 = vmul.f32 %v514, %v533
  %v586 = vmul.f32 %v513, %v537
  %v587 = vmul.f32 %v512, %v541
  %v588 = vmul.f32 %v511, %v545
  %v589 = vmul.f32 %v510, %v549
  %v590 = vmul.f32 %v509, %v553
  %v591 = vmul.f32 %v508, %v557
  %v592 = vmul.f32 %v507, %v561
  %v593 = vmul.f32 %v506, %v565
  %v594 = vmul.f32 %v505, %v569
  %v595 = vmul.f32 %v504, %v573
  %v596 = vmul.f32 %v503, %v577
  %v597 = vmul.f32 %v502, %v581
  %598 = vrot.lane.b32.xlu0 %v62, 127
  %v599 = vpop.permute.xlu0 %598
  %600 = vrot.lane.b32.xlu0 %v63, 127
  %v601 = vpop.permute.xlu0 %600
  %602 = vrot.lane.b32.xlu0 %v64, 127
  %v603 = vpop.permute.xlu0 %602
  %604 = vrot.lane.b32.xlu0 %v65, 127
  %v605 = vpop.permute.xlu0 %604
  %606 = vrot.lane.b32.xlu0 %v66, 127
  %v607 = vpop.permute.xlu0 %606
  %608 = vrot.lane.b32.xlu0 %v67, 127
  %v609 = vpop.permute.xlu0 %608
  %610 = vrot.lane.b32.xlu0 %v68, 127
  %v611 = vpop.permute.xlu0 %610
  %612 = vrot.lane.b32.xlu0 %v69, 127
  %v613 = vpop.permute.xlu0 %612
  %614 = vrot.lane.b32.xlu0 %v70, 127
  %v615 = vpop.permute.xlu0 %614
  %616 = vrot.lane.b32.xlu0 %v71, 127
  %v617 = vpop.permute.xlu0 %616
  %618 = vrot.lane.b32.xlu0 %v72, 127
  %v619 = vpop.permute.xlu0 %618
  %620 = vrot.lane.b32.xlu0 %v73, 127
  %v621 = vpop.permute.xlu0 %620
  %622 = vrot.lane.b32.xlu0 %v74, 127
  %v623 = vpop.permute.xlu0 %622
  %624 = vrot.lane.b32.xlu0 %v75, 127
  %v625 = vpop.permute.xlu0 %624
  %626 = vrot.lane.b32.xlu0 %v76, 127
  %v627 = vpop.permute.xlu0 %626
  %628 = vrot.lane.b32.xlu0 %v77, 127
  %v629 = vpop.permute.xlu0 %628
  %vm630 = vcmp.lt.s32.totalorder %v113, 127
  %v631 = vsel %vm630, %v627, %v629
  %v632 = vsel %vm630, %v625, %v627
  %v633 = vsel %vm630, %v623, %v625
  %v634 = vsel %vm630, %v621, %v623
  %v635 = vsel %vm630, %v619, %v621
  %v636 = vsel %vm630, %v617, %v619
  %v637 = vsel %vm630, %v615, %v617
  %v638 = vsel %vm630, %v613, %v615
  %v639 = vsel %vm630, %v611, %v613
  %v640 = vsel %vm630, %v609, %v611
  %v641 = vsel %vm630, %v607, %v609
  %v642 = vsel %vm630, %v605, %v607
  %v643 = vsel %vm630, %v603, %v605
  %v644 = vsel %vm630, %v601, %v603
  %v645 = vsel %vm630, %v599, %v601
  %v646 = vsel %vm630, %v629, %v599
  %v647 = vlaneseq
  %v648 = vshrl.u32 %v647, 7
  %v649 = vsub.s32 5, %v648
  %v650 = vrot.slane %v30, %v649
  %v651 = vlaneseq
  %v652 = vshrl.u32 %v651, 7
  %v653 = vsub.s32 5, %v652
  %v654 = vrot.slane %v31, %v653
  %v655 = vlaneseq
  %v656 = vshrl.u32 %v655, 7
  %v657 = vsub.s32 5, %v656
  %v658 = vrot.slane %v32, %v657
  %v659 = vlaneseq
  %v660 = vshrl.u32 %v659, 7
  %v661 = vsub.s32 5, %v660
  %v662 = vrot.slane %v33, %v661
  %v663 = vlaneseq
  %v664 = vshrl.u32 %v663, 7
  %v665 = vsub.s32 5, %v664
  %v666 = vrot.slane %v34, %v665
  %v667 = vlaneseq
  %v668 = vshrl.u32 %v667, 7
  %v669 = vsub.s32 5, %v668
  %v670 = vrot.slane %v35, %v669
  %v671 = vlaneseq
  %v672 = vshrl.u32 %v671, 7
  %v673 = vsub.s32 5, %v672
  %v674 = vrot.slane %v36, %v673
  %v675 = vlaneseq
  %v676 = vshrl.u32 %v675, 7
  %v677 = vsub.s32 5, %v676
  %v678 = vrot.slane %v37, %v677
  %v679 = vlaneseq
  %v680 = vshrl.u32 %v679, 7
  %v681 = vsub.s32 5, %v680
  %v682 = vrot.slane %v38, %v681
  %v683 = vlaneseq
  %v684 = vshrl.u32 %v683, 7
  %v685 = vsub.s32 5, %v684
  %v686 = vrot.slane %v39, %v685
  %v687 = vlaneseq
  %v688 = vshrl.u32 %v687, 7
  %v689 = vsub.s32 5, %v688
  %v690 = vrot.slane %v40, %v689
  %v691 = vlaneseq
  %v692 = vshrl.u32 %v691, 7
  %v693 = vsub.s32 5, %v692
  %v694 = vrot.slane %v41, %v693
  %v695 = vlaneseq
  %v696 = vshrl.u32 %v695, 7
  %v697 = vsub.s32 5, %v696
  %v698 = vrot.slane %v42, %v697
  %v699 = vlaneseq
  %v700 = vshrl.u32 %v699, 7
  %v701 = vsub.s32 5, %v700
  %v702 = vrot.slane %v43, %v701
  %v703 = vlaneseq
  %v704 = vshrl.u32 %v703, 7
  %v705 = vsub.s32 5, %v704
  %v706 = vrot.slane %v44, %v705
  %v707 = vlaneseq
  %v708 = vshrl.u32 %v707, 7
  %v709 = vsub.s32 5, %v708
  %v710 = vrot.slane %v45, %v709
  %v711 = vmul.f32 %v645, %v650
  %v712 = vmul.f32 %v644, %v654
  %v713 = vmul.f32 %v643, %v658
  %v714 = vmul.f32 %v642, %v662
  %v715 = vmul.f32 %v641, %v666
  %v716 = vmul.f32 %v640, %v670
  %v717 = vmul.f32 %v639, %v674
  %v718 = vmul.f32 %v638, %v678
  %v719 = vmul.f32 %v637, %v682
  %v720 = vmul.f32 %v636, %v686
  %v721 = vmul.f32 %v635, %v690
  %v722 = vmul.f32 %v634, %v694
  %v723 = vmul.f32 %v633, %v698
  %v724 = vmul.f32 %v632, %v702
  %v725 = vmul.f32 %v631, %v706
  %v726 = vmul.f32 %v646, %v710
  %727 = vrot.lane.b32.xlu0 %v62, 113
  %v728 = vpop.permute.xlu0 %727
  %729 = vrot.lane.b32.xlu0 %v63, 113
  %v730 = vpop.permute.xlu0 %729
  %731 = vrot.lane.b32.xlu0 %v64, 113
  %v732 = vpop.permute.xlu0 %731
  %733 = vrot.lane.b32.xlu0 %v65, 113
  %v734 = vpop.permute.xlu0 %733
  %735 = vrot.lane.b32.xlu0 %v66, 113
  %v736 = vpop.permute.xlu0 %735
  %737 = vrot.lane.b32.xlu0 %v67, 113
  %v738 = vpop.permute.xlu0 %737
  %739 = vrot.lane.b32.xlu0 %v68, 113
  %v740 = vpop.permute.xlu0 %739
  %741 = vrot.lane.b32.xlu0 %v69, 113
  %v742 = vpop.permute.xlu0 %741
  %743 = vrot.lane.b32.xlu0 %v70, 113
  %v744 = vpop.permute.xlu0 %743
  %745 = vrot.lane.b32.xlu0 %v71, 113
  %v746 = vpop.permute.xlu0 %745
  %747 = vrot.lane.b32.xlu0 %v72, 113
  %v748 = vpop.permute.xlu0 %747
  %749 = vrot.lane.b32.xlu0 %v73, 113
  %v750 = vpop.permute.xlu0 %749
  %751 = vrot.lane.b32.xlu0 %v74, 113
  %v752 = vpop.permute.xlu0 %751
  %753 = vrot.lane.b32.xlu0 %v75, 113
  %v754 = vpop.permute.xlu0 %753
  %755 = vrot.lane.b32.xlu0 %v76, 113
  %v756 = vpop.permute.xlu0 %755
  %757 = vrot.lane.b32.xlu0 %v77, 113
  %v758 = vpop.permute.xlu0 %757
  %vm759 = vcmp.lt.s32.totalorder %v113, 113
  %v760 = vsel %vm759, %v756, %v758
  %v761 = vsel %vm759, %v754, %v756
  %v762 = vsel %vm759, %v752, %v754
  %v763 = vsel %vm759, %v750, %v752
  %v764 = vsel %vm759, %v748, %v750
  %v765 = vsel %vm759, %v746, %v748
  %v766 = vsel %vm759, %v744, %v746
  %v767 = vsel %vm759, %v742, %v744
  %v768 = vsel %vm759, %v740, %v742
  %v769 = vsel %vm759, %v738, %v740
  %v770 = vsel %vm759, %v736, %v738
  %v771 = vsel %vm759, %v734, %v736
  %v772 = vsel %vm759, %v732, %v734
  %v773 = vsel %vm759, %v730, %v732
  %v774 = vsel %vm759, %v728, %v730
  %v775 = vsel %vm759, %v758, %v728
  %v776 = vlaneseq
  %v777 = vshrl.u32 %v776, 7
  %v778 = vsub.s32 6, %v777
  %v779 = vrot.slane %v30, %v778
  %v780 = vlaneseq
  %v781 = vshrl.u32 %v780, 7
  %v782 = vsub.s32 6, %v781
  %v783 = vrot.slane %v31, %v782
  %v784 = vlaneseq
  %v785 = vshrl.u32 %v784, 7
  %v786 = vsub.s32 6, %v785
  %v787 = vrot.slane %v32, %v786
  %v788 = vlaneseq
  %v789 = vshrl.u32 %v788, 7
  %v790 = vsub.s32 6, %v789
  %v791 = vrot.slane %v33, %v790
  %v792 = vlaneseq
  %v793 = vshrl.u32 %v792, 7
  %v794 = vsub.s32 6, %v793
  %v795 = vrot.slane %v34, %v794
  %v796 = vlaneseq
  %v797 = vshrl.u32 %v796, 7
  %v798 = vsub.s32 6, %v797
  %v799 = vrot.slane %v35, %v798
  %v800 = vlaneseq
  %v801 = vshrl.u32 %v800, 7
  %v802 = vsub.s32 6, %v801
  %v803 = vrot.slane %v36, %v802
  %v804 = vlaneseq
  %v805 = vshrl.u32 %v804, 7
  %v806 = vsub.s32 6, %v805
  %v807 = vrot.slane %v37, %v806
  %v808 = vlaneseq
  %v809 = vshrl.u32 %v808, 7
  %v810 = vsub.s32 6, %v809
  %v811 = vrot.slane %v38, %v810
  %v812 = vlaneseq
  %v813 = vshrl.u32 %v812, 7
  %v814 = vsub.s32 6, %v813
  %v815 = vrot.slane %v39, %v814
  %v816 = vlaneseq
  %v817 = vshrl.u32 %v816, 7
  %v818 = vsub.s32 6, %v817
  %v819 = vrot.slane %v40, %v818
  %v820 = vlaneseq
  %v821 = vshrl.u32 %v820, 7
  %v822 = vsub.s32 6, %v821
  %v823 = vrot.slane %v41, %v822
  %v824 = vlaneseq
  %v825 = vshrl.u32 %v824, 7
  %v826 = vsub.s32 6, %v825
  %v827 = vrot.slane %v42, %v826
  %v828 = vlaneseq
  %v829 = vshrl.u32 %v828, 7
  %v830 = vsub.s32 6, %v829
  %v831 = vrot.slane %v43, %v830
  %v832 = vlaneseq
  %v833 = vshrl.u32 %v832, 7
  %v834 = vsub.s32 6, %v833
  %v835 = vrot.slane %v44, %v834
  %v836 = vlaneseq
  %v837 = vshrl.u32 %v836, 7
  %v838 = vsub.s32 6, %v837
  %v839 = vrot.slane %v45, %v838
  %v840 = vmul.f32 %v774, %v779
  %v841 = vmul.f32 %v773, %v783
  %v842 = vmul.f32 %v772, %v787
  %v843 = vmul.f32 %v771, %v791
  %v844 = vmul.f32 %v770, %v795
  %v845 = vmul.f32 %v769, %v799
  %v846 = vmul.f32 %v768, %v803
  %v847 = vmul.f32 %v767, %v807
  %v848 = vmul.f32 %v766, %v811
  %v849 = vmul.f32 %v765, %v815
  %v850 = vmul.f32 %v764, %v819
  %v851 = vmul.f32 %v763, %v823
  %v852 = vmul.f32 %v762, %v827
  %v853 = vmul.f32 %v761, %v831
  %v854 = vmul.f32 %v760, %v835
  %v855 = vmul.f32 %v775, %v839
  %856 = vrot.lane.b32.xlu0 %v62, 112
  %v857 = vpop.permute.xlu0 %856
  %858 = vrot.lane.b32.xlu0 %v63, 112
  %v859 = vpop.permute.xlu0 %858
  %860 = vrot.lane.b32.xlu0 %v64, 112
  %v861 = vpop.permute.xlu0 %860
  %862 = vrot.lane.b32.xlu0 %v65, 112
  %v863 = vpop.permute.xlu0 %862
  %864 = vrot.lane.b32.xlu0 %v66, 112
  %v865 = vpop.permute.xlu0 %864
  %866 = vrot.lane.b32.xlu0 %v67, 112
  %v867 = vpop.permute.xlu0 %866
  %868 = vrot.lane.b32.xlu0 %v68, 112
  %v869 = vpop.permute.xlu0 %868
  %870 = vrot.lane.b32.xlu0 %v69, 112
  %v871 = vpop.permute.xlu0 %870
  %872 = vrot.lane.b32.xlu0 %v70, 112
  %v873 = vpop.permute.xlu0 %872
  %874 = vrot.lane.b32.xlu0 %v71, 112
  %v875 = vpop.permute.xlu0 %874
  %876 = vrot.lane.b32.xlu0 %v72, 112
  %v877 = vpop.permute.xlu0 %876
  %878 = vrot.lane.b32.xlu0 %v73, 112
  %v879 = vpop.permute.xlu0 %878
  %880 = vrot.lane.b32.xlu0 %v74, 112
  %v881 = vpop.permute.xlu0 %880
  %882 = vrot.lane.b32.xlu0 %v75, 112
  %v883 = vpop.permute.xlu0 %882
  %884 = vrot.lane.b32.xlu0 %v76, 112
  %v885 = vpop.permute.xlu0 %884
  %886 = vrot.lane.b32.xlu0 %v77, 112
  %v887 = vpop.permute.xlu0 %886
  %vm888 = vcmp.lt.s32.totalorder %v113, 112
  %v889 = vsel %vm888, %v885, %v887
  %v890 = vsel %vm888, %v883, %v885
  %v891 = vsel %vm888, %v881, %v883
  %v892 = vsel %vm888, %v879, %v881
  %v893 = vsel %vm888, %v877, %v879
  %v894 = vsel %vm888, %v875, %v877
  %v895 = vsel %vm888, %v873, %v875
  %v896 = vsel %vm888, %v871, %v873
  %v897 = vsel %vm888, %v869, %v871
  %v898 = vsel %vm888, %v867, %v869
  %v899 = vsel %vm888, %v865, %v867
  %v900 = vsel %vm888, %v863, %v865
  %v901 = vsel %vm888, %v861, %v863
  %v902 = vsel %vm888, %v859, %v861
  %v903 = vsel %vm888, %v857, %v859
  %v904 = vsel %vm888, %v887, %v857
  %v905 = vlaneseq
  %v906 = vshrl.u32 %v905, 7
  %v907 = vsub.s32 7, %v906
  %v908 = vrot.slane %v30, %v907
  %v909 = vlaneseq
  %v910 = vshrl.u32 %v909, 7
  %v911 = vsub.s32 7, %v910
  %v912 = vrot.slane %v31, %v911
  %v913 = vlaneseq
  %v914 = vshrl.u32 %v913, 7
  %v915 = vsub.s32 7, %v914
  %v916 = vrot.slane %v32, %v915
  %v917 = vlaneseq
  %v918 = vshrl.u32 %v917, 7
  %v919 = vsub.s32 7, %v918
  %v920 = vrot.slane %v33, %v919
  %v921 = vlaneseq
  %v922 = vshrl.u32 %v921, 7
  %v923 = vsub.s32 7, %v922
  %v924 = vrot.slane %v34, %v923
  %v925 = vlaneseq
  %v926 = vshrl.u32 %v925, 7
  %v927 = vsub.s32 7, %v926
  %v928 = vrot.slane %v35, %v927
  %v929 = vlaneseq
  %v930 = vshrl.u32 %v929, 7
  %v931 = vsub.s32 7, %v930
  %v932 = vrot.slane %v36, %v931
  %v933 = vlaneseq
  %v934 = vshrl.u32 %v933, 7
  %v935 = vsub.s32 7, %v934
  %v936 = vrot.slane %v37, %v935
  %v937 = vlaneseq
  %v938 = vshrl.u32 %v937, 7
  %v939 = vsub.s32 7, %v938
  %v940 = vrot.slane %v38, %v939
  %v941 = vlaneseq
  %v942 = vshrl.u32 %v941, 7
  %v943 = vsub.s32 7, %v942
  %v944 = vrot.slane %v39, %v943
  %v945 = vlaneseq
  %v946 = vshrl.u32 %v945, 7
  %v947 = vsub.s32 7, %v946
  %v948 = vrot.slane %v40, %v947
  %v949 = vlaneseq
  %v950 = vshrl.u32 %v949, 7
  %v951 = vsub.s32 7, %v950
  %v952 = vrot.slane %v41, %v951
  %v953 = vlaneseq
  %v954 = vshrl.u32 %v953, 7
  %v955 = vsub.s32 7, %v954
  %v956 = vrot.slane %v42, %v955
  %v957 = vlaneseq
  %v958 = vshrl.u32 %v957, 7
  %v959 = vsub.s32 7, %v958
  %v960 = vrot.slane %v43, %v959
  %v961 = vlaneseq
  %v962 = vshrl.u32 %v961, 7
  %v963 = vsub.s32 7, %v962
  %v964 = vrot.slane %v44, %v963
  %v965 = vlaneseq
  %v966 = vshrl.u32 %v965, 7
  %v967 = vsub.s32 7, %v966
  %v968 = vrot.slane %v45, %v967
  %v969 = vmul.f32 %v903, %v908
  %v970 = vmul.f32 %v902, %v912
  %v971 = vmul.f32 %v901, %v916
  %v972 = vmul.f32 %v900, %v920
  %v973 = vmul.f32 %v899, %v924
  %v974 = vmul.f32 %v898, %v928
  %v975 = vmul.f32 %v897, %v932
  %v976 = vmul.f32 %v896, %v936
  %v977 = vmul.f32 %v895, %v940
  %v978 = vmul.f32 %v894, %v944
  %v979 = vmul.f32 %v893, %v948
  %v980 = vmul.f32 %v892, %v952
  %v981 = vmul.f32 %v891, %v956
  %v982 = vmul.f32 %v890, %v960
  %v983 = vmul.f32 %v889, %v964
  %v984 = vmul.f32 %v904, %v968
  %985 = vrot.lane.b32.xlu0 %v62, 111
  %v986 = vpop.permute.xlu0 %985
  %987 = vrot.lane.b32.xlu0 %v63, 111
  %v988 = vpop.permute.xlu0 %987
  %989 = vrot.lane.b32.xlu0 %v64, 111
  %v990 = vpop.permute.xlu0 %989
  %991 = vrot.lane.b32.xlu0 %v65, 111
  %v992 = vpop.permute.xlu0 %991
  %993 = vrot.lane.b32.xlu0 %v66, 111
  %v994 = vpop.permute.xlu0 %993
  %995 = vrot.lane.b32.xlu0 %v67, 111
  %v996 = vpop.permute.xlu0 %995
  %997 = vrot.lane.b32.xlu0 %v68, 111
  %v998 = vpop.permute.xlu0 %997
  %999 = vrot.lane.b32.xlu0 %v69, 111
  %v1000 = vpop.permute.xlu0 %999
  %1001 = vrot.lane.b32.xlu0 %v70, 111
  %v1002 = vpop.permute.xlu0 %1001
  %1003 = vrot.lane.b32.xlu0 %v71, 111
  %v1004 = vpop.permute.xlu0 %1003
  %1005 = vrot.lane.b32.xlu0 %v72, 111
  %v1006 = vpop.permute.xlu0 %1005
  %1007 = vrot.lane.b32.xlu0 %v73, 111
  %v1008 = vpop.permute.xlu0 %1007
  %1009 = vrot.lane.b32.xlu0 %v74, 111
  %v1010 = vpop.permute.xlu0 %1009
  %1011 = vrot.lane.b32.xlu0 %v75, 111
  %v1012 = vpop.permute.xlu0 %1011
  %1013 = vrot.lane.b32.xlu0 %v76, 111
  %v1014 = vpop.permute.xlu0 %1013
  %1015 = vrot.lane.b32.xlu0 %v77, 111
  %v1016 = vpop.permute.xlu0 %1015
  %vm1017 = vcmp.lt.s32.totalorder %v113, 111
  %v1018 = vsel %vm1017, %v1014, %v1016
  %v1019 = vsel %vm1017, %v1012, %v1014
  %v1020 = vsel %vm1017, %v1010, %v1012
  %v1021 = vsel %vm1017, %v1008, %v1010
  %v1022 = vsel %vm1017, %v1006, %v1008
  %v1023 = vsel %vm1017, %v1004, %v1006
  %v1024 = vsel %vm1017, %v1002, %v1004
  %v1025 = vsel %vm1017, %v1000, %v1002
  %v1026 = vsel %vm1017, %v998, %v1000
  %v1027 = vsel %vm1017, %v996, %v998
  %v1028 = vsel %vm1017, %v994, %v996
  %v1029 = vsel %vm1017, %v992, %v994
  %v1030 = vsel %vm1017, %v990, %v992
  %v1031 = vsel %vm1017, %v988, %v990
  %v1032 = vsel %vm1017, %v986, %v988
  %v1033 = vsel %vm1017, %v1016, %v986
  %v1034 = vlaneseq
  %v1035 = vshrl.u32 %v1034, 7
  %v1036 = vsub.s32 0, %v1035
  %v1037 = vrot.slane %v46, %v1036
  %v1038 = vlaneseq
  %v1039 = vshrl.u32 %v1038, 7
  %v1040 = vsub.s32 0, %v1039
  %v1041 = vrot.slane %v47, %v1040
  %v1042 = vlaneseq
  %v1043 = vshrl.u32 %v1042, 7
  %v1044 = vsub.s32 0, %v1043
  %v1045 = vrot.slane %v48, %v1044
  %v1046 = vlaneseq
  %v1047 = vshrl.u32 %v1046, 7
  %v1048 = vsub.s32 0, %v1047
  %v1049 = vrot.slane %v49, %v1048
  %v1050 = vlaneseq
  %v1051 = vshrl.u32 %v1050, 7
  %v1052 = vsub.s32 0, %v1051
  %v1053 = vrot.slane %v50, %v1052
  %v1054 = vlaneseq
  %v1055 = vshrl.u32 %v1054, 7
  %v1056 = vsub.s32 0, %v1055
  %v1057 = vrot.slane %v51, %v1056
  %v1058 = vlaneseq
  %v1059 = vshrl.u32 %v1058, 7
  %v1060 = vsub.s32 0, %v1059
  %v1061 = vrot.slane %v52, %v1060
  %v1062 = vlaneseq
  %v1063 = vshrl.u32 %v1062, 7
  %v1064 = vsub.s32 0, %v1063
  %v1065 = vrot.slane %v53, %v1064
  %v1066 = vlaneseq
  %v1067 = vshrl.u32 %v1066, 7
  %v1068 = vsub.s32 0, %v1067
  %v1069 = vrot.slane %v54, %v1068
  %v1070 = vlaneseq
  %v1071 = vshrl.u32 %v1070, 7
  %v1072 = vsub.s32 0, %v1071
  %v1073 = vrot.slane %v55, %v1072
  %v1074 = vlaneseq
  %v1075 = vshrl.u32 %v1074, 7
  %v1076 = vsub.s32 0, %v1075
  %v1077 = vrot.slane %v56, %v1076
  %v1078 = vlaneseq
  %v1079 = vshrl.u32 %v1078, 7
  %v1080 = vsub.s32 0, %v1079
  %v1081 = vrot.slane %v57, %v1080
  %v1082 = vlaneseq
  %v1083 = vshrl.u32 %v1082, 7
  %v1084 = vsub.s32 0, %v1083
  %v1085 = vrot.slane %v58, %v1084
  %v1086 = vlaneseq
  %v1087 = vshrl.u32 %v1086, 7
  %v1088 = vsub.s32 0, %v1087
  %v1089 = vrot.slane %v59, %v1088
  %v1090 = vlaneseq
  %v1091 = vshrl.u32 %v1090, 7
  %v1092 = vsub.s32 0, %v1091
  %v1093 = vrot.slane %v60, %v1092
  %v1094 = vlaneseq
  %v1095 = vshrl.u32 %v1094, 7
  %v1096 = vsub.s32 0, %v1095
  %v1097 = vrot.slane %v61, %v1096
  %v1098 = vmul.f32 %v1032, %v1037
  %v1099 = vmul.f32 %v1031, %v1041
  %v1100 = vmul.f32 %v1030, %v1045
  %v1101 = vmul.f32 %v1029, %v1049
  %v1102 = vmul.f32 %v1028, %v1053
  %v1103 = vmul.f32 %v1027, %v1057
  %v1104 = vmul.f32 %v1026, %v1061
  %v1105 = vmul.f32 %v1025, %v1065
  %v1106 = vmul.f32 %v1024, %v1069
  %v1107 = vmul.f32 %v1023, %v1073
  %v1108 = vmul.f32 %v1022, %v1077
  %v1109 = vmul.f32 %v1021, %v1081
  %v1110 = vmul.f32 %v1020, %v1085
  %v1111 = vmul.f32 %v1019, %v1089
  %v1112 = vmul.f32 %v1018, %v1093
  %v1113 = vmul.f32 %v1033, %v1097
  %v1114 = vpack.c.bf16 %v324, %v195
  %v1115 = vpack.c.bf16 %v325, %v196
  %v1116 = vpack.c.bf16 %v326, %v197
  %v1117 = vpack.c.bf16 %v327, %v198
  %v1118 = vpack.c.bf16 %v328, %v199
  %v1119 = vpack.c.bf16 %v329, %v200
  %v1120 = vpack.c.bf16 %v330, %v201
  %v1121 = vpack.c.bf16 %v331, %v202
  %v1122 = vpack.c.bf16 %v332, %v203
  %v1123 = vpack.c.bf16 %v333, %v204
  %v1124 = vpack.c.bf16 %v334, %v205
  %v1125 = vpack.c.bf16 %v335, %v206
  %v1126 = vpack.c.bf16 %v336, %v207
  %v1127 = vpack.c.bf16 %v337, %v208
  %v1128 = vpack.c.bf16 %v338, %v209
  %v1129 = vpack.c.bf16 %v339, %v210
  %v1130 = vpack.c.bf16 %v582, %v453
  %v1131 = vpack.c.bf16 %v583, %v454
  %v1132 = vpack.c.bf16 %v584, %v455
  %v1133 = vpack.c.bf16 %v585, %v456
  %v1134 = vpack.c.bf16 %v586, %v457
  %v1135 = vpack.c.bf16 %v587, %v458
  %v1136 = vpack.c.bf16 %v588, %v459
  %v1137 = vpack.c.bf16 %v589, %v460
  %v1138 = vpack.c.bf16 %v590, %v461
  %v1139 = vpack.c.bf16 %v591, %v462
  %v1140 = vpack.c.bf16 %v592, %v463
  %v1141 = vpack.c.bf16 %v593, %v464
  %v1142 = vpack.c.bf16 %v594, %v465
  %v1143 = vpack.c.bf16 %v595, %v466
  %v1144 = vpack.c.bf16 %v596, %v467
  %v1145 = vpack.c.bf16 %v597, %v468
  %v1146 = vpack.c.bf16 %v711, %v62
  %v1147 = vpack.c.bf16 %v712, %v63
  %v1148 = vpack.c.bf16 %v713, %v64
  %v1149 = vpack.c.bf16 %v714, %v65
  %v1150 = vpack.c.bf16 %v715, %v66
  %v1151 = vpack.c.bf16 %v716, %v67
  %v1152 = vpack.c.bf16 %v717, %v68
  %v1153 = vpack.c.bf16 %v718, %v69
  %v1154 = vpack.c.bf16 %v719, %v70
  %v1155 = vpack.c.bf16 %v720, %v71
  %v1156 = vpack.c.bf16 %v721, %v72
  %v1157 = vpack.c.bf16 %v722, %v73
  %v1158 = vpack.c.bf16 %v723, %v74
  %v1159 = vpack.c.bf16 %v724, %v75
  %v1160 = vpack.c.bf16 %v725, %v76
  %v1161 = vpack.c.bf16 %v726, %v77
  %v1162 = vpack.c.bf16 %v969, %v840
  %v1163 = vpack.c.bf16 %v970, %v841
  %v1164 = vpack.c.bf16 %v971, %v842
  %v1165 = vpack.c.bf16 %v972, %v843
  %v1166 = vpack.c.bf16 %v973, %v844
  %v1167 = vpack.c.bf16 %v974, %v845
  %v1168 = vpack.c.bf16 %v975, %v846
  %v1169 = vpack.c.bf16 %v976, %v847
  %v1170 = vpack.c.bf16 %v977, %v848
  %v1171 = vpack.c.bf16 %v978, %v849
  %v1172 = vpack.c.bf16 %v979, %v850
  %v1173 = vpack.c.bf16 %v980, %v851
  %v1174 = vpack.c.bf16 %v981, %v852
  %v1175 = vpack.c.bf16 %v982, %v853
  %v1176 = vpack.c.bf16 %v983, %v854
  %v1177 = vpack.c.bf16 %v984, %v855
  %v1178 = vpack.c.bf16 %v1098, %v1098
  %v1179 = vpack.c.bf16 %v1099, %v1099
  %v1180 = vpack.c.bf16 %v1100, %v1100
  %v1181 = vpack.c.bf16 %v1101, %v1101
  %v1182 = vpack.c.bf16 %v1102, %v1102
  %v1183 = vpack.c.bf16 %v1103, %v1103
  %v1184 = vpack.c.bf16 %v1104, %v1104
  %v1185 = vpack.c.bf16 %v1105, %v1105
  %v1186 = vpack.c.bf16 %v1106, %v1106
  %v1187 = vpack.c.bf16 %v1107, %v1107
  %v1188 = vpack.c.bf16 %v1108, %v1108
  %v1189 = vpack.c.bf16 %v1109, %v1109
  %v1190 = vpack.c.bf16 %v1110, %v1110
  %v1191 = vpack.c.bf16 %v1111, %v1111
  %v1192 = vpack.c.bf16 %v1112, %v1112
  %v1193 = vpack.c.bf16 %v1113, %v1113
  %1195 = vset.pattern.permute.xlu0 0
  %1196 = vperm.xlu0 %1195, %v79
  %v1197 = vpop.permute.xlu0 %1196
  %vm1199 = vcmask 588800
  %v1201 = vsel %vm1199, %v78, 0
  %vm1203 = vcmask 1043456
  %v1205 = vsel %vm1203, %v1178, 0
  %v1208 = vsel %vm1203, %v1179, 0
  %v1211 = vsel %vm1203, %v1180, 0
  %v1214 = vsel %vm1203, %v1181, 0
  %v1217 = vsel %vm1203, %v1182, 0
  %v1220 = vsel %vm1203, %v1183, 0
  %v1223 = vsel %vm1203, %v1184, 0
  %v1226 = vsel %vm1203, %v1185, 0
  %v1229 = vsel %vm1203, %v1186, 0
  %v1232 = vsel %vm1203, %v1187, 0
  %v1235 = vsel %vm1203, %v1188, 0
  %v1238 = vsel %vm1203, %v1189, 0
  %v1241 = vsel %vm1203, %v1190, 0
  %v1244 = vsel %vm1203, %v1191, 0
  %v1247 = vsel %vm1203, %v1192, 0
  %v1250 = vsel %vm1203, %v1193, 0
  %1252 = vmatprep.subr.bf16.mxu0 0
  %1253 = vmatpush1.bf16.msra.mxu0 0
  %1254 = vmatprep.subr.bf16.mxu0 0
  %1255 = vmatpush1.bf16.msra.mxu0 0
  %1256 = vmatprep.subr.bf16.mxu0 0
  %1257 = vmatpush1.bf16.msra.mxu0 0
  %1258 = vmatprep.subr.bf16.mxu0 %v1208
  %1259 = vmatpush1.bf16.msra.mxu0 %v1205
  %1260 = vmatprep.subr.bf16.mxu0 %v1163
  %1261 = vmatpush1.bf16.msra.mxu0 %v1162
  %1262 = vmatprep.subr.bf16.mxu0 %v1147
  %1263 = vmatpush1.bf16.msra.mxu0 %v1146
  %1264 = vmatprep.subr.bf16.mxu0 %v1131
  %1265 = vmatpush1.bf16.msra.mxu0 %v1130
  %1266 = vmatprep.subr.bf16.mxu0 %v1115
  %1267 = vmatpush1.bf16.msra.mxu0 %v1114
  %1268 = vmatprep.subr.bf16.mxu0 0
  %1269 = vmatpush2.bf16.msra.mxu0 0
  %1270 = vmatprep.subr.bf16.mxu0 0
  %1271 = vmatpush2.bf16.msra.mxu0 0
  %1272 = vmatprep.subr.bf16.mxu0 0
  %1273 = vmatpush2.bf16.msra.mxu0 0
  %1274 = vmatprep.subr.bf16.mxu0 0
  %1275 = vmatpush2.bf16.msra.mxu0 0
  %1276 = vmatprep.subr.bf16.mxu0 0
  %1277 = vmatpush2.bf16.msra.mxu0 0
  %1278 = vmatprep.subr.bf16.mxu0 0
  %1279 = vmatpush2.bf16.msra.mxu0 0
  %1280 = vmatprep.subr.bf16.mxu0 0
  %1281 = vmatpush2.bf16.msra.mxu0 0
  %1282 = vmatprep.subr.bf16.mxu0 0
  %1283 = vmatpush2.bf16.msra.mxu0 0
  %1284 = vmatprep.mubr.bf16.mxu0 0
  %1285 = vmatmul.mubr.bf16.gmra.mxu0 %v1201
  %v1286 = vpop.f32.mrf.mxu0
  %v1287 = vadd.f32 %v1197, %v1286
  %v1288 = vpop.f32.mrf.mxu0
  %v1289 = vadd.f32 %v1197, %v1288
  %v1290 = vpop.f32.mrf.mxu0
  %v1291 = vpop.f32.mrf.mxu0
  %1292 = vdwg.mxu0
  %1293 = vmatprep.subr.bf16.mxu0 0
  %1294 = vmatpush1.bf16.msra.mxu0 0
  %1295 = vmatprep.subr.bf16.mxu0 0
  %1296 = vmatpush1.bf16.msra.mxu0 0
  %1297 = vmatprep.subr.bf16.mxu0 0
  %1298 = vmatpush1.bf16.msra.mxu0 0
  %1299 = vmatprep.subr.bf16.mxu0 %v1214
  %1300 = vmatpush1.bf16.msra.mxu0 %v1211
  %1301 = vmatprep.subr.bf16.mxu0 %v1165
  %1302 = vmatpush1.bf16.msra.mxu0 %v1164
  %1303 = vmatprep.subr.bf16.mxu0 %v1149
  %1304 = vmatpush1.bf16.msra.mxu0 %v1148
  %1305 = vmatprep.subr.bf16.mxu0 %v1133
  %1306 = vmatpush1.bf16.msra.mxu0 %v1132
  %1307 = vmatprep.subr.bf16.mxu0 %v1117
  %1308 = vmatpush1.bf16.msra.mxu0 %v1116
  %1309 = vmatprep.subr.bf16.mxu0 0
  %1310 = vmatpush2.bf16.msra.mxu0 0
  %1311 = vmatprep.subr.bf16.mxu0 0
  %1312 = vmatpush2.bf16.msra.mxu0 0
  %1313 = vmatprep.subr.bf16.mxu0 0
  %1314 = vmatpush2.bf16.msra.mxu0 0
  %1315 = vmatprep.subr.bf16.mxu0 0
  %1316 = vmatpush2.bf16.msra.mxu0 0
  %1317 = vmatprep.subr.bf16.mxu0 0
  %1318 = vmatpush2.bf16.msra.mxu0 0
  %1319 = vmatprep.subr.bf16.mxu0 0
  %1320 = vmatpush2.bf16.msra.mxu0 0
  %1321 = vmatprep.subr.bf16.mxu0 0
  %1322 = vmatpush2.bf16.msra.mxu0 0
  %1323 = vmatprep.subr.bf16.mxu0 0
  %1324 = vmatpush2.bf16.msra.mxu0 0
  %1325 = vmatprep.mubr.bf16.mxu0 0
  %1326 = vmatmul.mubr.bf16.gmra.mxu0 %v1201
  %v1327 = vpop.f32.mrf.mxu0
  %v1328 = vadd.f32 %v1197, %v1327
  %v1329 = vpop.f32.mrf.mxu0
  %v1330 = vadd.f32 %v1197, %v1329
  %v1331 = vpop.f32.mrf.mxu0
  %v1332 = vpop.f32.mrf.mxu0
  %1333 = vdwg.mxu0
  %1334 = vmatprep.subr.bf16.mxu0 0
  %1335 = vmatpush1.bf16.msra.mxu0 0
  %1336 = vmatprep.subr.bf16.mxu0 0
  %1337 = vmatpush1.bf16.msra.mxu0 0
  %1338 = vmatprep.subr.bf16.mxu0 0
  %1339 = vmatpush1.bf16.msra.mxu0 0
  %1340 = vmatprep.subr.bf16.mxu0 %v1220
  %1341 = vmatpush1.bf16.msra.mxu0 %v1217
  %1342 = vmatprep.subr.bf16.mxu0 %v1167
  %1343 = vmatpush1.bf16.msra.mxu0 %v1166
  %1344 = vmatprep.subr.bf16.mxu0 %v1151
  %1345 = vmatpush1.bf16.msra.mxu0 %v1150
  %1346 = vmatprep.subr.bf16.mxu0 %v1135
  %1347 = vmatpush1.bf16.msra.mxu0 %v1134
  %1348 = vmatprep.subr.bf16.mxu0 %v1119
  %1349 = vmatpush1.bf16.msra.mxu0 %v1118
  %1350 = vmatprep.subr.bf16.mxu0 0
  %1351 = vmatpush2.bf16.msra.mxu0 0
  %1352 = vmatprep.subr.bf16.mxu0 0
  %1353 = vmatpush2.bf16.msra.mxu0 0
  %1354 = vmatprep.subr.bf16.mxu0 0
  %1355 = vmatpush2.bf16.msra.mxu0 0
  %1356 = vmatprep.subr.bf16.mxu0 0
  %1357 = vmatpush2.bf16.msra.mxu0 0
  %1358 = vmatprep.subr.bf16.mxu0 0
  %1359 = vmatpush2.bf16.msra.mxu0 0
  %1360 = vmatprep.subr.bf16.mxu0 0
  %1361 = vmatpush2.bf16.msra.mxu0 0
  %1362 = vmatprep.subr.bf16.mxu0 0
  %1363 = vmatpush2.bf16.msra.mxu0 0
  %1364 = vmatprep.subr.bf16.mxu0 0
  %1365 = vmatpush2.bf16.msra.mxu0 0
  %1366 = vmatprep.mubr.bf16.mxu0 0
  %1367 = vmatmul.mubr.bf16.gmra.mxu0 %v1201
  %v1368 = vpop.f32.mrf.mxu0
  %v1369 = vadd.f32 %v1197, %v1368
  %v1370 = vpop.f32.mrf.mxu0
  %v1371 = vadd.f32 %v1197, %v1370
  %v1372 = vpop.f32.mrf.mxu0
  %v1373 = vpop.f32.mrf.mxu0
  %1374 = vdwg.mxu0
  %1375 = vmatprep.subr.bf16.mxu0 0
  %1376 = vmatpush1.bf16.msra.mxu0 0
  %1377 = vmatprep.subr.bf16.mxu0 0
  %1378 = vmatpush1.bf16.msra.mxu0 0
  %1379 = vmatprep.subr.bf16.mxu0 0
  %1380 = vmatpush1.bf16.msra.mxu0 0
  %1381 = vmatprep.subr.bf16.mxu0 %v1226
  %1382 = vmatpush1.bf16.msra.mxu0 %v1223
  %1383 = vmatprep.subr.bf16.mxu0 %v1169
  %1384 = vmatpush1.bf16.msra.mxu0 %v1168
  %1385 = vmatprep.subr.bf16.mxu0 %v1153
  %1386 = vmatpush1.bf16.msra.mxu0 %v1152
  %1387 = vmatprep.subr.bf16.mxu0 %v1137
  %1388 = vmatpush1.bf16.msra.mxu0 %v1136
  %1389 = vmatprep.subr.bf16.mxu0 %v1121
  %1390 = vmatpush1.bf16.msra.mxu0 %v1120
  %1391 = vmatprep.subr.bf16.mxu0 0
  %1392 = vmatpush2.bf16.msra.mxu0 0
  %1393 = vmatprep.subr.bf16.mxu0 0
  %1394 = vmatpush2.bf16.msra.mxu0 0
  %1395 = vmatprep.subr.bf16.mxu0 0
  %1396 = vmatpush2.bf16.msra.mxu0 0
  %1397 = vmatprep.subr.bf16.mxu0 0
  %1398 = vmatpush2.bf16.msra.mxu0 0
  %1399 = vmatprep.subr.bf16.mxu0 0
  %1400 = vmatpush2.bf16.msra.mxu0 0
  %1401 = vmatprep.subr.bf16.mxu0 0
  %1402 = vmatpush2.bf16.msra.mxu0 0
  %1403 = vmatprep.subr.bf16.mxu0 0
  %1404 = vmatpush2.bf16.msra.mxu0 0
  %1405 = vmatprep.subr.bf16.mxu0 0
  %1406 = vmatpush2.bf16.msra.mxu0 0
  %1407 = vmatprep.mubr.bf16.mxu0 0
  %1408 = vmatmul.mubr.bf16.gmra.mxu0 %v1201
  %v1409 = vpop.f32.mrf.mxu0
  %v1410 = vadd.f32 %v1197, %v1409
  %v1411 = vpop.f32.mrf.mxu0
  %v1412 = vadd.f32 %v1197, %v1411
  %v1413 = vpop.f32.mrf.mxu0
  %v1414 = vpop.f32.mrf.mxu0
  %1415 = vdwg.mxu0
  %1416 = vmatprep.subr.bf16.mxu0 0
  %1417 = vmatpush1.bf16.msra.mxu0 0
  %1418 = vmatprep.subr.bf16.mxu0 0
  %1419 = vmatpush1.bf16.msra.mxu0 0
  %1420 = vmatprep.subr.bf16.mxu0 0
  %1421 = vmatpush1.bf16.msra.mxu0 0
  %1422 = vmatprep.subr.bf16.mxu0 %v1232
  %1423 = vmatpush1.bf16.msra.mxu0 %v1229
  %1424 = vmatprep.subr.bf16.mxu0 %v1171
  %1425 = vmatpush1.bf16.msra.mxu0 %v1170
  %1426 = vmatprep.subr.bf16.mxu0 %v1155
  %1427 = vmatpush1.bf16.msra.mxu0 %v1154
  %1428 = vmatprep.subr.bf16.mxu0 %v1139
  %1429 = vmatpush1.bf16.msra.mxu0 %v1138
  %1430 = vmatprep.subr.bf16.mxu0 %v1123
  %1431 = vmatpush1.bf16.msra.mxu0 %v1122
  %1432 = vmatprep.subr.bf16.mxu0 0
  %1433 = vmatpush2.bf16.msra.mxu0 0
  %1434 = vmatprep.subr.bf16.mxu0 0
  %1435 = vmatpush2.bf16.msra.mxu0 0
  %1436 = vmatprep.subr.bf16.mxu0 0
  %1437 = vmatpush2.bf16.msra.mxu0 0
  %1438 = vmatprep.subr.bf16.mxu0 0
  %1439 = vmatpush2.bf16.msra.mxu0 0
  %1440 = vmatprep.subr.bf16.mxu0 0
  %1441 = vmatpush2.bf16.msra.mxu0 0
  %1442 = vmatprep.subr.bf16.mxu0 0
  %1443 = vmatpush2.bf16.msra.mxu0 0
  %1444 = vmatprep.subr.bf16.mxu0 0
  %1445 = vmatpush2.bf16.msra.mxu0 0
  %1446 = vmatprep.subr.bf16.mxu0 0
  %1447 = vmatpush2.bf16.msra.mxu0 0
  %1448 = vmatprep.mubr.bf16.mxu0 0
  %1449 = vmatmul.mubr.bf16.gmra.mxu0 %v1201
  %v1450 = vpop.f32.mrf.mxu0
  %v1451 = vadd.f32 %v1197, %v1450
  %v1452 = vpop.f32.mrf.mxu0
  %v1453 = vadd.f32 %v1197, %v1452
  %v1454 = vpop.f32.mrf.mxu0
  %v1455 = vpop.f32.mrf.mxu0
  %1456 = vdwg.mxu0
  %1457 = vmatprep.subr.bf16.mxu0 0
  %1458 = vmatpush1.bf16.msra.mxu0 0
  %1459 = vmatprep.subr.bf16.mxu0 0
  %1460 = vmatpush1.bf16.msra.mxu0 0
  %1461 = vmatprep.subr.bf16.mxu0 0
  %1462 = vmatpush1.bf16.msra.mxu0 0
  %1463 = vmatprep.subr.bf16.mxu0 %v1238
  %1464 = vmatpush1.bf16.msra.mxu0 %v1235
  %1465 = vmatprep.subr.bf16.mxu0 %v1173
  %1466 = vmatpush1.bf16.msra.mxu0 %v1172
  %1467 = vmatprep.subr.bf16.mxu0 %v1157
  %1468 = vmatpush1.bf16.msra.mxu0 %v1156
  %1469 = vmatprep.subr.bf16.mxu0 %v1141
  %1470 = vmatpush1.bf16.msra.mxu0 %v1140
  %1471 = vmatprep.subr.bf16.mxu0 %v1125
  %1472 = vmatpush1.bf16.msra.mxu0 %v1124
  %1473 = vmatprep.subr.bf16.mxu0 0
  %1474 = vmatpush2.bf16.msra.mxu0 0
  %1475 = vmatprep.subr.bf16.mxu0 0
  %1476 = vmatpush2.bf16.msra.mxu0 0
  %1477 = vmatprep.subr.bf16.mxu0 0
  %1478 = vmatpush2.bf16.msra.mxu0 0
  %1479 = vmatprep.subr.bf16.mxu0 0
  %1480 = vmatpush2.bf16.msra.mxu0 0
  %1481 = vmatprep.subr.bf16.mxu0 0
  %1482 = vmatpush2.bf16.msra.mxu0 0
  %1483 = vmatprep.subr.bf16.mxu0 0
  %1484 = vmatpush2.bf16.msra.mxu0 0
  %1485 = vmatprep.subr.bf16.mxu0 0
  %1486 = vmatpush2.bf16.msra.mxu0 0
  %1487 = vmatprep.subr.bf16.mxu0 0
  %1488 = vmatpush2.bf16.msra.mxu0 0
  %1489 = vmatprep.mubr.bf16.mxu0 0
  %1490 = vmatmul.mubr.bf16.gmra.mxu0 %v1201
  %v1491 = vpop.f32.mrf.mxu0
  %v1492 = vadd.f32 %v1197, %v1491
  %v1493 = vpop.f32.mrf.mxu0
  %v1494 = vadd.f32 %v1197, %v1493
  %v1495 = vpop.f32.mrf.mxu0
  %v1496 = vpop.f32.mrf.mxu0
  %1497 = vdwg.mxu0
  %1498 = vmatprep.subr.bf16.mxu0 0
  %1499 = vmatpush1.bf16.msra.mxu0 0
  %1500 = vmatprep.subr.bf16.mxu0 0
  %1501 = vmatpush1.bf16.msra.mxu0 0
  %1502 = vmatprep.subr.bf16.mxu0 0
  %1503 = vmatpush1.bf16.msra.mxu0 0
  %1504 = vmatprep.subr.bf16.mxu0 %v1244
  %1505 = vmatpush1.bf16.msra.mxu0 %v1241
  %1506 = vmatprep.subr.bf16.mxu0 %v1175
  %1507 = vmatpush1.bf16.msra.mxu0 %v1174
  %1508 = vmatprep.subr.bf16.mxu0 %v1159
  %1509 = vmatpush1.bf16.msra.mxu0 %v1158
  %1510 = vmatprep.subr.bf16.mxu0 %v1143
  %1511 = vmatpush1.bf16.msra.mxu0 %v1142
  %1512 = vmatprep.subr.bf16.mxu0 %v1127
  %1513 = vmatpush1.bf16.msra.mxu0 %v1126
  %1514 = vmatprep.subr.bf16.mxu0 0
  %1515 = vmatpush2.bf16.msra.mxu0 0
  %1516 = vmatprep.subr.bf16.mxu0 0
  %1517 = vmatpush2.bf16.msra.mxu0 0
  %1518 = vmatprep.subr.bf16.mxu0 0
  %1519 = vmatpush2.bf16.msra.mxu0 0
  %1520 = vmatprep.subr.bf16.mxu0 0
  %1521 = vmatpush2.bf16.msra.mxu0 0
  %1522 = vmatprep.subr.bf16.mxu0 0
  %1523 = vmatpush2.bf16.msra.mxu0 0
  %1524 = vmatprep.subr.bf16.mxu0 0
  %1525 = vmatpush2.bf16.msra.mxu0 0
  %1526 = vmatprep.subr.bf16.mxu0 0
  %1527 = vmatpush2.bf16.msra.mxu0 0
  %1528 = vmatprep.subr.bf16.mxu0 0
  %1529 = vmatpush2.bf16.msra.mxu0 0
  %1530 = vmatprep.mubr.bf16.mxu0 0
  %1531 = vmatmul.mubr.bf16.gmra.mxu0 %v1201
  %v1532 = vpop.f32.mrf.mxu0
  %v1533 = vadd.f32 %v1197, %v1532
  %v1534 = vpop.f32.mrf.mxu0
  %v1535 = vadd.f32 %v1197, %v1534
  %v1536 = vpop.f32.mrf.mxu0
  %v1537 = vpop.f32.mrf.mxu0
  %1538 = vdwg.mxu0
  %1539 = vmatprep.subr.bf16.mxu0 0
  %1540 = vmatpush1.bf16.msra.mxu0 0
  %1541 = vmatprep.subr.bf16.mxu0 0
  %1542 = vmatpush1.bf16.msra.mxu0 0
  %1543 = vmatprep.subr.bf16.mxu0 0
  %1544 = vmatpush1.bf16.msra.mxu0 0
  %1545 = vmatprep.subr.bf16.mxu0 %v1250
  %1546 = vmatpush1.bf16.msra.mxu0 %v1247
  %1547 = vmatprep.subr.bf16.mxu0 %v1177
  %1548 = vmatpush1.bf16.msra.mxu0 %v1176
  %1549 = vmatprep.subr.bf16.mxu0 %v1161
  %1550 = vmatpush1.bf16.msra.mxu0 %v1160
  %1551 = vmatprep.subr.bf16.mxu0 %v1145
  %1552 = vmatpush1.bf16.msra.mxu0 %v1144
  %1553 = vmatprep.subr.bf16.mxu0 %v1129
  %1554 = vmatpush1.bf16.msra.mxu0 %v1128
  %1555 = vmatprep.subr.bf16.mxu0 0
  %1556 = vmatpush2.bf16.msra.mxu0 0
  %1557 = vmatprep.subr.bf16.mxu0 0
  %1558 = vmatpush2.bf16.msra.mxu0 0
  %1559 = vmatprep.subr.bf16.mxu0 0
  %1560 = vmatpush2.bf16.msra.mxu0 0
  %1561 = vmatprep.subr.bf16.mxu0 0
  %1562 = vmatpush2.bf16.msra.mxu0 0
  %1563 = vmatprep.subr.bf16.mxu0 0
  %1564 = vmatpush2.bf16.msra.mxu0 0
  %1565 = vmatprep.subr.bf16.mxu0 0
  %1566 = vmatpush2.bf16.msra.mxu0 0
  %1567 = vmatprep.subr.bf16.mxu0 0
  %1568 = vmatpush2.bf16.msra.mxu0 0
  %1569 = vmatprep.subr.bf16.mxu0 0
  %1570 = vmatpush2.bf16.msra.mxu0 0
  %1571 = vmatprep.mubr.bf16.mxu0 0
  %1572 = vmatmul.mubr.bf16.gmra.mxu0 %v1201
  %v1573 = vpop.f32.mrf.mxu0
  %v1574 = vadd.f32 %v1197, %v1573
  %v1575 = vpop.f32.mrf.mxu0
  %v1576 = vadd.f32 %v1197, %v1575
  %v1577 = vpop.f32.mrf.mxu0
  %v1578 = vpop.f32.mrf.mxu0
  %1579 = vdwg.mxu0
  %v1580 = vmax.f32 %v1287, 0.0
  %v1581 = vmax.f32 %v1289, 0.0
  %v1582 = vmax.f32 %v1328, 0.0
  %v1583 = vmax.f32 %v1330, 0.0
  %v1584 = vmax.f32 %v1369, 0.0
  %v1585 = vmax.f32 %v1371, 0.0
  %v1586 = vmax.f32 %v1410, 0.0
  %v1587 = vmax.f32 %v1412, 0.0
  %v1588 = vmax.f32 %v1451, 0.0
  %v1589 = vmax.f32 %v1453, 0.0
  %v1590 = vmax.f32 %v1492, 0.0
  %v1591 = vmax.f32 %v1494, 0.0
  %v1592 = vmax.f32 %v1533, 0.0
  %v1593 = vmax.f32 %v1535, 0.0
  %v1594 = vmax.f32 %v1574, 0.0
  %v1595 = vmax.f32 %v1576, 0.0
  %v1596 = vld [vmem:[%s4] sm:$0xf]
  %v1597 = vld [vmem:[%s5] sm:$0xff]
  %1598 = vrot.lane.b32.xlu0 %v1580, 17
  %v1599 = vpop.permute.xlu0 %1598
  %1600 = vrot.lane.b32.xlu0 %v1581, 17
  %v1601 = vpop.permute.xlu0 %1600
  %1602 = vrot.lane.b32.xlu0 %v1582, 17
  %v1603 = vpop.permute.xlu0 %1602
  %1604 = vrot.lane.b32.xlu0 %v1583, 17
  %v1605 = vpop.permute.xlu0 %1604
  %1606 = vrot.lane.b32.xlu0 %v1584, 17
  %v1607 = vpop.permute.xlu0 %1606
  %1608 = vrot.lane.b32.xlu0 %v1585, 17
  %v1609 = vpop.permute.xlu0 %1608
  %1610 = vrot.lane.b32.xlu0 %v1586, 17
  %v1611 = vpop.permute.xlu0 %1610
  %1612 = vrot.lane.b32.xlu0 %v1587, 17
  %v1613 = vpop.permute.xlu0 %1612
  %1614 = vrot.lane.b32.xlu0 %v1588, 17
  %v1615 = vpop.permute.xlu0 %1614
  %1616 = vrot.lane.b32.xlu0 %v1589, 17
  %v1617 = vpop.permute.xlu0 %1616
  %1618 = vrot.lane.b32.xlu0 %v1590, 17
  %v1619 = vpop.permute.xlu0 %1618
  %1620 = vrot.lane.b32.xlu0 %v1591, 17
  %v1621 = vpop.permute.xlu0 %1620
  %1622 = vrot.lane.b32.xlu0 %v1592, 17
  %v1623 = vpop.permute.xlu0 %1622
  %1624 = vrot.lane.b32.xlu0 %v1593, 17
  %v1625 = vpop.permute.xlu0 %1624
  %1626 = vrot.lane.b32.xlu0 %v1594, 17
  %v1627 = vpop.permute.xlu0 %1626
  %1628 = vrot.lane.b32.xlu0 %v1595, 17
  %v1629 = vpop.permute.xlu0 %1628
  %v1630 = vsel %vm114, %v1627, %v1629
  %v1631 = vsel %vm114, %v1625, %v1627
  %v1632 = vsel %vm114, %v1623, %v1625
  %v1633 = vsel %vm114, %v1621, %v1623
  %v1634 = vsel %vm114, %v1619, %v1621
  %v1635 = vsel %vm114, %v1617, %v1619
  %v1636 = vsel %vm114, %v1615, %v1617
  %v1637 = vsel %vm114, %v1613, %v1615
  %v1638 = vsel %vm114, %v1611, %v1613
  %v1639 = vsel %vm114, %v1609, %v1611
  %v1640 = vsel %vm114, %v1607, %v1609
  %v1641 = vsel %vm114, %v1605, %v1607
  %v1642 = vsel %vm114, %v1603, %v1605
  %v1643 = vsel %vm114, %v1601, %v1603
  %v1644 = vsel %vm114, %v1599, %v1601
  %v1645 = vsel %vm114, %v1629, %v1599
  %v1646 = vmul.f32 %v1645, %v134
  %v1647 = vmul.f32 %v1644, %v138
  %v1648 = vmul.f32 %v1643, %v142
  %v1649 = vmul.f32 %v1642, %v146
  %v1650 = vmul.f32 %v1641, %v150
  %v1651 = vmul.f32 %v1640, %v154
  %v1652 = vmul.f32 %v1639, %v158
  %v1653 = vmul.f32 %v1638, %v162
  %v1654 = vmul.f32 %v1637, %v166
  %v1655 = vmul.f32 %v1636, %v170
  %v1656 = vmul.f32 %v1635, %v174
  %v1657 = vmul.f32 %v1634, %v178
  %v1658 = vmul.f32 %v1633, %v182
  %v1659 = vmul.f32 %v1632, %v186
  %v1660 = vmul.f32 %v1631, %v190
  %v1661 = vmul.f32 %v1630, %v194
  %1662 = vrot.lane.b32.xlu0 %v1580, 16
  %v1663 = vpop.permute.xlu0 %1662
  %1664 = vrot.lane.b32.xlu0 %v1581, 16
  %v1665 = vpop.permute.xlu0 %1664
  %1666 = vrot.lane.b32.xlu0 %v1582, 16
  %v1667 = vpop.permute.xlu0 %1666
  %1668 = vrot.lane.b32.xlu0 %v1583, 16
  %v1669 = vpop.permute.xlu0 %1668
  %1670 = vrot.lane.b32.xlu0 %v1584, 16
  %v1671 = vpop.permute.xlu0 %1670
  %1672 = vrot.lane.b32.xlu0 %v1585, 16
  %v1673 = vpop.permute.xlu0 %1672
  %1674 = vrot.lane.b32.xlu0 %v1586, 16
  %v1675 = vpop.permute.xlu0 %1674
  %1676 = vrot.lane.b32.xlu0 %v1587, 16
  %v1677 = vpop.permute.xlu0 %1676
  %1678 = vrot.lane.b32.xlu0 %v1588, 16
  %v1679 = vpop.permute.xlu0 %1678
  %1680 = vrot.lane.b32.xlu0 %v1589, 16
  %v1681 = vpop.permute.xlu0 %1680
  %1682 = vrot.lane.b32.xlu0 %v1590, 16
  %v1683 = vpop.permute.xlu0 %1682
  %1684 = vrot.lane.b32.xlu0 %v1591, 16
  %v1685 = vpop.permute.xlu0 %1684
  %1686 = vrot.lane.b32.xlu0 %v1592, 16
  %v1687 = vpop.permute.xlu0 %1686
  %1688 = vrot.lane.b32.xlu0 %v1593, 16
  %v1689 = vpop.permute.xlu0 %1688
  %1690 = vrot.lane.b32.xlu0 %v1594, 16
  %v1691 = vpop.permute.xlu0 %1690
  %1692 = vrot.lane.b32.xlu0 %v1595, 16
  %v1693 = vpop.permute.xlu0 %1692
  %v1694 = vsel %vm243, %v1691, %v1693
  %v1695 = vsel %vm243, %v1689, %v1691
  %v1696 = vsel %vm243, %v1687, %v1689
  %v1697 = vsel %vm243, %v1685, %v1687
  %v1698 = vsel %vm243, %v1683, %v1685
  %v1699 = vsel %vm243, %v1681, %v1683
  %v1700 = vsel %vm243, %v1679, %v1681
  %v1701 = vsel %vm243, %v1677, %v1679
  %v1702 = vsel %vm243, %v1675, %v1677
  %v1703 = vsel %vm243, %v1673, %v1675
  %v1704 = vsel %vm243, %v1671, %v1673
  %v1705 = vsel %vm243, %v1669, %v1671
  %v1706 = vsel %vm243, %v1667, %v1669
  %v1707 = vsel %vm243, %v1665, %v1667
  %v1708 = vsel %vm243, %v1663, %v1665
  %v1709 = vsel %vm243, %v1693, %v1663
  %v1710 = vmul.f32 %v1709, %v263
  %v1711 = vmul.f32 %v1708, %v267
  %v1712 = vmul.f32 %v1707, %v271
  %v1713 = vmul.f32 %v1706, %v275
  %v1714 = vmul.f32 %v1705, %v279
  %v1715 = vmul.f32 %v1704, %v283
  %v1716 = vmul.f32 %v1703, %v287
  %v1717 = vmul.f32 %v1702, %v291
  %v1718 = vmul.f32 %v1701, %v295
  %v1719 = vmul.f32 %v1700, %v299
  %v1720 = vmul.f32 %v1699, %v303
  %v1721 = vmul.f32 %v1698, %v307
  %v1722 = vmul.f32 %v1697, %v311
  %v1723 = vmul.f32 %v1696, %v315
  %v1724 = vmul.f32 %v1695, %v319
  %v1725 = vmul.f32 %v1694, %v323
  %1726 = vrot.lane.b32.xlu0 %v1580, 15
  %v1727 = vpop.permute.xlu0 %1726
  %1728 = vrot.lane.b32.xlu0 %v1581, 15
  %v1729 = vpop.permute.xlu0 %1728
  %1730 = vrot.lane.b32.xlu0 %v1582, 15
  %v1731 = vpop.permute.xlu0 %1730
  %1732 = vrot.lane.b32.xlu0 %v1583, 15
  %v1733 = vpop.permute.xlu0 %1732
  %1734 = vrot.lane.b32.xlu0 %v1584, 15
  %v1735 = vpop.permute.xlu0 %1734
  %1736 = vrot.lane.b32.xlu0 %v1585, 15
  %v1737 = vpop.permute.xlu0 %1736
  %1738 = vrot.lane.b32.xlu0 %v1586, 15
  %v1739 = vpop.permute.xlu0 %1738
  %1740 = vrot.lane.b32.xlu0 %v1587, 15
  %v1741 = vpop.permute.xlu0 %1740
  %1742 = vrot.lane.b32.xlu0 %v1588, 15
  %v1743 = vpop.permute.xlu0 %1742
  %1744 = vrot.lane.b32.xlu0 %v1589, 15
  %v1745 = vpop.permute.xlu0 %1744
  %1746 = vrot.lane.b32.xlu0 %v1590, 15
  %v1747 = vpop.permute.xlu0 %1746
  %1748 = vrot.lane.b32.xlu0 %v1591, 15
  %v1749 = vpop.permute.xlu0 %1748
  %1750 = vrot.lane.b32.xlu0 %v1592, 15
  %v1751 = vpop.permute.xlu0 %1750
  %1752 = vrot.lane.b32.xlu0 %v1593, 15
  %v1753 = vpop.permute.xlu0 %1752
  %1754 = vrot.lane.b32.xlu0 %v1594, 15
  %v1755 = vpop.permute.xlu0 %1754
  %1756 = vrot.lane.b32.xlu0 %v1595, 15
  %v1757 = vpop.permute.xlu0 %1756
  %v1758 = vsel %vm372, %v1755, %v1757
  %v1759 = vsel %vm372, %v1753, %v1755
  %v1760 = vsel %vm372, %v1751, %v1753
  %v1761 = vsel %vm372, %v1749, %v1751
  %v1762 = vsel %vm372, %v1747, %v1749
  %v1763 = vsel %vm372, %v1745, %v1747
  %v1764 = vsel %vm372, %v1743, %v1745
  %v1765 = vsel %vm372, %v1741, %v1743
  %v1766 = vsel %vm372, %v1739, %v1741
  %v1767 = vsel %vm372, %v1737, %v1739
  %v1768 = vsel %vm372, %v1735, %v1737
  %v1769 = vsel %vm372, %v1733, %v1735
  %v1770 = vsel %vm372, %v1731, %v1733
  %v1771 = vsel %vm372, %v1729, %v1731
  %v1772 = vsel %vm372, %v1727, %v1729
  %v1773 = vsel %vm372, %v1757, %v1727
  %v1774 = vmul.f32 %v1773, %v392
  %v1775 = vmul.f32 %v1772, %v396
  %v1776 = vmul.f32 %v1771, %v400
  %v1777 = vmul.f32 %v1770, %v404
  %v1778 = vmul.f32 %v1769, %v408
  %v1779 = vmul.f32 %v1768, %v412
  %v1780 = vmul.f32 %v1767, %v416
  %v1781 = vmul.f32 %v1766, %v420
  %v1782 = vmul.f32 %v1765, %v424
  %v1783 = vmul.f32 %v1764, %v428
  %v1784 = vmul.f32 %v1763, %v432
  %v1785 = vmul.f32 %v1762, %v436
  %v1786 = vmul.f32 %v1761, %v440
  %v1787 = vmul.f32 %v1760, %v444
  %v1788 = vmul.f32 %v1759, %v448
  %v1789 = vmul.f32 %v1758, %v452
  %1790 = vrot.lane.b32.xlu0 %v1580, 1
  %v1791 = vpop.permute.xlu0 %1790
  %1792 = vrot.lane.b32.xlu0 %v1581, 1
  %v1793 = vpop.permute.xlu0 %1792
  %1794 = vrot.lane.b32.xlu0 %v1582, 1
  %v1795 = vpop.permute.xlu0 %1794
  %1796 = vrot.lane.b32.xlu0 %v1583, 1
  %v1797 = vpop.permute.xlu0 %1796
  %1798 = vrot.lane.b32.xlu0 %v1584, 1
  %v1799 = vpop.permute.xlu0 %1798
  %1800 = vrot.lane.b32.xlu0 %v1585, 1
  %v1801 = vpop.permute.xlu0 %1800
  %1802 = vrot.lane.b32.xlu0 %v1586, 1
  %v1803 = vpop.permute.xlu0 %1802
  %1804 = vrot.lane.b32.xlu0 %v1587, 1
  %v1805 = vpop.permute.xlu0 %1804
  %1806 = vrot.lane.b32.xlu0 %v1588, 1
  %v1807 = vpop.permute.xlu0 %1806
  %1808 = vrot.lane.b32.xlu0 %v1589, 1
  %v1809 = vpop.permute.xlu0 %1808
  %1810 = vrot.lane.b32.xlu0 %v1590, 1
  %v1811 = vpop.permute.xlu0 %1810
  %1812 = vrot.lane.b32.xlu0 %v1591, 1
  %v1813 = vpop.permute.xlu0 %1812
  %1814 = vrot.lane.b32.xlu0 %v1592, 1
  %v1815 = vpop.permute.xlu0 %1814
  %1816 = vrot.lane.b32.xlu0 %v1593, 1
  %v1817 = vpop.permute.xlu0 %1816
  %1818 = vrot.lane.b32.xlu0 %v1594, 1
  %v1819 = vpop.permute.xlu0 %1818
  %1820 = vrot.lane.b32.xlu0 %v1595, 1
  %v1821 = vpop.permute.xlu0 %1820
  %v1822 = vsel %vm501, %v1819, %v1821
  %v1823 = vsel %vm501, %v1817, %v1819
  %v1824 = vsel %vm501, %v1815, %v1817
  %v1825 = vsel %vm501, %v1813, %v1815
  %v1826 = vsel %vm501, %v1811, %v1813
  %v1827 = vsel %vm501, %v1809, %v1811
  %v1828 = vsel %vm501, %v1807, %v1809
  %v1829 = vsel %vm501, %v1805, %v1807
  %v1830 = vsel %vm501, %v1803, %v1805
  %v1831 = vsel %vm501, %v1801, %v1803
  %v1832 = vsel %vm501, %v1799, %v1801
  %v1833 = vsel %vm501, %v1797, %v1799
  %v1834 = vsel %vm501, %v1795, %v1797
  %v1835 = vsel %vm501, %v1793, %v1795
  %v1836 = vsel %vm501, %v1791, %v1793
  %v1837 = vsel %vm501, %v1821, %v1791
  %v1838 = vmul.f32 %v1837, %v521
  %v1839 = vmul.f32 %v1836, %v525
  %v1840 = vmul.f32 %v1835, %v529
  %v1841 = vmul.f32 %v1834, %v533
  %v1842 = vmul.f32 %v1833, %v537
  %v1843 = vmul.f32 %v1832, %v541
  %v1844 = vmul.f32 %v1831, %v545
  %v1845 = vmul.f32 %v1830, %v549
  %v1846 = vmul.f32 %v1829, %v553
  %v1847 = vmul.f32 %v1828, %v557
  %v1848 = vmul.f32 %v1827, %v561
  %v1849 = vmul.f32 %v1826, %v565
  %v1850 = vmul.f32 %v1825, %v569
  %v1851 = vmul.f32 %v1824, %v573
  %v1852 = vmul.f32 %v1823, %v577
  %v1853 = vmul.f32 %v1822, %v581
  %1854 = vrot.lane.b32.xlu0 %v1580, 127
  %v1855 = vpop.permute.xlu0 %1854
  %1856 = vrot.lane.b32.xlu0 %v1581, 127
  %v1857 = vpop.permute.xlu0 %1856
  %1858 = vrot.lane.b32.xlu0 %v1582, 127
  %v1859 = vpop.permute.xlu0 %1858
  %1860 = vrot.lane.b32.xlu0 %v1583, 127
  %v1861 = vpop.permute.xlu0 %1860
  %1862 = vrot.lane.b32.xlu0 %v1584, 127
  %v1863 = vpop.permute.xlu0 %1862
  %1864 = vrot.lane.b32.xlu0 %v1585, 127
  %v1865 = vpop.permute.xlu0 %1864
  %1866 = vrot.lane.b32.xlu0 %v1586, 127
  %v1867 = vpop.permute.xlu0 %1866
  %1868 = vrot.lane.b32.xlu0 %v1587, 127
  %v1869 = vpop.permute.xlu0 %1868
  %1870 = vrot.lane.b32.xlu0 %v1588, 127
  %v1871 = vpop.permute.xlu0 %1870
  %1872 = vrot.lane.b32.xlu0 %v1589, 127
  %v1873 = vpop.permute.xlu0 %1872
  %1874 = vrot.lane.b32.xlu0 %v1590, 127
  %v1875 = vpop.permute.xlu0 %1874
  %1876 = vrot.lane.b32.xlu0 %v1591, 127
  %v1877 = vpop.permute.xlu0 %1876
  %1878 = vrot.lane.b32.xlu0 %v1592, 127
  %v1879 = vpop.permute.xlu0 %1878
  %1880 = vrot.lane.b32.xlu0 %v1593, 127
  %v1881 = vpop.permute.xlu0 %1880
  %1882 = vrot.lane.b32.xlu0 %v1594, 127
  %v1883 = vpop.permute.xlu0 %1882
  %1884 = vrot.lane.b32.xlu0 %v1595, 127
  %v1885 = vpop.permute.xlu0 %1884
  %v1886 = vsel %vm630, %v1883, %v1885
  %v1887 = vsel %vm630, %v1881, %v1883
  %v1888 = vsel %vm630, %v1879, %v1881
  %v1889 = vsel %vm630, %v1877, %v1879
  %v1890 = vsel %vm630, %v1875, %v1877
  %v1891 = vsel %vm630, %v1873, %v1875
  %v1892 = vsel %vm630, %v1871, %v1873
  %v1893 = vsel %vm630, %v1869, %v1871
  %v1894 = vsel %vm630, %v1867, %v1869
  %v1895 = vsel %vm630, %v1865, %v1867
  %v1896 = vsel %vm630, %v1863, %v1865
  %v1897 = vsel %vm630, %v1861, %v1863
  %v1898 = vsel %vm630, %v1859, %v1861
  %v1899 = vsel %vm630, %v1857, %v1859
  %v1900 = vsel %vm630, %v1855, %v1857
  %v1901 = vsel %vm630, %v1885, %v1855
  %v1902 = vmul.f32 %v1900, %v650
  %v1903 = vmul.f32 %v1899, %v654
  %v1904 = vmul.f32 %v1898, %v658
  %v1905 = vmul.f32 %v1897, %v662
  %v1906 = vmul.f32 %v1896, %v666
  %v1907 = vmul.f32 %v1895, %v670
  %v1908 = vmul.f32 %v1894, %v674
  %v1909 = vmul.f32 %v1893, %v678
  %v1910 = vmul.f32 %v1892, %v682
  %v1911 = vmul.f32 %v1891, %v686
  %v1912 = vmul.f32 %v1890, %v690
  %v1913 = vmul.f32 %v1889, %v694
  %v1914 = vmul.f32 %v1888, %v698
  %v1915 = vmul.f32 %v1887, %v702
  %v1916 = vmul.f32 %v1886, %v706
  %v1917 = vmul.f32 %v1901, %v710
  %1918 = vrot.lane.b32.xlu0 %v1580, 113
  %v1919 = vpop.permute.xlu0 %1918
  %1920 = vrot.lane.b32.xlu0 %v1581, 113
  %v1921 = vpop.permute.xlu0 %1920
  %1922 = vrot.lane.b32.xlu0 %v1582, 113
  %v1923 = vpop.permute.xlu0 %1922
  %1924 = vrot.lane.b32.xlu0 %v1583, 113
  %v1925 = vpop.permute.xlu0 %1924
  %1926 = vrot.lane.b32.xlu0 %v1584, 113
  %v1927 = vpop.permute.xlu0 %1926
  %1928 = vrot.lane.b32.xlu0 %v1585, 113
  %v1929 = vpop.permute.xlu0 %1928
  %1930 = vrot.lane.b32.xlu0 %v1586, 113
  %v1931 = vpop.permute.xlu0 %1930
  %1932 = vrot.lane.b32.xlu0 %v1587, 113
  %v1933 = vpop.permute.xlu0 %1932
  %1934 = vrot.lane.b32.xlu0 %v1588, 113
  %v1935 = vpop.permute.xlu0 %1934
  %1936 = vrot.lane.b32.xlu0 %v1589, 113
  %v1937 = vpop.permute.xlu0 %1936
  %1938 = vrot.lane.b32.xlu0 %v1590, 113
  %v1939 = vpop.permute.xlu0 %1938
  %1940 = vrot.lane.b32.xlu0 %v1591, 113
  %v1941 = vpop.permute.xlu0 %1940
  %1942 = vrot.lane.b32.xlu0 %v1592, 113
  %v1943 = vpop.permute.xlu0 %1942
  %1944 = vrot.lane.b32.xlu0 %v1593, 113
  %v1945 = vpop.permute.xlu0 %1944
  %1946 = vrot.lane.b32.xlu0 %v1594, 113
  %v1947 = vpop.permute.xlu0 %1946
  %1948 = vrot.lane.b32.xlu0 %v1595, 113
  %v1949 = vpop.permute.xlu0 %1948
  %v1950 = vsel %vm759, %v1947, %v1949
  %v1951 = vsel %vm759, %v1945, %v1947
  %v1952 = vsel %vm759, %v1943, %v1945
  %v1953 = vsel %vm759, %v1941, %v1943
  %v1954 = vsel %vm759, %v1939, %v1941
  %v1955 = vsel %vm759, %v1937, %v1939
  %v1956 = vsel %vm759, %v1935, %v1937
  %v1957 = vsel %vm759, %v1933, %v1935
  %v1958 = vsel %vm759, %v1931, %v1933
  %v1959 = vsel %vm759, %v1929, %v1931
  %v1960 = vsel %vm759, %v1927, %v1929
  %v1961 = vsel %vm759, %v1925, %v1927
  %v1962 = vsel %vm759, %v1923, %v1925
  %v1963 = vsel %vm759, %v1921, %v1923
  %v1964 = vsel %vm759, %v1919, %v1921
  %v1965 = vsel %vm759, %v1949, %v1919
  %v1966 = vmul.f32 %v1964, %v779
  %v1967 = vmul.f32 %v1963, %v783
  %v1968 = vmul.f32 %v1962, %v787
  %v1969 = vmul.f32 %v1961, %v791
  %v1970 = vmul.f32 %v1960, %v795
  %v1971 = vmul.f32 %v1959, %v799
  %v1972 = vmul.f32 %v1958, %v803
  %v1973 = vmul.f32 %v1957, %v807
  %v1974 = vmul.f32 %v1956, %v811
  %v1975 = vmul.f32 %v1955, %v815
  %v1976 = vmul.f32 %v1954, %v819
  %v1977 = vmul.f32 %v1953, %v823
  %v1978 = vmul.f32 %v1952, %v827
  %v1979 = vmul.f32 %v1951, %v831
  %v1980 = vmul.f32 %v1950, %v835
  %v1981 = vmul.f32 %v1965, %v839
  %1982 = vrot.lane.b32.xlu0 %v1580, 112
  %v1983 = vpop.permute.xlu0 %1982
  %1984 = vrot.lane.b32.xlu0 %v1581, 112
  %v1985 = vpop.permute.xlu0 %1984
  %1986 = vrot.lane.b32.xlu0 %v1582, 112
  %v1987 = vpop.permute.xlu0 %1986
  %1988 = vrot.lane.b32.xlu0 %v1583, 112
  %v1989 = vpop.permute.xlu0 %1988
  %1990 = vrot.lane.b32.xlu0 %v1584, 112
  %v1991 = vpop.permute.xlu0 %1990
  %1992 = vrot.lane.b32.xlu0 %v1585, 112
  %v1993 = vpop.permute.xlu0 %1992
  %1994 = vrot.lane.b32.xlu0 %v1586, 112
  %v1995 = vpop.permute.xlu0 %1994
  %1996 = vrot.lane.b32.xlu0 %v1587, 112
  %v1997 = vpop.permute.xlu0 %1996
  %1998 = vrot.lane.b32.xlu0 %v1588, 112
  %v1999 = vpop.permute.xlu0 %1998
  %2000 = vrot.lane.b32.xlu0 %v1589, 112
  %v2001 = vpop.permute.xlu0 %2000
  %2002 = vrot.lane.b32.xlu0 %v1590, 112
  %v2003 = vpop.permute.xlu0 %2002
  %2004 = vrot.lane.b32.xlu0 %v1591, 112
  %v2005 = vpop.permute.xlu0 %2004
  %2006 = vrot.lane.b32.xlu0 %v1592, 112
  %v2007 = vpop.permute.xlu0 %2006
  %2008 = vrot.lane.b32.xlu0 %v1593, 112
  %v2009 = vpop.permute.xlu0 %2008
  %2010 = vrot.lane.b32.xlu0 %v1594, 112
  %v2011 = vpop.permute.xlu0 %2010
  %2012 = vrot.lane.b32.xlu0 %v1595, 112
  %v2013 = vpop.permute.xlu0 %2012
  %v2014 = vsel %vm888, %v2011, %v2013
  %v2015 = vsel %vm888, %v2009, %v2011
  %v2016 = vsel %vm888, %v2007, %v2009
  %v2017 = vsel %vm888, %v2005, %v2007
  %v2018 = vsel %vm888, %v2003, %v2005
  %v2019 = vsel %vm888, %v2001, %v2003
  %v2020 = vsel %vm888, %v1999, %v2001
  %v2021 = vsel %vm888, %v1997, %v1999
  %v2022 = vsel %vm888, %v1995, %v1997
  %v2023 = vsel %vm888, %v1993, %v1995
  %v2024 = vsel %vm888, %v1991, %v1993
  %v2025 = vsel %vm888, %v1989, %v1991
  %v2026 = vsel %vm888, %v1987, %v1989
  %v2027 = vsel %vm888, %v1985, %v1987
  %v2028 = vsel %vm888, %v1983, %v1985
  %v2029 = vsel %vm888, %v2013, %v1983
  %v2030 = vmul.f32 %v2028, %v908
  %v2031 = vmul.f32 %v2027, %v912
  %v2032 = vmul.f32 %v2026, %v916
  %v2033 = vmul.f32 %v2025, %v920
  %v2034 = vmul.f32 %v2024, %v924
  %v2035 = vmul.f32 %v2023, %v928
  %v2036 = vmul.f32 %v2022, %v932
  %v2037 = vmul.f32 %v2021, %v936
  %v2038 = vmul.f32 %v2020, %v940
  %v2039 = vmul.f32 %v2019, %v944
  %v2040 = vmul.f32 %v2018, %v948
  %v2041 = vmul.f32 %v2017, %v952
  %v2042 = vmul.f32 %v2016, %v956
  %v2043 = vmul.f32 %v2015, %v960
  %v2044 = vmul.f32 %v2014, %v964
  %v2045 = vmul.f32 %v2029, %v968
  %2046 = vrot.lane.b32.xlu0 %v1580, 111
  %v2047 = vpop.permute.xlu0 %2046
  %2048 = vrot.lane.b32.xlu0 %v1581, 111
  %v2049 = vpop.permute.xlu0 %2048
  %2050 = vrot.lane.b32.xlu0 %v1582, 111
  %v2051 = vpop.permute.xlu0 %2050
  %2052 = vrot.lane.b32.xlu0 %v1583, 111
  %v2053 = vpop.permute.xlu0 %2052
  %2054 = vrot.lane.b32.xlu0 %v1584, 111
  %v2055 = vpop.permute.xlu0 %2054
  %2056 = vrot.lane.b32.xlu0 %v1585, 111
  %v2057 = vpop.permute.xlu0 %2056
  %2058 = vrot.lane.b32.xlu0 %v1586, 111
  %v2059 = vpop.permute.xlu0 %2058
  %2060 = vrot.lane.b32.xlu0 %v1587, 111
  %v2061 = vpop.permute.xlu0 %2060
  %2062 = vrot.lane.b32.xlu0 %v1588, 111
  %v2063 = vpop.permute.xlu0 %2062
  %2064 = vrot.lane.b32.xlu0 %v1589, 111
  %v2065 = vpop.permute.xlu0 %2064
  %2066 = vrot.lane.b32.xlu0 %v1590, 111
  %v2067 = vpop.permute.xlu0 %2066
  %2068 = vrot.lane.b32.xlu0 %v1591, 111
  %v2069 = vpop.permute.xlu0 %2068
  %2070 = vrot.lane.b32.xlu0 %v1592, 111
  %v2071 = vpop.permute.xlu0 %2070
  %2072 = vrot.lane.b32.xlu0 %v1593, 111
  %v2073 = vpop.permute.xlu0 %2072
  %2074 = vrot.lane.b32.xlu0 %v1594, 111
  %v2075 = vpop.permute.xlu0 %2074
  %2076 = vrot.lane.b32.xlu0 %v1595, 111
  %v2077 = vpop.permute.xlu0 %2076
  %v2078 = vsel %vm1017, %v2075, %v2077
  %v2079 = vsel %vm1017, %v2073, %v2075
  %v2080 = vsel %vm1017, %v2071, %v2073
  %v2081 = vsel %vm1017, %v2069, %v2071
  %v2082 = vsel %vm1017, %v2067, %v2069
  %v2083 = vsel %vm1017, %v2065, %v2067
  %v2084 = vsel %vm1017, %v2063, %v2065
  %v2085 = vsel %vm1017, %v2061, %v2063
  %v2086 = vsel %vm1017, %v2059, %v2061
  %v2087 = vsel %vm1017, %v2057, %v2059
  %v2088 = vsel %vm1017, %v2055, %v2057
  %v2089 = vsel %vm1017, %v2053, %v2055
  %v2090 = vsel %vm1017, %v2051, %v2053
  %v2091 = vsel %vm1017, %v2049, %v2051
  %v2092 = vsel %vm1017, %v2047, %v2049
  %v2093 = vsel %vm1017, %v2077, %v2047
  %v2094 = vmul.f32 %v2092, %v1037
  %v2095 = vmul.f32 %v2091, %v1041
  %v2096 = vmul.f32 %v2090, %v1045
  %v2097 = vmul.f32 %v2089, %v1049
  %v2098 = vmul.f32 %v2088, %v1053
  %v2099 = vmul.f32 %v2087, %v1057
  %v2100 = vmul.f32 %v2086, %v1061
  %v2101 = vmul.f32 %v2085, %v1065
  %v2102 = vmul.f32 %v2084, %v1069
  %v2103 = vmul.f32 %v2083, %v1073
  %v2104 = vmul.f32 %v2082, %v1077
  %v2105 = vmul.f32 %v2081, %v1081
  %v2106 = vmul.f32 %v2080, %v1085
  %v2107 = vmul.f32 %v2079, %v1089
  %v2108 = vmul.f32 %v2078, %v1093
  %v2109 = vmul.f32 %v2093, %v1097
  %v2110 = vpack.c.bf16 %v1710, %v1646
  %v2111 = vpack.c.bf16 %v1711, %v1647
  %v2112 = vpack.c.bf16 %v1712, %v1648
  %v2113 = vpack.c.bf16 %v1713, %v1649
  %v2114 = vpack.c.bf16 %v1714, %v1650
  %v2115 = vpack.c.bf16 %v1715, %v1651
  %v2116 = vpack.c.bf16 %v1716, %v1652
  %v2117 = vpack.c.bf16 %v1717, %v1653
  %v2118 = vpack.c.bf16 %v1718, %v1654
  %v2119 = vpack.c.bf16 %v1719, %v1655
  %v2120 = vpack.c.bf16 %v1720, %v1656
  %v2121 = vpack.c.bf16 %v1721, %v1657
  %v2122 = vpack.c.bf16 %v1722, %v1658
  %v2123 = vpack.c.bf16 %v1723, %v1659
  %v2124 = vpack.c.bf16 %v1724, %v1660
  %v2125 = vpack.c.bf16 %v1725, %v1661
  %v2126 = vpack.c.bf16 %v1838, %v1774
  %v2127 = vpack.c.bf16 %v1839, %v1775
  %v2128 = vpack.c.bf16 %v1840, %v1776
  %v2129 = vpack.c.bf16 %v1841, %v1777
  %v2130 = vpack.c.bf16 %v1842, %v1778
  %v2131 = vpack.c.bf16 %v1843, %v1779
  %v2132 = vpack.c.bf16 %v1844, %v1780
  %v2133 = vpack.c.bf16 %v1845, %v1781
  %v2134 = vpack.c.bf16 %v1846, %v1782
  %v2135 = vpack.c.bf16 %v1847, %v1783
  %v2136 = vpack.c.bf16 %v1848, %v1784
  %v2137 = vpack.c.bf16 %v1849, %v1785
  %v2138 = vpack.c.bf16 %v1850, %v1786
  %v2139 = vpack.c.bf16 %v1851, %v1787
  %v2140 = vpack.c.bf16 %v1852, %v1788
  %v2141 = vpack.c.bf16 %v1853, %v1789
  %v2142 = vpack.c.bf16 %v1902, %v1580
  %v2143 = vpack.c.bf16 %v1903, %v1581
  %v2144 = vpack.c.bf16 %v1904, %v1582
  %v2145 = vpack.c.bf16 %v1905, %v1583
  %v2146 = vpack.c.bf16 %v1906, %v1584
  %v2147 = vpack.c.bf16 %v1907, %v1585
  %v2148 = vpack.c.bf16 %v1908, %v1586
  %v2149 = vpack.c.bf16 %v1909, %v1587
  %v2150 = vpack.c.bf16 %v1910, %v1588
  %v2151 = vpack.c.bf16 %v1911, %v1589
  %v2152 = vpack.c.bf16 %v1912, %v1590
  %v2153 = vpack.c.bf16 %v1913, %v1591
  %v2154 = vpack.c.bf16 %v1914, %v1592
  %v2155 = vpack.c.bf16 %v1915, %v1593
  %v2156 = vpack.c.bf16 %v1916, %v1594
  %v2157 = vpack.c.bf16 %v1917, %v1595
  %v2158 = vpack.c.bf16 %v2030, %v1966
  %v2159 = vpack.c.bf16 %v2031, %v1967
  %v2160 = vpack.c.bf16 %v2032, %v1968
  %v2161 = vpack.c.bf16 %v2033, %v1969
  %v2162 = vpack.c.bf16 %v2034, %v1970
  %v2163 = vpack.c.bf16 %v2035, %v1971
  %v2164 = vpack.c.bf16 %v2036, %v1972
  %v2165 = vpack.c.bf16 %v2037, %v1973
  %v2166 = vpack.c.bf16 %v2038, %v1974
  %v2167 = vpack.c.bf16 %v2039, %v1975
  %v2168 = vpack.c.bf16 %v2040, %v1976
  %v2169 = vpack.c.bf16 %v2041, %v1977
  %v2170 = vpack.c.bf16 %v2042, %v1978
  %v2171 = vpack.c.bf16 %v2043, %v1979
  %v2172 = vpack.c.bf16 %v2044, %v1980
  %v2173 = vpack.c.bf16 %v2045, %v1981
  %v2174 = vpack.c.bf16 %v2094, %v2094
  %v2175 = vpack.c.bf16 %v2095, %v2095
  %v2176 = vpack.c.bf16 %v2096, %v2096
  %v2177 = vpack.c.bf16 %v2097, %v2097
  %v2178 = vpack.c.bf16 %v2098, %v2098
  %v2179 = vpack.c.bf16 %v2099, %v2099
  %v2180 = vpack.c.bf16 %v2100, %v2100
  %v2181 = vpack.c.bf16 %v2101, %v2101
  %v2182 = vpack.c.bf16 %v2102, %v2102
  %v2183 = vpack.c.bf16 %v2103, %v2103
  %v2184 = vpack.c.bf16 %v2104, %v2104
  %v2185 = vpack.c.bf16 %v2105, %v2105
  %v2186 = vpack.c.bf16 %v2106, %v2106
  %v2187 = vpack.c.bf16 %v2107, %v2107
  %v2188 = vpack.c.bf16 %v2108, %v2108
  %v2189 = vpack.c.bf16 %v2109, %v2109
  %2191 = vset.pattern.permute.xlu0 0
  %2192 = vperm.xlu0 %2191, %v1597
  %v2193 = vpop.permute.xlu0 %2192
  %v2196 = vsel %vm1199, %v1596, 0
  %v2199 = vsel %vm1203, %v2174, 0
  %v2202 = vsel %vm1203, %v2175, 0
  %v2205 = vsel %vm1203, %v2176, 0
  %v2208 = vsel %vm1203, %v2177, 0
  %v2211 = vsel %vm1203, %v2178, 0
  %v2214 = vsel %vm1203, %v2179, 0
  %v2217 = vsel %vm1203, %v2180, 0
  %v2220 = vsel %vm1203, %v2181, 0
  %v2223 = vsel %vm1203, %v2182, 0
  %v2226 = vsel %vm1203, %v2183, 0
  %v2229 = vsel %vm1203, %v2184, 0
  %v2232 = vsel %vm1203, %v2185, 0
  %v2235 = vsel %vm1203, %v2186, 0
  %v2238 = vsel %vm1203, %v2187, 0
  %v2241 = vsel %vm1203, %v2188, 0
  %v2244 = vsel %vm1203, %v2189, 0
  %2246 = vmatprep.subr.bf16.mxu0 0
  %2247 = vmatpush1.bf16.msra.mxu0 0
  %2248 = vmatprep.subr.bf16.mxu0 0
  %2249 = vmatpush1.bf16.msra.mxu0 0
  %2250 = vmatprep.subr.bf16.mxu0 0
  %2251 = vmatpush1.bf16.msra.mxu0 0
  %2252 = vmatprep.subr.bf16.mxu0 %v2202
  %2253 = vmatpush1.bf16.msra.mxu0 %v2199
  %2254 = vmatprep.subr.bf16.mxu0 %v2159
  %2255 = vmatpush1.bf16.msra.mxu0 %v2158
  %2256 = vmatprep.subr.bf16.mxu0 %v2143
  %2257 = vmatpush1.bf16.msra.mxu0 %v2142
  %2258 = vmatprep.subr.bf16.mxu0 %v2127
  %2259 = vmatpush1.bf16.msra.mxu0 %v2126
  %2260 = vmatprep.subr.bf16.mxu0 %v2111
  %2261 = vmatpush1.bf16.msra.mxu0 %v2110
  %2262 = vmatprep.subr.bf16.mxu0 0
  %2263 = vmatpush2.bf16.msra.mxu0 0
  %2264 = vmatprep.subr.bf16.mxu0 0
  %2265 = vmatpush2.bf16.msra.mxu0 0
  %2266 = vmatprep.subr.bf16.mxu0 0
  %2267 = vmatpush2.bf16.msra.mxu0 0
  %2268 = vmatprep.subr.bf16.mxu0 0
  %2269 = vmatpush2.bf16.msra.mxu0 0
  %2270 = vmatprep.subr.bf16.mxu0 0
  %2271 = vmatpush2.bf16.msra.mxu0 0
  %2272 = vmatprep.subr.bf16.mxu0 0
  %2273 = vmatpush2.bf16.msra.mxu0 0
  %2274 = vmatprep.subr.bf16.mxu0 0
  %2275 = vmatpush2.bf16.msra.mxu0 0
  %2276 = vmatprep.subr.bf16.mxu0 0
  %2277 = vmatpush2.bf16.msra.mxu0 0
  %2278 = vmatprep.mubr.bf16.mxu0 0
  %2279 = vmatmul.mubr.bf16.gmra.mxu0 %v2196
  %v2280 = vpop.f32.mrf.mxu0
  %v2281 = vadd.f32 %v2193, %v2280
  %v2282 = vpop.f32.mrf.mxu0
  %v2283 = vadd.f32 %v2193, %v2282
  %v2284 = vpop.f32.mrf.mxu0
  %v2285 = vpop.f32.mrf.mxu0
  %2286 = vdwg.mxu0
  %2287 = vmatprep.subr.bf16.mxu0 0
  %2288 = vmatpush1.bf16.msra.mxu0 0
  %2289 = vmatprep.subr.bf16.mxu0 0
  %2290 = vmatpush1.bf16.msra.mxu0 0
  %2291 = vmatprep.subr.bf16.mxu0 0
  %2292 = vmatpush1.bf16.msra.mxu0 0
  %2293 = vmatprep.subr.bf16.mxu0 %v2208
  %2294 = vmatpush1.bf16.msra.mxu0 %v2205
  %2295 = vmatprep.subr.bf16.mxu0 %v2161
  %2296 = vmatpush1.bf16.msra.mxu0 %v2160
  %2297 = vmatprep.subr.bf16.mxu0 %v2145
  %2298 = vmatpush1.bf16.msra.mxu0 %v2144
  %2299 = vmatprep.subr.bf16.mxu0 %v2129
  %2300 = vmatpush1.bf16.msra.mxu0 %v2128
  %2301 = vmatprep.subr.bf16.mxu0 %v2113
  %2302 = vmatpush1.bf16.msra.mxu0 %v2112
  %2303 = vmatprep.subr.bf16.mxu0 0
  %2304 = vmatpush2.bf16.msra.mxu0 0
  %2305 = vmatprep.subr.bf16.mxu0 0
  %2306 = vmatpush2.bf16.msra.mxu0 0
  %2307 = vmatprep.subr.bf16.mxu0 0
  %2308 = vmatpush2.bf16.msra.mxu0 0
  %2309 = vmatprep.subr.bf16.mxu0 0
  %2310 = vmatpush2.bf16.msra.mxu0 0
  %2311 = vmatprep.subr.bf16.mxu0 0
  %2312 = vmatpush2.bf16.msra.mxu0 0
  %2313 = vmatprep.subr.bf16.mxu0 0
  %2314 = vmatpush2.bf16.msra.mxu0 0
  %2315 = vmatprep.subr.bf16.mxu0 0
  %2316 = vmatpush2.bf16.msra.mxu0 0
  %2317 = vmatprep.subr.bf16.mxu0 0
  %2318 = vmatpush2.bf16.msra.mxu0 0
  %2319 = vmatprep.mubr.bf16.mxu0 0
  %2320 = vmatmul.mubr.bf16.gmra.mxu0 %v2196
  %v2321 = vpop.f32.mrf.mxu0
  %v2322 = vadd.f32 %v2193, %v2321
  %v2323 = vpop.f32.mrf.mxu0
  %v2324 = vadd.f32 %v2193, %v2323
  %v2325 = vpop.f32.mrf.mxu0
  %v2326 = vpop.f32.mrf.mxu0
  %2327 = vdwg.mxu0
  %2328 = vmatprep.subr.bf16.mxu0 0
  %2329 = vmatpush1.bf16.msra.mxu0 0
  %2330 = vmatprep.subr.bf16.mxu0 0
  %2331 = vmatpush1.bf16.msra.mxu0 0
  %2332 = vmatprep.subr.bf16.mxu0 0
  %2333 = vmatpush1.bf16.msra.mxu0 0
  %2334 = vmatprep.subr.bf16.mxu0 %v2214
  %2335 = vmatpush1.bf16.msra.mxu0 %v2211
  %2336 = vmatprep.subr.bf16.mxu0 %v2163
  %2337 = vmatpush1.bf16.msra.mxu0 %v2162
  %2338 = vmatprep.subr.bf16.mxu0 %v2147
  %2339 = vmatpush1.bf16.msra.mxu0 %v2146
  %2340 = vmatprep.subr.bf16.mxu0 %v2131
  %2341 = vmatpush1.bf16.msra.mxu0 %v2130
  %2342 = vmatprep.subr.bf16.mxu0 %v2115
  %2343 = vmatpush1.bf16.msra.mxu0 %v2114
  %2344 = vmatprep.subr.bf16.mxu0 0
  %2345 = vmatpush2.bf16.msra.mxu0 0
  %2346 = vmatprep.subr.bf16.mxu0 0
  %2347 = vmatpush2.bf16.msra.mxu0 0
  %2348 = vmatprep.subr.bf16.mxu0 0
  %2349 = vmatpush2.bf16.msra.mxu0 0
  %2350 = vmatprep.subr.bf16.mxu0 0
  %2351 = vmatpush2.bf16.msra.mxu0 0
  %2352 = vmatprep.subr.bf16.mxu0 0
  %2353 = vmatpush2.bf16.msra.mxu0 0
  %2354 = vmatprep.subr.bf16.mxu0 0
  %2355 = vmatpush2.bf16.msra.mxu0 0
  %2356 = vmatprep.subr.bf16.mxu0 0
  %2357 = vmatpush2.bf16.msra.mxu0 0
  %2358 = vmatprep.subr.bf16.mxu0 0
  %2359 = vmatpush2.bf16.msra.mxu0 0
  %2360 = vmatprep.mubr.bf16.mxu0 0
  %2361 = vmatmul.mubr.bf16.gmra.mxu0 %v2196
  %v2362 = vpop.f32.mrf.mxu0
  %v2363 = vadd.f32 %v2193, %v2362
  %v2364 = vpop.f32.mrf.mxu0
  %v2365 = vadd.f32 %v2193, %v2364
  %v2366 = vpop.f32.mrf.mxu0
  %v2367 = vpop.f32.mrf.mxu0
  %2368 = vdwg.mxu0
  %2369 = vmatprep.subr.bf16.mxu0 0
  %2370 = vmatpush1.bf16.msra.mxu0 0
  %2371 = vmatprep.subr.bf16.mxu0 0
  %2372 = vmatpush1.bf16.msra.mxu0 0
  %2373 = vmatprep.subr.bf16.mxu0 0
  %2374 = vmatpush1.bf16.msra.mxu0 0
  %2375 = vmatprep.subr.bf16.mxu0 %v2220
  %2376 = vmatpush1.bf16.msra.mxu0 %v2217
  %2377 = vmatprep.subr.bf16.mxu0 %v2165
  %2378 = vmatpush1.bf16.msra.mxu0 %v2164
  %2379 = vmatprep.subr.bf16.mxu0 %v2149
  %2380 = vmatpush1.bf16.msra.mxu0 %v2148
  %2381 = vmatprep.subr.bf16.mxu0 %v2133
  %2382 = vmatpush1.bf16.msra.mxu0 %v2132
  %2383 = vmatprep.subr.bf16.mxu0 %v2117
  %2384 = vmatpush1.bf16.msra.mxu0 %v2116
  %2385 = vmatprep.subr.bf16.mxu0 0
  %2386 = vmatpush2.bf16.msra.mxu0 0
  %2387 = vmatprep.subr.bf16.mxu0 0
  %2388 = vmatpush2.bf16.msra.mxu0 0
  %2389 = vmatprep.subr.bf16.mxu0 0
  %2390 = vmatpush2.bf16.msra.mxu0 0
  %2391 = vmatprep.subr.bf16.mxu0 0
  %2392 = vmatpush2.bf16.msra.mxu0 0
  %2393 = vmatprep.subr.bf16.mxu0 0
  %2394 = vmatpush2.bf16.msra.mxu0 0
  %2395 = vmatprep.subr.bf16.mxu0 0
  %2396 = vmatpush2.bf16.msra.mxu0 0
  %2397 = vmatprep.subr.bf16.mxu0 0
  %2398 = vmatpush2.bf16.msra.mxu0 0
  %2399 = vmatprep.subr.bf16.mxu0 0
  %2400 = vmatpush2.bf16.msra.mxu0 0
  %2401 = vmatprep.mubr.bf16.mxu0 0
  %2402 = vmatmul.mubr.bf16.gmra.mxu0 %v2196
  %v2403 = vpop.f32.mrf.mxu0
  %v2404 = vadd.f32 %v2193, %v2403
  %v2405 = vpop.f32.mrf.mxu0
  %v2406 = vadd.f32 %v2193, %v2405
  %v2407 = vpop.f32.mrf.mxu0
  %v2408 = vpop.f32.mrf.mxu0
  %2409 = vdwg.mxu0
  %2410 = vmatprep.subr.bf16.mxu0 0
  %2411 = vmatpush1.bf16.msra.mxu0 0
  %2412 = vmatprep.subr.bf16.mxu0 0
  %2413 = vmatpush1.bf16.msra.mxu0 0
  %2414 = vmatprep.subr.bf16.mxu0 0
  %2415 = vmatpush1.bf16.msra.mxu0 0
  %2416 = vmatprep.subr.bf16.mxu0 %v2226
  %2417 = vmatpush1.bf16.msra.mxu0 %v2223
  %2418 = vmatprep.subr.bf16.mxu0 %v2167
  %2419 = vmatpush1.bf16.msra.mxu0 %v2166
  %2420 = vmatprep.subr.bf16.mxu0 %v2151
  %2421 = vmatpush1.bf16.msra.mxu0 %v2150
  %2422 = vmatprep.subr.bf16.mxu0 %v2135
  %2423 = vmatpush1.bf16.msra.mxu0 %v2134
  %2424 = vmatprep.subr.bf16.mxu0 %v2119
  %2425 = vmatpush1.bf16.msra.mxu0 %v2118
  %2426 = vmatprep.subr.bf16.mxu0 0
  %2427 = vmatpush2.bf16.msra.mxu0 0
  %2428 = vmatprep.subr.bf16.mxu0 0
  %2429 = vmatpush2.bf16.msra.mxu0 0
  %2430 = vmatprep.subr.bf16.mxu0 0
  %2431 = vmatpush2.bf16.msra.mxu0 0
  %2432 = vmatprep.subr.bf16.mxu0 0
  %2433 = vmatpush2.bf16.msra.mxu0 0
  %2434 = vmatprep.subr.bf16.mxu0 0
  %2435 = vmatpush2.bf16.msra.mxu0 0
  %2436 = vmatprep.subr.bf16.mxu0 0
  %2437 = vmatpush2.bf16.msra.mxu0 0
  %2438 = vmatprep.subr.bf16.mxu0 0
  %2439 = vmatpush2.bf16.msra.mxu0 0
  %2440 = vmatprep.subr.bf16.mxu0 0
  %2441 = vmatpush2.bf16.msra.mxu0 0
  %2442 = vmatprep.mubr.bf16.mxu0 0
  %2443 = vmatmul.mubr.bf16.gmra.mxu0 %v2196
  %v2444 = vpop.f32.mrf.mxu0
  %v2445 = vadd.f32 %v2193, %v2444
  %v2446 = vpop.f32.mrf.mxu0
  %v2447 = vadd.f32 %v2193, %v2446
  %v2448 = vpop.f32.mrf.mxu0
  %v2449 = vpop.f32.mrf.mxu0
  %2450 = vdwg.mxu0
  %2451 = vmatprep.subr.bf16.mxu0 0
  %2452 = vmatpush1.bf16.msra.mxu0 0
  %2453 = vmatprep.subr.bf16.mxu0 0
  %2454 = vmatpush1.bf16.msra.mxu0 0
  %2455 = vmatprep.subr.bf16.mxu0 0
  %2456 = vmatpush1.bf16.msra.mxu0 0
  %2457 = vmatprep.subr.bf16.mxu0 %v2232
  %2458 = vmatpush1.bf16.msra.mxu0 %v2229
  %2459 = vmatprep.subr.bf16.mxu0 %v2169
  %2460 = vmatpush1.bf16.msra.mxu0 %v2168
  %2461 = vmatprep.subr.bf16.mxu0 %v2153
  %2462 = vmatpush1.bf16.msra.mxu0 %v2152
  %2463 = vmatprep.subr.bf16.mxu0 %v2137
  %2464 = vmatpush1.bf16.msra.mxu0 %v2136
  %2465 = vmatprep.subr.bf16.mxu0 %v2121
  %2466 = vmatpush1.bf16.msra.mxu0 %v2120
  %2467 = vmatprep.subr.bf16.mxu0 0
  %2468 = vmatpush2.bf16.msra.mxu0 0
  %2469 = vmatprep.subr.bf16.mxu0 0
  %2470 = vmatpush2.bf16.msra.mxu0 0
  %2471 = vmatprep.subr.bf16.mxu0 0
  %2472 = vmatpush2.bf16.msra.mxu0 0
  %2473 = vmatprep.subr.bf16.mxu0 0
  %2474 = vmatpush2.bf16.msra.mxu0 0
  %2475 = vmatprep.subr.bf16.mxu0 0
  %2476 = vmatpush2.bf16.msra.mxu0 0
  %2477 = vmatprep.subr.bf16.mxu0 0
  %2478 = vmatpush2.bf16.msra.mxu0 0
  %2479 = vmatprep.subr.bf16.mxu0 0
  %2480 = vmatpush2.bf16.msra.mxu0 0
  %2481 = vmatprep.subr.bf16.mxu0 0
  %2482 = vmatpush2.bf16.msra.mxu0 0
  %2483 = vmatprep.mubr.bf16.mxu0 0
  %2484 = vmatmul.mubr.bf16.gmra.mxu0 %v2196
  %v2485 = vpop.f32.mrf.mxu0
  %v2486 = vadd.f32 %v2193, %v2485
  %v2487 = vpop.f32.mrf.mxu0
  %v2488 = vadd.f32 %v2193, %v2487
  %v2489 = vpop.f32.mrf.mxu0
  %v2490 = vpop.f32.mrf.mxu0
  %2491 = vdwg.mxu0
  %2492 = vmatprep.subr.bf16.mxu0 0
  %2493 = vmatpush1.bf16.msra.mxu0 0
  %2494 = vmatprep.subr.bf16.mxu0 0
  %2495 = vmatpush1.bf16.msra.mxu0 0
  %2496 = vmatprep.subr.bf16.mxu0 0
  %2497 = vmatpush1.bf16.msra.mxu0 0
  %2498 = vmatprep.subr.bf16.mxu0 %v2238
  %2499 = vmatpush1.bf16.msra.mxu0 %v2235
  %2500 = vmatprep.subr.bf16.mxu0 %v2171
  %2501 = vmatpush1.bf16.msra.mxu0 %v2170
  %2502 = vmatprep.subr.bf16.mxu0 %v2155
  %2503 = vmatpush1.bf16.msra.mxu0 %v2154
  %2504 = vmatprep.subr.bf16.mxu0 %v2139
  %2505 = vmatpush1.bf16.msra.mxu0 %v2138
  %2506 = vmatprep.subr.bf16.mxu0 %v2123
  %2507 = vmatpush1.bf16.msra.mxu0 %v2122
  %2508 = vmatprep.subr.bf16.mxu0 0
  %2509 = vmatpush2.bf16.msra.mxu0 0
  %2510 = vmatprep.subr.bf16.mxu0 0
  %2511 = vmatpush2.bf16.msra.mxu0 0
  %2512 = vmatprep.subr.bf16.mxu0 0
  %2513 = vmatpush2.bf16.msra.mxu0 0
  %2514 = vmatprep.subr.bf16.mxu0 0
  %2515 = vmatpush2.bf16.msra.mxu0 0
  %2516 = vmatprep.subr.bf16.mxu0 0
  %2517 = vmatpush2.bf16.msra.mxu0 0
  %2518 = vmatprep.subr.bf16.mxu0 0
  %2519 = vmatpush2.bf16.msra.mxu0 0
  %2520 = vmatprep.subr.bf16.mxu0 0
  %2521 = vmatpush2.bf16.msra.mxu0 0
  %2522 = vmatprep.subr.bf16.mxu0 0
  %2523 = vmatpush2.bf16.msra.mxu0 0
  %2524 = vmatprep.mubr.bf16.mxu0 0
  %2525 = vmatmul.mubr.bf16.gmra.mxu0 %v2196
  %v2526 = vpop.f32.mrf.mxu0
  %v2527 = vadd.f32 %v2193, %v2526
  %v2528 = vpop.f32.mrf.mxu0
  %v2529 = vadd.f32 %v2193, %v2528
  %v2530 = vpop.f32.mrf.mxu0
  %v2531 = vpop.f32.mrf.mxu0
  %2532 = vdwg.mxu0
  %2533 = vmatprep.subr.bf16.mxu0 0
  %2534 = vmatpush1.bf16.msra.mxu0 0
  %2535 = vmatprep.subr.bf16.mxu0 0
  %2536 = vmatpush1.bf16.msra.mxu0 0
  %2537 = vmatprep.subr.bf16.mxu0 0
  %2538 = vmatpush1.bf16.msra.mxu0 0
  %2539 = vmatprep.subr.bf16.mxu0 %v2244
  %2540 = vmatpush1.bf16.msra.mxu0 %v2241
  %2541 = vmatprep.subr.bf16.mxu0 %v2173
  %2542 = vmatpush1.bf16.msra.mxu0 %v2172
  %2543 = vmatprep.subr.bf16.mxu0 %v2157
  %2544 = vmatpush1.bf16.msra.mxu0 %v2156
  %2545 = vmatprep.subr.bf16.mxu0 %v2141
  %2546 = vmatpush1.bf16.msra.mxu0 %v2140
  %2547 = vmatprep.subr.bf16.mxu0 %v2125
  %2548 = vmatpush1.bf16.msra.mxu0 %v2124
  %2549 = vmatprep.subr.bf16.mxu0 0
  %2550 = vmatpush2.bf16.msra.mxu0 0
  %2551 = vmatprep.subr.bf16.mxu0 0
  %2552 = vmatpush2.bf16.msra.mxu0 0
  %2553 = vmatprep.subr.bf16.mxu0 0
  %2554 = vmatpush2.bf16.msra.mxu0 0
  %2555 = vmatprep.subr.bf16.mxu0 0
  %2556 = vmatpush2.bf16.msra.mxu0 0
  %2557 = vmatprep.subr.bf16.mxu0 0
  %2558 = vmatpush2.bf16.msra.mxu0 0
  %2559 = vmatprep.subr.bf16.mxu0 0
  %2560 = vmatpush2.bf16.msra.mxu0 0
  %2561 = vmatprep.subr.bf16.mxu0 0
  %2562 = vmatpush2.bf16.msra.mxu0 0
  %2563 = vmatprep.subr.bf16.mxu0 0
  %2564 = vmatpush2.bf16.msra.mxu0 0
  %2565 = vmatprep.mubr.bf16.mxu0 0
  %2566 = vmatmul.mubr.bf16.gmra.mxu0 %v2196
  %v2567 = vpop.f32.mrf.mxu0
  %v2568 = vadd.f32 %v2193, %v2567
  %v2569 = vpop.f32.mrf.mxu0
  %v2570 = vadd.f32 %v2193, %v2569
  %v2571 = vpop.f32.mrf.mxu0
  %v2572 = vpop.f32.mrf.mxu0
  %2573 = vdwg.mxu0
  %v2574 = vmax.f32 %v2281, 0.0
  %v2575 = vmax.f32 %v2283, 0.0
  %v2576 = vmax.f32 %v2322, 0.0
  %v2577 = vmax.f32 %v2324, 0.0
  %v2578 = vmax.f32 %v2363, 0.0
  %v2579 = vmax.f32 %v2365, 0.0
  %v2580 = vmax.f32 %v2404, 0.0
  %v2581 = vmax.f32 %v2406, 0.0
  %v2582 = vmax.f32 %v2445, 0.0
  %v2583 = vmax.f32 %v2447, 0.0
  %v2584 = vmax.f32 %v2486, 0.0
  %v2585 = vmax.f32 %v2488, 0.0
  %v2586 = vmax.f32 %v2527, 0.0
  %v2587 = vmax.f32 %v2529, 0.0
  %v2588 = vmax.f32 %v2568, 0.0
  %v2589 = vmax.f32 %v2570, 0.0
  %v2590 = vld [vmem:[%s6] sm:$0x1]
  %v2591 = vld [vmem:[%s7] sm:$0x3]
  %2592 = vrot.lane.b32.xlu0 %v2574, 17
  %v2593 = vpop.permute.xlu0 %2592
  %2594 = vrot.lane.b32.xlu0 %v2575, 17
  %v2595 = vpop.permute.xlu0 %2594
  %2596 = vrot.lane.b32.xlu0 %v2576, 17
  %v2597 = vpop.permute.xlu0 %2596
  %2598 = vrot.lane.b32.xlu0 %v2577, 17
  %v2599 = vpop.permute.xlu0 %2598
  %2600 = vrot.lane.b32.xlu0 %v2578, 17
  %v2601 = vpop.permute.xlu0 %2600
  %2602 = vrot.lane.b32.xlu0 %v2579, 17
  %v2603 = vpop.permute.xlu0 %2602
  %2604 = vrot.lane.b32.xlu0 %v2580, 17
  %v2605 = vpop.permute.xlu0 %2604
  %2606 = vrot.lane.b32.xlu0 %v2581, 17
  %v2607 = vpop.permute.xlu0 %2606
  %2608 = vrot.lane.b32.xlu0 %v2582, 17
  %v2609 = vpop.permute.xlu0 %2608
  %2610 = vrot.lane.b32.xlu0 %v2583, 17
  %v2611 = vpop.permute.xlu0 %2610
  %2612 = vrot.lane.b32.xlu0 %v2584, 17
  %v2613 = vpop.permute.xlu0 %2612
  %2614 = vrot.lane.b32.xlu0 %v2585, 17
  %v2615 = vpop.permute.xlu0 %2614
  %2616 = vrot.lane.b32.xlu0 %v2586, 17
  %v2617 = vpop.permute.xlu0 %2616
  %2618 = vrot.lane.b32.xlu0 %v2587, 17
  %v2619 = vpop.permute.xlu0 %2618
  %2620 = vrot.lane.b32.xlu0 %v2588, 17
  %v2621 = vpop.permute.xlu0 %2620
  %2622 = vrot.lane.b32.xlu0 %v2589, 17
  %v2623 = vpop.permute.xlu0 %2622
  %v2624 = vsel %vm114, %v2621, %v2623
  %v2625 = vsel %vm114, %v2619, %v2621
  %v2626 = vsel %vm114, %v2617, %v2619
  %v2627 = vsel %vm114, %v2615, %v2617
  %v2628 = vsel %vm114, %v2613, %v2615
  %v2629 = vsel %vm114, %v2611, %v2613
  %v2630 = vsel %vm114, %v2609, %v2611
  %v2631 = vsel %vm114, %v2607, %v2609
  %v2632 = vsel %vm114, %v2605, %v2607
  %v2633 = vsel %vm114, %v2603, %v2605
  %v2634 = vsel %vm114, %v2601, %v2603
  %v2635 = vsel %vm114, %v2599, %v2601
  %v2636 = vsel %vm114, %v2597, %v2599
  %v2637 = vsel %vm114, %v2595, %v2597
  %v2638 = vsel %vm114, %v2593, %v2595
  %v2639 = vsel %vm114, %v2623, %v2593
  %v2640 = vmul.f32 %v2639, %v134
  %v2641 = vmul.f32 %v2638, %v138
  %v2642 = vmul.f32 %v2637, %v142
  %v2643 = vmul.f32 %v2636, %v146
  %v2644 = vmul.f32 %v2635, %v150
  %v2645 = vmul.f32 %v2634, %v154
  %v2646 = vmul.f32 %v2633, %v158
  %v2647 = vmul.f32 %v2632, %v162
  %v2648 = vmul.f32 %v2631, %v166
  %v2649 = vmul.f32 %v2630, %v170
  %v2650 = vmul.f32 %v2629, %v174
  %v2651 = vmul.f32 %v2628, %v178
  %v2652 = vmul.f32 %v2627, %v182
  %v2653 = vmul.f32 %v2626, %v186
  %v2654 = vmul.f32 %v2625, %v190
  %v2655 = vmul.f32 %v2624, %v194
  %2656 = vrot.lane.b32.xlu0 %v2574, 16
  %v2657 = vpop.permute.xlu0 %2656
  %2658 = vrot.lane.b32.xlu0 %v2575, 16
  %v2659 = vpop.permute.xlu0 %2658
  %2660 = vrot.lane.b32.xlu0 %v2576, 16
  %v2661 = vpop.permute.xlu0 %2660
  %2662 = vrot.lane.b32.xlu0 %v2577, 16
  %v2663 = vpop.permute.xlu0 %2662
  %2664 = vrot.lane.b32.xlu0 %v2578, 16
  %v2665 = vpop.permute.xlu0 %2664
  %2666 = vrot.lane.b32.xlu0 %v2579, 16
  %v2667 = vpop.permute.xlu0 %2666
  %2668 = vrot.lane.b32.xlu0 %v2580, 16
  %v2669 = vpop.permute.xlu0 %2668
  %2670 = vrot.lane.b32.xlu0 %v2581, 16
  %v2671 = vpop.permute.xlu0 %2670
  %2672 = vrot.lane.b32.xlu0 %v2582, 16
  %v2673 = vpop.permute.xlu0 %2672
  %2674 = vrot.lane.b32.xlu0 %v2583, 16
  %v2675 = vpop.permute.xlu0 %2674
  %2676 = vrot.lane.b32.xlu0 %v2584, 16
  %v2677 = vpop.permute.xlu0 %2676
  %2678 = vrot.lane.b32.xlu0 %v2585, 16
  %v2679 = vpop.permute.xlu0 %2678
  %2680 = vrot.lane.b32.xlu0 %v2586, 16
  %v2681 = vpop.permute.xlu0 %2680
  %2682 = vrot.lane.b32.xlu0 %v2587, 16
  %v2683 = vpop.permute.xlu0 %2682
  %2684 = vrot.lane.b32.xlu0 %v2588, 16
  %v2685 = vpop.permute.xlu0 %2684
  %2686 = vrot.lane.b32.xlu0 %v2589, 16
  %v2687 = vpop.permute.xlu0 %2686
  %v2688 = vsel %vm243, %v2685, %v2687
  %v2689 = vsel %vm243, %v2683, %v2685
  %v2690 = vsel %vm243, %v2681, %v2683
  %v2691 = vsel %vm243, %v2679, %v2681
  %v2692 = vsel %vm243, %v2677, %v2679
  %v2693 = vsel %vm243, %v2675, %v2677
  %v2694 = vsel %vm243, %v2673, %v2675
  %v2695 = vsel %vm243, %v2671, %v2673
  %v2696 = vsel %vm243, %v2669, %v2671
  %v2697 = vsel %vm243, %v2667, %v2669
  %v2698 = vsel %vm243, %v2665, %v2667
  %v2699 = vsel %vm243, %v2663, %v2665
  %v2700 = vsel %vm243, %v2661, %v2663
  %v2701 = vsel %vm243, %v2659, %v2661
  %v2702 = vsel %vm243, %v2657, %v2659
  %v2703 = vsel %vm243, %v2687, %v2657
  %v2704 = vmul.f32 %v2703, %v263
  %v2705 = vmul.f32 %v2702, %v267
  %v2706 = vmul.f32 %v2701, %v271
  %v2707 = vmul.f32 %v2700, %v275
  %v2708 = vmul.f32 %v2699, %v279
  %v2709 = vmul.f32 %v2698, %v283
  %v2710 = vmul.f32 %v2697, %v287
  %v2711 = vmul.f32 %v2696, %v291
  %v2712 = vmul.f32 %v2695, %v295
  %v2713 = vmul.f32 %v2694, %v299
  %v2714 = vmul.f32 %v2693, %v303
  %v2715 = vmul.f32 %v2692, %v307
  %v2716 = vmul.f32 %v2691, %v311
  %v2717 = vmul.f32 %v2690, %v315
  %v2718 = vmul.f32 %v2689, %v319
  %v2719 = vmul.f32 %v2688, %v323
  %2720 = vrot.lane.b32.xlu0 %v2574, 15
  %v2721 = vpop.permute.xlu0 %2720
  %2722 = vrot.lane.b32.xlu0 %v2575, 15
  %v2723 = vpop.permute.xlu0 %2722
  %2724 = vrot.lane.b32.xlu0 %v2576, 15
  %v2725 = vpop.permute.xlu0 %2724
  %2726 = vrot.lane.b32.xlu0 %v2577, 15
  %v2727 = vpop.permute.xlu0 %2726
  %2728 = vrot.lane.b32.xlu0 %v2578, 15
  %v2729 = vpop.permute.xlu0 %2728
  %2730 = vrot.lane.b32.xlu0 %v2579, 15
  %v2731 = vpop.permute.xlu0 %2730
  %2732 = vrot.lane.b32.xlu0 %v2580, 15
  %v2733 = vpop.permute.xlu0 %2732
  %2734 = vrot.lane.b32.xlu0 %v2581, 15
  %v2735 = vpop.permute.xlu0 %2734
  %2736 = vrot.lane.b32.xlu0 %v2582, 15
  %v2737 = vpop.permute.xlu0 %2736
  %2738 = vrot.lane.b32.xlu0 %v2583, 15
  %v2739 = vpop.permute.xlu0 %2738
  %2740 = vrot.lane.b32.xlu0 %v2584, 15
  %v2741 = vpop.permute.xlu0 %2740
  %2742 = vrot.lane.b32.xlu0 %v2585, 15
  %v2743 = vpop.permute.xlu0 %2742
  %2744 = vrot.lane.b32.xlu0 %v2586, 15
  %v2745 = vpop.permute.xlu0 %2744
  %2746 = vrot.lane.b32.xlu0 %v2587, 15
  %v2747 = vpop.permute.xlu0 %2746
  %2748 = vrot.lane.b32.xlu0 %v2588, 15
  %v2749 = vpop.permute.xlu0 %2748
  %2750 = vrot.lane.b32.xlu0 %v2589, 15
  %v2751 = vpop.permute.xlu0 %2750
  %v2752 = vsel %vm372, %v2749, %v2751
  %v2753 = vsel %vm372, %v2747, %v2749
  %v2754 = vsel %vm372, %v2745, %v2747
  %v2755 = vsel %vm372, %v2743, %v2745
  %v2756 = vsel %vm372, %v2741, %v2743
  %v2757 = vsel %vm372, %v2739, %v2741
  %v2758 = vsel %vm372, %v2737, %v2739
  %v2759 = vsel %vm372, %v2735, %v2737
  %v2760 = vsel %vm372, %v2733, %v2735
  %v2761 = vsel %vm372, %v2731, %v2733
  %v2762 = vsel %vm372, %v2729, %v2731
  %v2763 = vsel %vm372, %v2727, %v2729
  %v2764 = vsel %vm372, %v2725, %v2727
  %v2765 = vsel %vm372, %v2723, %v2725
  %v2766 = vsel %vm372, %v2721, %v2723
  %v2767 = vsel %vm372, %v2751, %v2721
  %v2768 = vmul.f32 %v2767, %v392
  %v2769 = vmul.f32 %v2766, %v396
  %v2770 = vmul.f32 %v2765, %v400
  %v2771 = vmul.f32 %v2764, %v404
  %v2772 = vmul.f32 %v2763, %v408
  %v2773 = vmul.f32 %v2762, %v412
  %v2774 = vmul.f32 %v2761, %v416
  %v2775 = vmul.f32 %v2760, %v420
  %v2776 = vmul.f32 %v2759, %v424
  %v2777 = vmul.f32 %v2758, %v428
  %v2778 = vmul.f32 %v2757, %v432
  %v2779 = vmul.f32 %v2756, %v436
  %v2780 = vmul.f32 %v2755, %v440
  %v2781 = vmul.f32 %v2754, %v444
  %v2782 = vmul.f32 %v2753, %v448
  %v2783 = vmul.f32 %v2752, %v452
  %2784 = vrot.lane.b32.xlu0 %v2574, 1
  %v2785 = vpop.permute.xlu0 %2784
  %2786 = vrot.lane.b32.xlu0 %v2575, 1
  %v2787 = vpop.permute.xlu0 %2786
  %2788 = vrot.lane.b32.xlu0 %v2576, 1
  %v2789 = vpop.permute.xlu0 %2788
  %2790 = vrot.lane.b32.xlu0 %v2577, 1
  %v2791 = vpop.permute.xlu0 %2790
  %2792 = vrot.lane.b32.xlu0 %v2578, 1
  %v2793 = vpop.permute.xlu0 %2792
  %2794 = vrot.lane.b32.xlu0 %v2579, 1
  %v2795 = vpop.permute.xlu0 %2794
  %2796 = vrot.lane.b32.xlu0 %v2580, 1
  %v2797 = vpop.permute.xlu0 %2796
  %2798 = vrot.lane.b32.xlu0 %v2581, 1
  %v2799 = vpop.permute.xlu0 %2798
  %2800 = vrot.lane.b32.xlu0 %v2582, 1
  %v2801 = vpop.permute.xlu0 %2800
  %2802 = vrot.lane.b32.xlu0 %v2583, 1
  %v2803 = vpop.permute.xlu0 %2802
  %2804 = vrot.lane.b32.xlu0 %v2584, 1
  %v2805 = vpop.permute.xlu0 %2804
  %2806 = vrot.lane.b32.xlu0 %v2585, 1
  %v2807 = vpop.permute.xlu0 %2806
  %2808 = vrot.lane.b32.xlu0 %v2586, 1
  %v2809 = vpop.permute.xlu0 %2808
  %2810 = vrot.lane.b32.xlu0 %v2587, 1
  %v2811 = vpop.permute.xlu0 %2810
  %2812 = vrot.lane.b32.xlu0 %v2588, 1
  %v2813 = vpop.permute.xlu0 %2812
  %2814 = vrot.lane.b32.xlu0 %v2589, 1
  %v2815 = vpop.permute.xlu0 %2814
  %v2816 = vsel %vm501, %v2813, %v2815
  %v2817 = vsel %vm501, %v2811, %v2813
  %v2818 = vsel %vm501, %v2809, %v2811
  %v2819 = vsel %vm501, %v2807, %v2809
  %v2820 = vsel %vm501, %v2805, %v2807
  %v2821 = vsel %vm501, %v2803, %v2805
  %v2822 = vsel %vm501, %v2801, %v2803
  %v2823 = vsel %vm501, %v2799, %v2801
  %v2824 = vsel %vm501, %v2797, %v2799
  %v2825 = vsel %vm501, %v2795, %v2797
  %v2826 = vsel %vm501, %v2793, %v2795
  %v2827 = vsel %vm501, %v2791, %v2793
  %v2828 = vsel %vm501, %v2789, %v2791
  %v2829 = vsel %vm501, %v2787, %v2789
  %v2830 = vsel %vm501, %v2785, %v2787
  %v2831 = vsel %vm501, %v2815, %v2785
  %v2832 = vmul.f32 %v2831, %v521
  %v2833 = vmul.f32 %v2830, %v525
  %v2834 = vmul.f32 %v2829, %v529
  %v2835 = vmul.f32 %v2828, %v533
  %v2836 = vmul.f32 %v2827, %v537
  %v2837 = vmul.f32 %v2826, %v541
  %v2838 = vmul.f32 %v2825, %v545
  %v2839 = vmul.f32 %v2824, %v549
  %v2840 = vmul.f32 %v2823, %v553
  %v2841 = vmul.f32 %v2822, %v557
  %v2842 = vmul.f32 %v2821, %v561
  %v2843 = vmul.f32 %v2820, %v565
  %v2844 = vmul.f32 %v2819, %v569
  %v2845 = vmul.f32 %v2818, %v573
  %v2846 = vmul.f32 %v2817, %v577
  %v2847 = vmul.f32 %v2816, %v581
  %2848 = vrot.lane.b32.xlu0 %v2574, 127
  %v2849 = vpop.permute.xlu0 %2848
  %2850 = vrot.lane.b32.xlu0 %v2575, 127
  %v2851 = vpop.permute.xlu0 %2850
  %2852 = vrot.lane.b32.xlu0 %v2576, 127
  %v2853 = vpop.permute.xlu0 %2852
  %2854 = vrot.lane.b32.xlu0 %v2577, 127
  %v2855 = vpop.permute.xlu0 %2854
  %2856 = vrot.lane.b32.xlu0 %v2578, 127
  %v2857 = vpop.permute.xlu0 %2856
  %2858 = vrot.lane.b32.xlu0 %v2579, 127
  %v2859 = vpop.permute.xlu0 %2858
  %2860 = vrot.lane.b32.xlu0 %v2580, 127
  %v2861 = vpop.permute.xlu0 %2860
  %2862 = vrot.lane.b32.xlu0 %v2581, 127
  %v2863 = vpop.permute.xlu0 %2862
  %2864 = vrot.lane.b32.xlu0 %v2582, 127
  %v2865 = vpop.permute.xlu0 %2864
  %2866 = vrot.lane.b32.xlu0 %v2583, 127
  %v2867 = vpop.permute.xlu0 %2866
  %2868 = vrot.lane.b32.xlu0 %v2584, 127
  %v2869 = vpop.permute.xlu0 %2868
  %2870 = vrot.lane.b32.xlu0 %v2585, 127
  %v2871 = vpop.permute.xlu0 %2870
  %2872 = vrot.lane.b32.xlu0 %v2586, 127
  %v2873 = vpop.permute.xlu0 %2872
  %2874 = vrot.lane.b32.xlu0 %v2587, 127
  %v2875 = vpop.permute.xlu0 %2874
  %2876 = vrot.lane.b32.xlu0 %v2588, 127
  %v2877 = vpop.permute.xlu0 %2876
  %2878 = vrot.lane.b32.xlu0 %v2589, 127
  %v2879 = vpop.permute.xlu0 %2878
  %v2880 = vsel %vm630, %v2877, %v2879
  %v2881 = vsel %vm630, %v2875, %v2877
  %v2882 = vsel %vm630, %v2873, %v2875
  %v2883 = vsel %vm630, %v2871, %v2873
  %v2884 = vsel %vm630, %v2869, %v2871
  %v2885 = vsel %vm630, %v2867, %v2869
  %v2886 = vsel %vm630, %v2865, %v2867
  %v2887 = vsel %vm630, %v2863, %v2865
  %v2888 = vsel %vm630, %v2861, %v2863
  %v2889 = vsel %vm630, %v2859, %v2861
  %v2890 = vsel %vm630, %v2857, %v2859
  %v2891 = vsel %vm630, %v2855, %v2857
  %v2892 = vsel %vm630, %v2853, %v2855
  %v2893 = vsel %vm630, %v2851, %v2853
  %v2894 = vsel %vm630, %v2849, %v2851
  %v2895 = vsel %vm630, %v2879, %v2849
  %v2896 = vmul.f32 %v2894, %v650
  %v2897 = vmul.f32 %v2893, %v654
  %v2898 = vmul.f32 %v2892, %v658
  %v2899 = vmul.f32 %v2891, %v662
  %v2900 = vmul.f32 %v2890, %v666
  %v2901 = vmul.f32 %v2889, %v670
  %v2902 = vmul.f32 %v2888, %v674
  %v2903 = vmul.f32 %v2887, %v678
  %v2904 = vmul.f32 %v2886, %v682
  %v2905 = vmul.f32 %v2885, %v686
  %v2906 = vmul.f32 %v2884, %v690
  %v2907 = vmul.f32 %v2883, %v694
  %v2908 = vmul.f32 %v2882, %v698
  %v2909 = vmul.f32 %v2881, %v702
  %v2910 = vmul.f32 %v2880, %v706
  %v2911 = vmul.f32 %v2895, %v710
  %2912 = vrot.lane.b32.xlu0 %v2574, 113
  %v2913 = vpop.permute.xlu0 %2912
  %2914 = vrot.lane.b32.xlu0 %v2575, 113
  %v2915 = vpop.permute.xlu0 %2914
  %2916 = vrot.lane.b32.xlu0 %v2576, 113
  %v2917 = vpop.permute.xlu0 %2916
  %2918 = vrot.lane.b32.xlu0 %v2577, 113
  %v2919 = vpop.permute.xlu0 %2918
  %2920 = vrot.lane.b32.xlu0 %v2578, 113
  %v2921 = vpop.permute.xlu0 %2920
  %2922 = vrot.lane.b32.xlu0 %v2579, 113
  %v2923 = vpop.permute.xlu0 %2922
  %2924 = vrot.lane.b32.xlu0 %v2580, 113
  %v2925 = vpop.permute.xlu0 %2924
  %2926 = vrot.lane.b32.xlu0 %v2581, 113
  %v2927 = vpop.permute.xlu0 %2926
  %2928 = vrot.lane.b32.xlu0 %v2582, 113
  %v2929 = vpop.permute.xlu0 %2928
  %2930 = vrot.lane.b32.xlu0 %v2583, 113
  %v2931 = vpop.permute.xlu0 %2930
  %2932 = vrot.lane.b32.xlu0 %v2584, 113
  %v2933 = vpop.permute.xlu0 %2932
  %2934 = vrot.lane.b32.xlu0 %v2585, 113
  %v2935 = vpop.permute.xlu0 %2934
  %2936 = vrot.lane.b32.xlu0 %v2586, 113
  %v2937 = vpop.permute.xlu0 %2936
  %2938 = vrot.lane.b32.xlu0 %v2587, 113
  %v2939 = vpop.permute.xlu0 %2938
  %2940 = vrot.lane.b32.xlu0 %v2588, 113
  %v2941 = vpop.permute.xlu0 %2940
  %2942 = vrot.lane.b32.xlu0 %v2589, 113
  %v2943 = vpop.permute.xlu0 %2942
  %v2944 = vsel %vm759, %v2941, %v2943
  %v2945 = vsel %vm759, %v2939, %v2941
  %v2946 = vsel %vm759, %v2937, %v2939
  %v2947 = vsel %vm759, %v2935, %v2937
  %v2948 = vsel %vm759, %v2933, %v2935
  %v2949 = vsel %vm759, %v2931, %v2933
  %v2950 = vsel %vm759, %v2929, %v2931
  %v2951 = vsel %vm759, %v2927, %v2929
  %v2952 = vsel %vm759, %v2925, %v2927
  %v2953 = vsel %vm759, %v2923, %v2925
  %v2954 = vsel %vm759, %v2921, %v2923
  %v2955 = vsel %vm759, %v2919, %v2921
  %v2956 = vsel %vm759, %v2917, %v2919
  %v2957 = vsel %vm759, %v2915, %v2917
  %v2958 = vsel %vm759, %v2913, %v2915
  %v2959 = vsel %vm759, %v2943, %v2913
  %v2960 = vmul.f32 %v2958, %v779
  %v2961 = vmul.f32 %v2957, %v783
  %v2962 = vmul.f32 %v2956, %v787
  %v2963 = vmul.f32 %v2955, %v791
  %v2964 = vmul.f32 %v2954, %v795
  %v2965 = vmul.f32 %v2953, %v799
  %v2966 = vmul.f32 %v2952, %v803
  %v2967 = vmul.f32 %v2951, %v807
  %v2968 = vmul.f32 %v2950, %v811
  %v2969 = vmul.f32 %v2949, %v815
  %v2970 = vmul.f32 %v2948, %v819
  %v2971 = vmul.f32 %v2947, %v823
  %v2972 = vmul.f32 %v2946, %v827
  %v2973 = vmul.f32 %v2945, %v831
  %v2974 = vmul.f32 %v2944, %v835
  %v2975 = vmul.f32 %v2959, %v839
  %2976 = vrot.lane.b32.xlu0 %v2574, 112
  %v2977 = vpop.permute.xlu0 %2976
  %2978 = vrot.lane.b32.xlu0 %v2575, 112
  %v2979 = vpop.permute.xlu0 %2978
  %2980 = vrot.lane.b32.xlu0 %v2576, 112
  %v2981 = vpop.permute.xlu0 %2980
  %2982 = vrot.lane.b32.xlu0 %v2577, 112
  %v2983 = vpop.permute.xlu0 %2982
  %2984 = vrot.lane.b32.xlu0 %v2578, 112
  %v2985 = vpop.permute.xlu0 %2984
  %2986 = vrot.lane.b32.xlu0 %v2579, 112
  %v2987 = vpop.permute.xlu0 %2986
  %2988 = vrot.lane.b32.xlu0 %v2580, 112
  %v2989 = vpop.permute.xlu0 %2988
  %2990 = vrot.lane.b32.xlu0 %v2581, 112
  %v2991 = vpop.permute.xlu0 %2990
  %2992 = vrot.lane.b32.xlu0 %v2582, 112
  %v2993 = vpop.permute.xlu0 %2992
  %2994 = vrot.lane.b32.xlu0 %v2583, 112
  %v2995 = vpop.permute.xlu0 %2994
  %2996 = vrot.lane.b32.xlu0 %v2584, 112
  %v2997 = vpop.permute.xlu0 %2996
  %2998 = vrot.lane.b32.xlu0 %v2585, 112
  %v2999 = vpop.permute.xlu0 %2998
  %3000 = vrot.lane.b32.xlu0 %v2586, 112
  %v3001 = vpop.permute.xlu0 %3000
  %3002 = vrot.lane.b32.xlu0 %v2587, 112
  %v3003 = vpop.permute.xlu0 %3002
  %3004 = vrot.lane.b32.xlu0 %v2588, 112
  %v3005 = vpop.permute.xlu0 %3004
  %3006 = vrot.lane.b32.xlu0 %v2589, 112
  %v3007 = vpop.permute.xlu0 %3006
  %v3008 = vsel %vm888, %v3005, %v3007
  %v3009 = vsel %vm888, %v3003, %v3005
  %v3010 = vsel %vm888, %v3001, %v3003
  %v3011 = vsel %vm888, %v2999, %v3001
  %v3012 = vsel %vm888, %v2997, %v2999
  %v3013 = vsel %vm888, %v2995, %v2997
  %v3014 = vsel %vm888, %v2993, %v2995
  %v3015 = vsel %vm888, %v2991, %v2993
  %v3016 = vsel %vm888, %v2989, %v2991
  %v3017 = vsel %vm888, %v2987, %v2989
  %v3018 = vsel %vm888, %v2985, %v2987
  %v3019 = vsel %vm888, %v2983, %v2985
  %v3020 = vsel %vm888, %v2981, %v2983
  %v3021 = vsel %vm888, %v2979, %v2981
  %v3022 = vsel %vm888, %v2977, %v2979
  %v3023 = vsel %vm888, %v3007, %v2977
  %v3024 = vmul.f32 %v3022, %v908
  %v3025 = vmul.f32 %v3021, %v912
  %v3026 = vmul.f32 %v3020, %v916
  %v3027 = vmul.f32 %v3019, %v920
  %v3028 = vmul.f32 %v3018, %v924
  %v3029 = vmul.f32 %v3017, %v928
  %v3030 = vmul.f32 %v3016, %v932
  %v3031 = vmul.f32 %v3015, %v936
  %v3032 = vmul.f32 %v3014, %v940
  %v3033 = vmul.f32 %v3013, %v944
  %v3034 = vmul.f32 %v3012, %v948
  %v3035 = vmul.f32 %v3011, %v952
  %v3036 = vmul.f32 %v3010, %v956
  %v3037 = vmul.f32 %v3009, %v960
  %v3038 = vmul.f32 %v3008, %v964
  %v3039 = vmul.f32 %v3023, %v968
  %3040 = vrot.lane.b32.xlu0 %v2574, 111
  %v3041 = vpop.permute.xlu0 %3040
  %3042 = vrot.lane.b32.xlu0 %v2575, 111
  %v3043 = vpop.permute.xlu0 %3042
  %3044 = vrot.lane.b32.xlu0 %v2576, 111
  %v3045 = vpop.permute.xlu0 %3044
  %3046 = vrot.lane.b32.xlu0 %v2577, 111
  %v3047 = vpop.permute.xlu0 %3046
  %3048 = vrot.lane.b32.xlu0 %v2578, 111
  %v3049 = vpop.permute.xlu0 %3048
  %3050 = vrot.lane.b32.xlu0 %v2579, 111
  %v3051 = vpop.permute.xlu0 %3050
  %3052 = vrot.lane.b32.xlu0 %v2580, 111
  %v3053 = vpop.permute.xlu0 %3052
  %3054 = vrot.lane.b32.xlu0 %v2581, 111
  %v3055 = vpop.permute.xlu0 %3054
  %3056 = vrot.lane.b32.xlu0 %v2582, 111
  %v3057 = vpop.permute.xlu0 %3056
  %3058 = vrot.lane.b32.xlu0 %v2583, 111
  %v3059 = vpop.permute.xlu0 %3058
  %3060 = vrot.lane.b32.xlu0 %v2584, 111
  %v3061 = vpop.permute.xlu0 %3060
  %3062 = vrot.lane.b32.xlu0 %v2585, 111
  %v3063 = vpop.permute.xlu0 %3062
  %3064 = vrot.lane.b32.xlu0 %v2586, 111
  %v3065 = vpop.permute.xlu0 %3064
  %3066 = vrot.lane.b32.xlu0 %v2587, 111
  %v3067 = vpop.permute.xlu0 %3066
  %3068 = vrot.lane.b32.xlu0 %v2588, 111
  %v3069 = vpop.permute.xlu0 %3068
  %3070 = vrot.lane.b32.xlu0 %v2589, 111
  %v3071 = vpop.permute.xlu0 %3070
  %v3072 = vsel %vm1017, %v3069, %v3071
  %v3073 = vsel %vm1017, %v3067, %v3069
  %v3074 = vsel %vm1017, %v3065, %v3067
  %v3075 = vsel %vm1017, %v3063, %v3065
  %v3076 = vsel %vm1017, %v3061, %v3063
  %v3077 = vsel %vm1017, %v3059, %v3061
  %v3078 = vsel %vm1017, %v3057, %v3059
  %v3079 = vsel %vm1017, %v3055, %v3057
  %v3080 = vsel %vm1017, %v3053, %v3055
  %v3081 = vsel %vm1017, %v3051, %v3053
  %v3082 = vsel %vm1017, %v3049, %v3051
  %v3083 = vsel %vm1017, %v3047, %v3049
  %v3084 = vsel %vm1017, %v3045, %v3047
  %v3085 = vsel %vm1017, %v3043, %v3045
  %v3086 = vsel %vm1017, %v3041, %v3043
  %v3087 = vsel %vm1017, %v3071, %v3041
  %v3088 = vmul.f32 %v3086, %v1037
  %v3089 = vmul.f32 %v3085, %v1041
  %v3090 = vmul.f32 %v3084, %v1045
  %v3091 = vmul.f32 %v3083, %v1049
  %v3092 = vmul.f32 %v3082, %v1053
  %v3093 = vmul.f32 %v3081, %v1057
  %v3094 = vmul.f32 %v3080, %v1061
  %v3095 = vmul.f32 %v3079, %v1065
  %v3096 = vmul.f32 %v3078, %v1069
  %v3097 = vmul.f32 %v3077, %v1073
  %v3098 = vmul.f32 %v3076, %v1077
  %v3099 = vmul.f32 %v3075, %v1081
  %v3100 = vmul.f32 %v3074, %v1085
  %v3101 = vmul.f32 %v3073, %v1089
  %v3102 = vmul.f32 %v3072, %v1093
  %v3103 = vmul.f32 %v3087, %v1097
  %v3104 = vpack.c.bf16 %v2704, %v2640
  %v3105 = vpack.c.bf16 %v2705, %v2641
  %v3106 = vpack.c.bf16 %v2706, %v2642
  %v3107 = vpack.c.bf16 %v2707, %v2643
  %v3108 = vpack.c.bf16 %v2708, %v2644
  %v3109 = vpack.c.bf16 %v2709, %v2645
  %v3110 = vpack.c.bf16 %v2710, %v2646
  %v3111 = vpack.c.bf16 %v2711, %v2647
  %v3112 = vpack.c.bf16 %v2712, %v2648
  %v3113 = vpack.c.bf16 %v2713, %v2649
  %v3114 = vpack.c.bf16 %v2714, %v2650
  %v3115 = vpack.c.bf16 %v2715, %v2651
  %v3116 = vpack.c.bf16 %v2716, %v2652
  %v3117 = vpack.c.bf16 %v2717, %v2653
  %v3118 = vpack.c.bf16 %v2718, %v2654
  %v3119 = vpack.c.bf16 %v2719, %v2655
  %v3120 = vpack.c.bf16 %v2832, %v2768
  %v3121 = vpack.c.bf16 %v2833, %v2769
  %v3122 = vpack.c.bf16 %v2834, %v2770
  %v3123 = vpack.c.bf16 %v2835, %v2771
  %v3124 = vpack.c.bf16 %v2836, %v2772
  %v3125 = vpack.c.bf16 %v2837, %v2773
  %v3126 = vpack.c.bf16 %v2838, %v2774
  %v3127 = vpack.c.bf16 %v2839, %v2775
  %v3128 = vpack.c.bf16 %v2840, %v2776
  %v3129 = vpack.c.bf16 %v2841, %v2777
  %v3130 = vpack.c.bf16 %v2842, %v2778
  %v3131 = vpack.c.bf16 %v2843, %v2779
  %v3132 = vpack.c.bf16 %v2844, %v2780
  %v3133 = vpack.c.bf16 %v2845, %v2781
  %v3134 = vpack.c.bf16 %v2846, %v2782
  %v3135 = vpack.c.bf16 %v2847, %v2783
  %v3136 = vpack.c.bf16 %v2896, %v2574
  %v3137 = vpack.c.bf16 %v2897, %v2575
  %v3138 = vpack.c.bf16 %v2898, %v2576
  %v3139 = vpack.c.bf16 %v2899, %v2577
  %v3140 = vpack.c.bf16 %v2900, %v2578
  %v3141 = vpack.c.bf16 %v2901, %v2579
  %v3142 = vpack.c.bf16 %v2902, %v2580
  %v3143 = vpack.c.bf16 %v2903, %v2581
  %v3144 = vpack.c.bf16 %v2904, %v2582
  %v3145 = vpack.c.bf16 %v2905, %v2583
  %v3146 = vpack.c.bf16 %v2906, %v2584
  %v3147 = vpack.c.bf16 %v2907, %v2585
  %v3148 = vpack.c.bf16 %v2908, %v2586
  %v3149 = vpack.c.bf16 %v2909, %v2587
  %v3150 = vpack.c.bf16 %v2910, %v2588
  %v3151 = vpack.c.bf16 %v2911, %v2589
  %v3152 = vpack.c.bf16 %v3024, %v2960
  %v3153 = vpack.c.bf16 %v3025, %v2961
  %v3154 = vpack.c.bf16 %v3026, %v2962
  %v3155 = vpack.c.bf16 %v3027, %v2963
  %v3156 = vpack.c.bf16 %v3028, %v2964
  %v3157 = vpack.c.bf16 %v3029, %v2965
  %v3158 = vpack.c.bf16 %v3030, %v2966
  %v3159 = vpack.c.bf16 %v3031, %v2967
  %v3160 = vpack.c.bf16 %v3032, %v2968
  %v3161 = vpack.c.bf16 %v3033, %v2969
  %v3162 = vpack.c.bf16 %v3034, %v2970
  %v3163 = vpack.c.bf16 %v3035, %v2971
  %v3164 = vpack.c.bf16 %v3036, %v2972
  %v3165 = vpack.c.bf16 %v3037, %v2973
  %v3166 = vpack.c.bf16 %v3038, %v2974
  %v3167 = vpack.c.bf16 %v3039, %v2975
  %v3168 = vpack.c.bf16 %v3088, %v3088
  %v3169 = vpack.c.bf16 %v3089, %v3089
  %v3170 = vpack.c.bf16 %v3090, %v3090
  %v3171 = vpack.c.bf16 %v3091, %v3091
  %v3172 = vpack.c.bf16 %v3092, %v3092
  %v3173 = vpack.c.bf16 %v3093, %v3093
  %v3174 = vpack.c.bf16 %v3094, %v3094
  %v3175 = vpack.c.bf16 %v3095, %v3095
  %v3176 = vpack.c.bf16 %v3096, %v3096
  %v3177 = vpack.c.bf16 %v3097, %v3097
  %v3178 = vpack.c.bf16 %v3098, %v3098
  %v3179 = vpack.c.bf16 %v3099, %v3099
  %v3180 = vpack.c.bf16 %v3100, %v3100
  %v3181 = vpack.c.bf16 %v3101, %v3101
  %v3182 = vpack.c.bf16 %v3102, %v3102
  %v3183 = vpack.c.bf16 %v3103, %v3103
  %3185 = vset.pattern.permute.xlu0 0
  %3186 = vperm.xlu0 %3185, %v2591
  %v3187 = vpop.permute.xlu0 %3186
  %v3190 = vsel %vm1199, %v2590, 0
  %v3193 = vsel %vm1203, %v3168, 0
  %v3196 = vsel %vm1203, %v3169, 0
  %v3199 = vsel %vm1203, %v3170, 0
  %v3202 = vsel %vm1203, %v3171, 0
  %v3205 = vsel %vm1203, %v3172, 0
  %v3208 = vsel %vm1203, %v3173, 0
  %v3211 = vsel %vm1203, %v3174, 0
  %v3214 = vsel %vm1203, %v3175, 0
  %v3217 = vsel %vm1203, %v3176, 0
  %v3220 = vsel %vm1203, %v3177, 0
  %v3223 = vsel %vm1203, %v3178, 0
  %v3226 = vsel %vm1203, %v3179, 0
  %v3229 = vsel %vm1203, %v3180, 0
  %v3232 = vsel %vm1203, %v3181, 0
  %v3235 = vsel %vm1203, %v3182, 0
  %v3238 = vsel %vm1203, %v3183, 0
  %3240 = vmatprep.subr.bf16.mxu0 0
  %3241 = vmatpush1.bf16.msra.mxu0 0
  %3242 = vmatprep.subr.bf16.mxu0 0
  %3243 = vmatpush1.bf16.msra.mxu0 0
  %3244 = vmatprep.subr.bf16.mxu0 0
  %3245 = vmatpush1.bf16.msra.mxu0 0
  %3246 = vmatprep.subr.bf16.mxu0 %v3196
  %3247 = vmatpush1.bf16.msra.mxu0 %v3193
  %3248 = vmatprep.subr.bf16.mxu0 %v3153
  %3249 = vmatpush1.bf16.msra.mxu0 %v3152
  %3250 = vmatprep.subr.bf16.mxu0 %v3137
  %3251 = vmatpush1.bf16.msra.mxu0 %v3136
  %3252 = vmatprep.subr.bf16.mxu0 %v3121
  %3253 = vmatpush1.bf16.msra.mxu0 %v3120
  %3254 = vmatprep.subr.bf16.mxu0 %v3105
  %3255 = vmatpush1.bf16.msra.mxu0 %v3104
  %3256 = vmatprep.subr.bf16.mxu0 0
  %3257 = vmatpush2.bf16.msra.mxu0 0
  %3258 = vmatprep.subr.bf16.mxu0 0
  %3259 = vmatpush2.bf16.msra.mxu0 0
  %3260 = vmatprep.subr.bf16.mxu0 0
  %3261 = vmatpush2.bf16.msra.mxu0 0
  %3262 = vmatprep.subr.bf16.mxu0 0
  %3263 = vmatpush2.bf16.msra.mxu0 0
  %3264 = vmatprep.subr.bf16.mxu0 0
  %3265 = vmatpush2.bf16.msra.mxu0 0
  %3266 = vmatprep.subr.bf16.mxu0 0
  %3267 = vmatpush2.bf16.msra.mxu0 0
  %3268 = vmatprep.subr.bf16.mxu0 0
  %3269 = vmatpush2.bf16.msra.mxu0 0
  %3270 = vmatprep.subr.bf16.mxu0 0
  %3271 = vmatpush2.bf16.msra.mxu0 0
  %3272 = vmatprep.mubr.bf16.mxu0 0
  %3273 = vmatmul.mubr.bf16.gmra.mxu0 %v3190
  %v3274 = vpop.f32.mrf.mxu0
  %v3275 = vadd.f32 %v3187, %v3274
  %v3276 = vpop.f32.mrf.mxu0
  %v3277 = vadd.f32 %v3187, %v3276
  %v3278 = vpop.f32.mrf.mxu0
  %v3279 = vpop.f32.mrf.mxu0
  %3280 = vdwg.mxu0
  %3281 = vmatprep.subr.bf16.mxu0 0
  %3282 = vmatpush1.bf16.msra.mxu0 0
  %3283 = vmatprep.subr.bf16.mxu0 0
  %3284 = vmatpush1.bf16.msra.mxu0 0
  %3285 = vmatprep.subr.bf16.mxu0 0
  %3286 = vmatpush1.bf16.msra.mxu0 0
  %3287 = vmatprep.subr.bf16.mxu0 %v3202
  %3288 = vmatpush1.bf16.msra.mxu0 %v3199
  %3289 = vmatprep.subr.bf16.mxu0 %v3155
  %3290 = vmatpush1.bf16.msra.mxu0 %v3154
  %3291 = vmatprep.subr.bf16.mxu0 %v3139
  %3292 = vmatpush1.bf16.msra.mxu0 %v3138
  %3293 = vmatprep.subr.bf16.mxu0 %v3123
  %3294 = vmatpush1.bf16.msra.mxu0 %v3122
  %3295 = vmatprep.subr.bf16.mxu0 %v3107
  %3296 = vmatpush1.bf16.msra.mxu0 %v3106
  %3297 = vmatprep.subr.bf16.mxu0 0
  %3298 = vmatpush2.bf16.msra.mxu0 0
  %3299 = vmatprep.subr.bf16.mxu0 0
  %3300 = vmatpush2.bf16.msra.mxu0 0
  %3301 = vmatprep.subr.bf16.mxu0 0
  %3302 = vmatpush2.bf16.msra.mxu0 0
  %3303 = vmatprep.subr.bf16.mxu0 0
  %3304 = vmatpush2.bf16.msra.mxu0 0
  %3305 = vmatprep.subr.bf16.mxu0 0
  %3306 = vmatpush2.bf16.msra.mxu0 0
  %3307 = vmatprep.subr.bf16.mxu0 0
  %3308 = vmatpush2.bf16.msra.mxu0 0
  %3309 = vmatprep.subr.bf16.mxu0 0
  %3310 = vmatpush2.bf16.msra.mxu0 0
  %3311 = vmatprep.subr.bf16.mxu0 0
  %3312 = vmatpush2.bf16.msra.mxu0 0
  %3313 = vmatprep.mubr.bf16.mxu0 0
  %3314 = vmatmul.mubr.bf16.gmra.mxu0 %v3190
  %v3315 = vpop.f32.mrf.mxu0
  %v3316 = vadd.f32 %v3187, %v3315
  %v3317 = vpop.f32.mrf.mxu0
  %v3318 = vadd.f32 %v3187, %v3317
  %v3319 = vpop.f32.mrf.mxu0
  %v3320 = vpop.f32.mrf.mxu0
  %3321 = vdwg.mxu0
  %3322 = vmatprep.subr.bf16.mxu0 0
  %3323 = vmatpush1.bf16.msra.mxu0 0
  %3324 = vmatprep.subr.bf16.mxu0 0
  %3325 = vmatpush1.bf16.msra.mxu0 0
  %3326 = vmatprep.subr.bf16.mxu0 0
  %3327 = vmatpush1.bf16.msra.mxu0 0
  %3328 = vmatprep.subr.bf16.mxu0 %v3208
  %3329 = vmatpush1.bf16.msra.mxu0 %v3205
  %3330 = vmatprep.subr.bf16.mxu0 %v3157
  %3331 = vmatpush1.bf16.msra.mxu0 %v3156
  %3332 = vmatprep.subr.bf16.mxu0 %v3141
  %3333 = vmatpush1.bf16.msra.mxu0 %v3140
  %3334 = vmatprep.subr.bf16.mxu0 %v3125
  %3335 = vmatpush1.bf16.msra.mxu0 %v3124
  %3336 = vmatprep.subr.bf16.mxu0 %v3109
  %3337 = vmatpush1.bf16.msra.mxu0 %v3108
  %3338 = vmatprep.subr.bf16.mxu0 0
  %3339 = vmatpush2.bf16.msra.mxu0 0
  %3340 = vmatprep.subr.bf16.mxu0 0
  %3341 = vmatpush2.bf16.msra.mxu0 0
  %3342 = vmatprep.subr.bf16.mxu0 0
  %3343 = vmatpush2.bf16.msra.mxu0 0
  %3344 = vmatprep.subr.bf16.mxu0 0
  %3345 = vmatpush2.bf16.msra.mxu0 0
  %3346 = vmatprep.subr.bf16.mxu0 0
  %3347 = vmatpush2.bf16.msra.mxu0 0
  %3348 = vmatprep.subr.bf16.mxu0 0
  %3349 = vmatpush2.bf16.msra.mxu0 0
  %3350 = vmatprep.subr.bf16.mxu0 0
  %3351 = vmatpush2.bf16.msra.mxu0 0
  %3352 = vmatprep.subr.bf16.mxu0 0
  %3353 = vmatpush2.bf16.msra.mxu0 0
  %3354 = vmatprep.mubr.bf16.mxu0 0
  %3355 = vmatmul.mubr.bf16.gmra.mxu0 %v3190
  %v3356 = vpop.f32.mrf.mxu0
  %v3357 = vadd.f32 %v3187, %v3356
  %v3358 = vpop.f32.mrf.mxu0
  %v3359 = vadd.f32 %v3187, %v3358
  %v3360 = vpop.f32.mrf.mxu0
  %v3361 = vpop.f32.mrf.mxu0
  %3362 = vdwg.mxu0
  %3363 = vmatprep.subr.bf16.mxu0 0
  %3364 = vmatpush1.bf16.msra.mxu0 0
  %3365 = vmatprep.subr.bf16.mxu0 0
  %3366 = vmatpush1.bf16.msra.mxu0 0
  %3367 = vmatprep.subr.bf16.mxu0 0
  %3368 = vmatpush1.bf16.msra.mxu0 0
  %3369 = vmatprep.subr.bf16.mxu0 %v3214
  %3370 = vmatpush1.bf16.msra.mxu0 %v3211
  %3371 = vmatprep.subr.bf16.mxu0 %v3159
  %3372 = vmatpush1.bf16.msra.mxu0 %v3158
  %3373 = vmatprep.subr.bf16.mxu0 %v3143
  %3374 = vmatpush1.bf16.msra.mxu0 %v3142
  %3375 = vmatprep.subr.bf16.mxu0 %v3127
  %3376 = vmatpush1.bf16.msra.mxu0 %v3126
  %3377 = vmatprep.subr.bf16.mxu0 %v3111
  %3378 = vmatpush1.bf16.msra.mxu0 %v3110
  %3379 = vmatprep.subr.bf16.mxu0 0
  %3380 = vmatpush2.bf16.msra.mxu0 0
  %3381 = vmatprep.subr.bf16.mxu0 0
  %3382 = vmatpush2.bf16.msra.mxu0 0
  %3383 = vmatprep.subr.bf16.mxu0 0
  %3384 = vmatpush2.bf16.msra.mxu0 0
  %3385 = vmatprep.subr.bf16.mxu0 0
  %3386 = vmatpush2.bf16.msra.mxu0 0
  %3387 = vmatprep.subr.bf16.mxu0 0
  %3388 = vmatpush2.bf16.msra.mxu0 0
  %3389 = vmatprep.subr.bf16.mxu0 0
  %3390 = vmatpush2.bf16.msra.mxu0 0
  %3391 = vmatprep.subr.bf16.mxu0 0
  %3392 = vmatpush2.bf16.msra.mxu0 0
  %3393 = vmatprep.subr.bf16.mxu0 0
  %3394 = vmatpush2.bf16.msra.mxu0 0
  %3395 = vmatprep.mubr.bf16.mxu0 0
  %3396 = vmatmul.mubr.bf16.gmra.mxu0 %v3190
  %v3397 = vpop.f32.mrf.mxu0
  %v3398 = vadd.f32 %v3187, %v3397
  %v3399 = vpop.f32.mrf.mxu0
  %v3400 = vadd.f32 %v3187, %v3399
  %v3401 = vpop.f32.mrf.mxu0
  %v3402 = vpop.f32.mrf.mxu0
  %3403 = vdwg.mxu0
  %3404 = vmatprep.subr.bf16.mxu0 0
  %3405 = vmatpush1.bf16.msra.mxu0 0
  %3406 = vmatprep.subr.bf16.mxu0 0
  %3407 = vmatpush1.bf16.msra.mxu0 0
  %3408 = vmatprep.subr.bf16.mxu0 0
  %3409 = vmatpush1.bf16.msra.mxu0 0
  %3410 = vmatprep.subr.bf16.mxu0 %v3220
  %3411 = vmatpush1.bf16.msra.mxu0 %v3217
  %3412 = vmatprep.subr.bf16.mxu0 %v3161
  %3413 = vmatpush1.bf16.msra.mxu0 %v3160
  %3414 = vmatprep.subr.bf16.mxu0 %v3145
  %3415 = vmatpush1.bf16.msra.mxu0 %v3144
  %3416 = vmatprep.subr.bf16.mxu0 %v3129
  %3417 = vmatpush1.bf16.msra.mxu0 %v3128
  %3418 = vmatprep.subr.bf16.mxu0 %v3113
  %3419 = vmatpush1.bf16.msra.mxu0 %v3112
  %3420 = vmatprep.subr.bf16.mxu0 0
  %3421 = vmatpush2.bf16.msra.mxu0 0
  %3422 = vmatprep.subr.bf16.mxu0 0
  %3423 = vmatpush2.bf16.msra.mxu0 0
  %3424 = vmatprep.subr.bf16.mxu0 0
  %3425 = vmatpush2.bf16.msra.mxu0 0
  %3426 = vmatprep.subr.bf16.mxu0 0
  %3427 = vmatpush2.bf16.msra.mxu0 0
  %3428 = vmatprep.subr.bf16.mxu0 0
  %3429 = vmatpush2.bf16.msra.mxu0 0
  %3430 = vmatprep.subr.bf16.mxu0 0
  %3431 = vmatpush2.bf16.msra.mxu0 0
  %3432 = vmatprep.subr.bf16.mxu0 0
  %3433 = vmatpush2.bf16.msra.mxu0 0
  %3434 = vmatprep.subr.bf16.mxu0 0
  %3435 = vmatpush2.bf16.msra.mxu0 0
  %3436 = vmatprep.mubr.bf16.mxu0 0
  %3437 = vmatmul.mubr.bf16.gmra.mxu0 %v3190
  %v3438 = vpop.f32.mrf.mxu0
  %v3439 = vadd.f32 %v3187, %v3438
  %v3440 = vpop.f32.mrf.mxu0
  %v3441 = vadd.f32 %v3187, %v3440
  %v3442 = vpop.f32.mrf.mxu0
  %v3443 = vpop.f32.mrf.mxu0
  %3444 = vdwg.mxu0
  %3445 = vmatprep.subr.bf16.mxu0 0
  %3446 = vmatpush1.bf16.msra.mxu0 0
  %3447 = vmatprep.subr.bf16.mxu0 0
  %3448 = vmatpush1.bf16.msra.mxu0 0
  %3449 = vmatprep.subr.bf16.mxu0 0
  %3450 = vmatpush1.bf16.msra.mxu0 0
  %3451 = vmatprep.subr.bf16.mxu0 %v3226
  %3452 = vmatpush1.bf16.msra.mxu0 %v3223
  %3453 = vmatprep.subr.bf16.mxu0 %v3163
  %3454 = vmatpush1.bf16.msra.mxu0 %v3162
  %3455 = vmatprep.subr.bf16.mxu0 %v3147
  %3456 = vmatpush1.bf16.msra.mxu0 %v3146
  %3457 = vmatprep.subr.bf16.mxu0 %v3131
  %3458 = vmatpush1.bf16.msra.mxu0 %v3130
  %3459 = vmatprep.subr.bf16.mxu0 %v3115
  %3460 = vmatpush1.bf16.msra.mxu0 %v3114
  %3461 = vmatprep.subr.bf16.mxu0 0
  %3462 = vmatpush2.bf16.msra.mxu0 0
  %3463 = vmatprep.subr.bf16.mxu0 0
  %3464 = vmatpush2.bf16.msra.mxu0 0
  %3465 = vmatprep.subr.bf16.mxu0 0
  %3466 = vmatpush2.bf16.msra.mxu0 0
  %3467 = vmatprep.subr.bf16.mxu0 0
  %3468 = vmatpush2.bf16.msra.mxu0 0
  %3469 = vmatprep.subr.bf16.mxu0 0
  %3470 = vmatpush2.bf16.msra.mxu0 0
  %3471 = vmatprep.subr.bf16.mxu0 0
  %3472 = vmatpush2.bf16.msra.mxu0 0
  %3473 = vmatprep.subr.bf16.mxu0 0
  %3474 = vmatpush2.bf16.msra.mxu0 0
  %3475 = vmatprep.subr.bf16.mxu0 0
  %3476 = vmatpush2.bf16.msra.mxu0 0
  %3477 = vmatprep.mubr.bf16.mxu0 0
  %3478 = vmatmul.mubr.bf16.gmra.mxu0 %v3190
  %v3479 = vpop.f32.mrf.mxu0
  %v3480 = vadd.f32 %v3187, %v3479
  %v3481 = vpop.f32.mrf.mxu0
  %v3482 = vadd.f32 %v3187, %v3481
  %v3483 = vpop.f32.mrf.mxu0
  %v3484 = vpop.f32.mrf.mxu0
  %3485 = vdwg.mxu0
  %3486 = vmatprep.subr.bf16.mxu0 0
  %3487 = vmatpush1.bf16.msra.mxu0 0
  %3488 = vmatprep.subr.bf16.mxu0 0
  %3489 = vmatpush1.bf16.msra.mxu0 0
  %3490 = vmatprep.subr.bf16.mxu0 0
  %3491 = vmatpush1.bf16.msra.mxu0 0
  %3492 = vmatprep.subr.bf16.mxu0 %v3232
  %3493 = vmatpush1.bf16.msra.mxu0 %v3229
  %3494 = vmatprep.subr.bf16.mxu0 %v3165
  %3495 = vmatpush1.bf16.msra.mxu0 %v3164
  %3496 = vmatprep.subr.bf16.mxu0 %v3149
  %3497 = vmatpush1.bf16.msra.mxu0 %v3148
  %3498 = vmatprep.subr.bf16.mxu0 %v3133
  %3499 = vmatpush1.bf16.msra.mxu0 %v3132
  %3500 = vmatprep.subr.bf16.mxu0 %v3117
  %3501 = vmatpush1.bf16.msra.mxu0 %v3116
  %3502 = vmatprep.subr.bf16.mxu0 0
  %3503 = vmatpush2.bf16.msra.mxu0 0
  %3504 = vmatprep.subr.bf16.mxu0 0
  %3505 = vmatpush2.bf16.msra.mxu0 0
  %3506 = vmatprep.subr.bf16.mxu0 0
  %3507 = vmatpush2.bf16.msra.mxu0 0
  %3508 = vmatprep.subr.bf16.mxu0 0
  %3509 = vmatpush2.bf16.msra.mxu0 0
  %3510 = vmatprep.subr.bf16.mxu0 0
  %3511 = vmatpush2.bf16.msra.mxu0 0
  %3512 = vmatprep.subr.bf16.mxu0 0
  %3513 = vmatpush2.bf16.msra.mxu0 0
  %3514 = vmatprep.subr.bf16.mxu0 0
  %3515 = vmatpush2.bf16.msra.mxu0 0
  %3516 = vmatprep.subr.bf16.mxu0 0
  %3517 = vmatpush2.bf16.msra.mxu0 0
  %3518 = vmatprep.mubr.bf16.mxu0 0
  %3519 = vmatmul.mubr.bf16.gmra.mxu0 %v3190
  %v3520 = vpop.f32.mrf.mxu0
  %v3521 = vadd.f32 %v3187, %v3520
  %v3522 = vpop.f32.mrf.mxu0
  %v3523 = vadd.f32 %v3187, %v3522
  %v3524 = vpop.f32.mrf.mxu0
  %v3525 = vpop.f32.mrf.mxu0
  %3526 = vdwg.mxu0
  %3527 = vmatprep.subr.bf16.mxu0 0
  %3528 = vmatpush1.bf16.msra.mxu0 0
  %3529 = vmatprep.subr.bf16.mxu0 0
  %3530 = vmatpush1.bf16.msra.mxu0 0
  %3531 = vmatprep.subr.bf16.mxu0 0
  %3532 = vmatpush1.bf16.msra.mxu0 0
  %3533 = vmatprep.subr.bf16.mxu0 %v3238
  %3534 = vmatpush1.bf16.msra.mxu0 %v3235
  %3535 = vmatprep.subr.bf16.mxu0 %v3167
  %3536 = vmatpush1.bf16.msra.mxu0 %v3166
  %3537 = vmatprep.subr.bf16.mxu0 %v3151
  %3538 = vmatpush1.bf16.msra.mxu0 %v3150
  %3539 = vmatprep.subr.bf16.mxu0 %v3135
  %3540 = vmatpush1.bf16.msra.mxu0 %v3134
  %3541 = vmatprep.subr.bf16.mxu0 %v3119
  %3542 = vmatpush1.bf16.msra.mxu0 %v3118
  %3543 = vmatprep.subr.bf16.mxu0 0
  %3544 = vmatpush2.bf16.msra.mxu0 0
  %3545 = vmatprep.subr.bf16.mxu0 0
  %3546 = vmatpush2.bf16.msra.mxu0 0
  %3547 = vmatprep.subr.bf16.mxu0 0
  %3548 = vmatpush2.bf16.msra.mxu0 0
  %3549 = vmatprep.subr.bf16.mxu0 0
  %3550 = vmatpush2.bf16.msra.mxu0 0
  %3551 = vmatprep.subr.bf16.mxu0 0
  %3552 = vmatpush2.bf16.msra.mxu0 0
  %3553 = vmatprep.subr.bf16.mxu0 0
  %3554 = vmatpush2.bf16.msra.mxu0 0
  %3555 = vmatprep.subr.bf16.mxu0 0
  %3556 = vmatpush2.bf16.msra.mxu0 0
  %3557 = vmatprep.subr.bf16.mxu0 0
  %3558 = vmatpush2.bf16.msra.mxu0 0
  %3559 = vmatprep.mubr.bf16.mxu0 0
  %3560 = vmatmul.mubr.bf16.gmra.mxu0 %v3190
  %v3561 = vpop.f32.mrf.mxu0
  %v3562 = vadd.f32 %v3187, %v3561
  %v3563 = vpop.f32.mrf.mxu0
  %v3564 = vadd.f32 %v3187, %v3563
  %v3565 = vpop.f32.mrf.mxu0
  %v3566 = vpop.f32.mrf.mxu0
  %3567 = vdwg.mxu0
  %v3584 = vcombine.low %v3275, %v3277
  %v3585 = vcombine.low %v3316, %v3318
  %v3587 = vunpack.c.l.s4 1983009808
  %v3588 = vunpack.c.0.s8 %v3587
  %v3589 = vlaneseq
  %v3590 = vshrl.u32 %v3589, 7
  %v3591 = vsub.s32 %v3588, %v3590
  %v3592 = vrot.slane %v3584, %v3591
  %v3594 = vunpack.c.l.s4 1983009808
  %v3595 = vunpack.c.0.s8 %v3594
  %v3596 = vlaneseq
  %v3597 = vshrl.u32 %v3596, 7
  %v3598 = vsub.s32 %v3595, %v3597
  %v3599 = vrot.slane %v3585, %v3598
  %v3600 = vcombine.low %v3592, %v3599
  %v3601 = vcombine.low %v3357, %v3359
  %v3602 = vcombine.low %v3398, %v3400
  %v3604 = vunpack.c.l.s4 1983009808
  %v3605 = vunpack.c.0.s8 %v3604
  %v3606 = vlaneseq
  %v3607 = vshrl.u32 %v3606, 7
  %v3608 = vsub.s32 %v3605, %v3607
  %v3609 = vrot.slane %v3601, %v3608
  %v3611 = vunpack.c.l.s4 1983009808
  %v3612 = vunpack.c.0.s8 %v3611
  %v3613 = vlaneseq
  %v3614 = vshrl.u32 %v3613, 7
  %v3615 = vsub.s32 %v3612, %v3614
  %v3616 = vrot.slane %v3602, %v3615
  %v3617 = vcombine.low %v3609, %v3616
  %v3618 = vcombine.low %v3439, %v3441
  %v3619 = vcombine.low %v3480, %v3482
  %v3621 = vunpack.c.l.s4 1983009808
  %v3622 = vunpack.c.0.s8 %v3621
  %v3623 = vlaneseq
  %v3624 = vshrl.u32 %v3623, 7
  %v3625 = vsub.s32 %v3622, %v3624
  %v3626 = vrot.slane %v3618, %v3625
  %v3628 = vunpack.c.l.s4 1983009808
  %v3629 = vunpack.c.0.s8 %v3628
  %v3630 = vlaneseq
  %v3631 = vshrl.u32 %v3630, 7
  %v3632 = vsub.s32 %v3629, %v3631
  %v3633 = vrot.slane %v3619, %v3632
  %v3634 = vcombine.low %v3626, %v3633
  %v3635 = vcombine.low %v3521, %v3523
  %v3636 = vcombine.low %v3562, %v3564
  %v3638 = vunpack.c.l.s4 1983009808
  %v3639 = vunpack.c.0.s8 %v3638
  %v3640 = vlaneseq
  %v3641 = vshrl.u32 %v3640, 7
  %v3642 = vsub.s32 %v3639, %v3641
  %v3643 = vrot.slane %v3635, %v3642
  %v3645 = vunpack.c.l.s4 1983009808
  %v3646 = vunpack.c.0.s8 %v3645
  %v3647 = vlaneseq
  %v3648 = vshrl.u32 %v3647, 7
  %v3649 = vsub.s32 %v3646, %v3648
  %v3650 = vrot.slane %v3636, %v3649
  %v3651 = vcombine.low %v3643, %v3650
  %3656 = vst [vmem:[%s8] sm:$0xff] %v3600
  %3657 = vst [vmem:[%s8 + $0x8] sm:$0xff] %v3617
  %3658 = vst [vmem:[%s8 + $0x10] sm:$0xff] %v3634
  %3659 = vst [vmem:[%s8 + $0x18] sm:$0xff] %v3651
  // Predicated region
  $region34: #{_lambda_.4} parent=0 // pred_check
    _
  $region35: #{_lambda_.4} parent=0 // pred_check_branch
    %3661 = sbr.rel (0) target = $region37
  $region36: #{_lambda_.4} parent=0 // pred_region
    _
  $region37: #{_lambda_.4} parent=0 // pred_fallthru
    _
  // Predicated region
  $region38: #{_lambda_.4} parent=0 // pred_check
    _
  $region39: #{_lambda_.4} parent=0 // pred_check_branch
    %3663 = sbr.rel (0) target = $region41
  $region40: #{_lambda_.4} parent=0 // pred_region
    _
  $region41: #{_lambda_.4} parent=0 // pred_fallthru
    _

// kernel: _lambda_.5
$region0: #{_lambda_.5}
  #allocation0 [shape = 'u32[]', space=smem, size = 0x4, offset = 0x4, fixed_abs, tag = 'smem constant byte address 0x4 - core index']
  #allocation1 [shape = 'u32[144,128]{1,0:T(1,128)}', space=vmem, size = 0x12000, scoped, tag = 'internal scratch']
  %s0 = inlined_call_operand.vmem [shape: f32[1,2048], index: 0, kind: input, shape index: {}]
  %s1 = inlined_call_operand.vmem [shape: f32[1,2048], index: 1, kind: input, shape index: {}]
  %s2 = inlined_call_operand.vmem [shape: f32[1,2048], index: 2, kind: input, shape index: {}]
  %s3 = inlined_call_operand.vmem [shape: f32[1,2048], index: 3, kind: input, shape index: {}]
  %s4 = inlined_call_operand.vmem [shape: f32[1,2048], index: 4, kind: input, shape index: {}]
  %s5 = inlined_call_operand.vmem [shape: f32[1,2048], index: 5, kind: output, shape index: {0}]
  %s6 = inlined_call_operand.vmem [shape: f32[1,2048], index: 6, kind: output, shape index: {1}]
  %7 = xla_tuple %s5, %s6
  %s8 = sld [smem:[#allocation0]]
  $region38: #{_lambda_.5} parent=0
    _
  %s10 = ssub.s32 1, %s8
  %s11 = scalar_select 0, %s10, %s8
  // Predicated region
  $region2: #{_lambda_.5} parent=0 // pred_check
    _
  $region3: #{_lambda_.5} parent=0 // pred_check_branch
    %13 = sbr.rel (0) target = $region5
  $region4: #{_lambda_.5} parent=0 // pred_region
    _
  $region5: #{_lambda_.5} parent=0 // pred_fallthru
    _
  // Predicated region
  $region6: #{_lambda_.5} parent=0 // pred_check
    _
  $region7: #{_lambda_.5} parent=0 // pred_check_branch
    %15 = sbr.rel (0) target = $region9
  $region8: #{_lambda_.5} parent=0 // pred_region
    _
  $region9: #{_lambda_.5} parent=0 // pred_fallthru
    _
  // Predicated region
  $region10: #{_lambda_.5} parent=0 // pred_check
    _
  $region11: #{_lambda_.5} parent=0 // pred_check_branch
    %17 = sbr.rel (0) target = $region13
  $region12: #{_lambda_.5} parent=0 // pred_region
    _
  $region13: #{_lambda_.5} parent=0 // pred_fallthru
    _
  // Predicated region
  $region14: #{_lambda_.5} parent=0 // pred_check
    _
  $region15: #{_lambda_.5} parent=0 // pred_check_branch
    %19 = sbr.rel (0) target = $region17
  $region16: #{_lambda_.5} parent=0 // pred_region
    _
  $region17: #{_lambda_.5} parent=0 // pred_fallthru
    _
  // Predicated region
  $region18: #{_lambda_.5} parent=0 // pred_check
    _
  $region19: #{_lambda_.5} parent=0 // pred_check_branch
    %21 = sbr.rel (0) target = $region21
  $region20: #{_lambda_.5} parent=0 // pred_region
    _
  $region21: #{_lambda_.5} parent=0 // pred_fallthru
    _
  %v22 = vld [vmem:[%s4] sm:$0xff]
  %v23 = vld [vmem:[%s4 + $0x8] sm:$0xff]
  %v24 = vld [vmem:[%s0] sm:$0xff]
  %v25 = vld [vmem:[%s0 + $0x8] sm:$0xff]
  %v26 = vld [vmem:[%s1] sm:$0xff]
  %v27 = vld [vmem:[%s1 + $0x8] sm:$0xff]
  %v28 = vld [vmem:[%s2] sm:$0xff]
  %v29 = vld [vmem:[%s2 + $0x8] sm:$0xff]
  %v30 = vsub.f32 %v28, %v24
  %v31 = vsub.f32 %v29, %v25
  %v32 = vmul.f32 %v22, %v30
  %v33 = vmul.f32 %v23, %v31
  %v34 = vadd.f32 %v24, %v32
  %v35 = vadd.f32 %v25, %v33
  %36 = vst [vmem:[%s5] sm:$0xff] %v34
  %37 = vst [vmem:[%s5 + $0x8] sm:$0xff] %v35
  %v38 = vld [vmem:[%s3] sm:$0xff]
  %v39 = vld [vmem:[%s3 + $0x8] sm:$0xff]
  %v40 = vsub.f32 %v38, %v26
  %v41 = vsub.f32 %v39, %v27
  %v42 = vmul.f32 %v22, %v40
  %v43 = vmul.f32 %v23, %v41
  %v44 = vadd.f32 %v26, %v42
  %v45 = vadd.f32 %v27, %v43
  %46 = vst [vmem:[%s6] sm:$0xff] %v44
  %47 = vst [vmem:[%s6 + $0x8] sm:$0xff] %v45
  // Predicated region
  $region22: #{_lambda_.5} parent=0 // pred_check
    _
  $region23: #{_lambda_.5} parent=0 // pred_check_branch
    %49 = sbr.rel (0) target = $region25
  $region24: #{_lambda_.5} parent=0 // pred_region
    _
  $region25: #{_lambda_.5} parent=0 // pred_fallthru
    _
  // Predicated region
  $region26: #{_lambda_.5} parent=0 // pred_check
    _
  $region27: #{_lambda_.5} parent=0 // pred_check_branch
    %51 = sbr.rel (0) target = $region29
  $region28: #{_lambda_.5} parent=0 // pred_region
    _
  $region29: #{_lambda_.5} parent=0 // pred_fallthru
    _
  // Predicated region
  $region30: #{_lambda_.5} parent=0 // pred_check
    _
  $region31: #{_lambda_.5} parent=0 // pred_check_branch
    %53 = sbr.rel (0) target = $region33
  $region32: #{_lambda_.5} parent=0 // pred_region
    _
  $region33: #{_lambda_.5} parent=0 // pred_fallthru
    _
  // Predicated region
  $region34: #{_lambda_.5} parent=0 // pred_check
    _
  $region35: #{_lambda_.5} parent=0 // pred_check_branch
    %55 = sbr.rel (0) target = $region37
  $region36: #{_lambda_.5} parent=0 // pred_region
    _
  $region37: #{_lambda_.5} parent=0 // pred_fallthru
    _

</llo_original>
